<compile_context>
chip_gen: v7x
topology: tpu7x:2x2x1
jax: 0.10.0
libtpu: 0.0.40
codegen_flags: <defaults>
</compile_context>

<pallas_src>
import math
from functools import partial

import jax
import jax.numpy as jnp
from jax.experimental import pallas as pl
from jax.experimental.pallas import tpu as pltpu

_MARGIN = 128  # lane-aligned halo on the flat pixel axis (needs >= Wp+1 for 3x3)


def _round_up(x, m):
    return ((x + m - 1) // m) * m


# ----------------------------------------------------------------------------
# Fused Pallas kernel: one grid step == one task (in-kernel conv + inner SGD
# loop + query loss + IoU).  Only two per-task scalars leave the kernel.
# ----------------------------------------------------------------------------
def _make_fused_kernel(C, Wp, margin, update_lr, update_step, inv_ns, inv_nq,
                       Ka_pad, eps=1e-6):
    Kw = C * 9                                   # conv-weight rows; row Kw = bias
    taps = [(kh, kw) for kh in range(3) for kw in range(3)]

    def kernel(xs_ref, ts_ref, ms_ref, xq_ref, tq_ref, mq_ref, w_ref,
               out_ref, tap_ref):
        Ps = ts_ref.shape[-1]                    # support working width (128-mult)
        Pq = tq_ref.shape[-1]                    # query working width

        xs = xs_ref[0]                           # (C, margin+Ps+margin)
        ts = ts_ref[0]                           # (1, Ps) support targets
        ms = ms_ref[...]                         # (1, Ps) valid-center mask
        w = w_ref[...]                           # (Ka_pad, 1) [tap-major W ; b ; 0]

        # ---- build the 27-tap im2col ONCE per task, in VMEM (no 9x HBM) ----
        # Tap (kh,kw) at flat output position p reads padded-flat pixel
        # p + (kh-1)*Wp + (kw-1); the host-side zero halo of `margin` columns
        # turns this into a plain static slice.  Invalid (border/pad) output
        # positions read garbage but are masked out of loss/grad/IoU below.
        for t, (kh, kw) in enumerate(taps):
            start = margin + (kh - 1) * Wp + (kw - 1)
            tap_ref[pl.ds(t * C, C), :] = xs[:, start:start + Ps]
        tap_ref[pl.ds(Kw, 1), :] = jnp.ones((1, Ps), jnp.float32)    # bias row
        if Ka_pad > Kw + 1:                                          # inert pad rows
            tap_ref[pl.ds(Kw + 1, Ka_pad - Kw - 1), :] = jnp.zeros(
                (Ka_pad - Kw - 1, Ps), jnp.float32)

        ps = tap_ref[...]                        # (Ka_pad, Ps), resident all loop

        # ---- inner SGD loop: fast weights stay in vregs/VMEM ----
        # Lane-dense VPU multiply + sublane/lane reduces; at realistic P these
        # two contractions should move to the MXU (dot_general, f32 accum).
        # TODO(synk): lax.fori_loop(..., unroll=True) if update_step grows large.
        for _ in range(update_step):
            z = jnp.sum(ps * w, axis=0, keepdims=True)               # (1, Ps)
            sig = pl.reciprocal(1.0 + jnp.exp(-z), approx=True)      # EUP slot
            d = ms * (sig - ts) * inv_ns                             # masked dBCE/dz
            dw = jnp.sum(ps * d, axis=1, keepdims=True)              # (Ka_pad, 1)
            w = w - update_lr * dw

        # ---- query loss + IoU with the fully-updated fast weights ----
        xq = xq_ref[0]
        tq = tq_ref[0]
        mq = mq_ref[...]
        zq = jnp.zeros((1, Pq), jnp.float32) + w[Kw, 0]              # bias
        for t, (kh, kw) in enumerate(taps):
            start = margin + (kh - 1) * Wp + (kw - 1)
            zq = zq + jnp.sum(xq[:, start:start + Pq] * w[t * C:t * C + C],
                              axis=0, keepdims=True)

        bq = jnp.maximum(zq, 0.0) - zq * tq + jnp.log1p(jnp.exp(-jnp.abs(zq)))
        loss_q = jnp.sum(mq * bq) * inv_nq

        pred = mq * jnp.where(zq > 0.0, 1.0, 0.0)    # sigmoid(z)>0.5 <=> z>0
        inter = jnp.sum(pred * tq)
        union = jnp.sum(pred) + jnp.sum(tq) - inter
        iou_val = inter / (union + eps)

        # Pack both per-task scalars into ONE (8,128) tile -> a single unmasked
        # lane-dense writeback: rows 0..3 = query loss, rows 4..7 = IoU.
        row = jax.lax.broadcasted_iota(jnp.int32, out_ref.shape, 1)
        out_ref[...] = jnp.where(row < 4,
                                 jnp.broadcast_to(loss_q, out_ref.shape),
                                 jnp.broadcast_to(iou_val, out_ref.shape))

    return kernel


def _fused_maml_call(xs, ts, ms, xq, tq, mq, w0, *, C, Wp, margin,
                     update_lr, update_step, inv_ns, inv_nq):
    """Run the fused per-task MAML kernel over grid=(task_num,)."""
    T = xs.shape[0]
    Ka_pad = w0.shape[0]
    Ls = xs.shape[-1]                            # margin + Ps + margin
    Lq = xq.shape[-1]
    Ps = ts.shape[-1]
    Pq = tq.shape[-1]

    kernel = _make_fused_kernel(C, Wp, margin, update_lr, update_step,
                                inv_ns, inv_nq, Ka_pad)

    # TODO(synk): at realistic H,W add a pixel-axis grid dimension ("arbitrary")
    # with dW accumulated in a small VMEM scratch so per-task blocks fit v7x's
    # 64 MiB VMEM; at toy sizes the full per-task block is the right choice.
    out = pl.pallas_call(
        kernel,
        out_shape=jax.ShapeDtypeStruct((T, 8, 128), jnp.float32),
        grid=(T,),
        in_specs=[
            pl.BlockSpec((1, C, Ls), lambda i: (i, 0, 0)),   # support imgs (+halo)
            pl.BlockSpec((1, 1, Ps), lambda i: (i, 0, 0)),   # support targets
            pl.BlockSpec((1, Ps), lambda i: (0, 0)),         # support valid mask
            pl.BlockSpec((1, C, Lq), lambda i: (i, 0, 0)),   # query imgs (+halo)
            pl.BlockSpec((1, 1, Pq), lambda i: (i, 0, 0)),   # query targets
            pl.BlockSpec((1, Pq), lambda i: (0, 0)),         # query valid mask
            pl.BlockSpec((Ka_pad, 1), lambda i: (0, 0)),     # initial [W ; b ; 0]
        ],
        out_specs=pl.BlockSpec((1, 8, 128), lambda i: (i, 0, 0)),
        scratch_shapes=[pltpu.VMEM((Ka_pad, Ps), jnp.float32)],  # per-task im2col
        compiler_params=pltpu.CompilerParams(
            dimension_semantics=("parallel",),   # tasks shard across TCs on v7x
            vmem_limit_bytes=32 * 1024 * 1024),
    )(xs, ts, ms, xq, tq, mq, w0)

    return out[:, 0, 0], out[:, 4, 0]


# ----------------------------------------------------------------------------
# Layout plumbing (pure JAX, 1x data size: pad + flatten only, no im2col)
# ----------------------------------------------------------------------------
def _flat_padded_images(x, margin, p_work):
    """[N, C, H, W] -> [C, margin + p_work + margin] zero-padded 'same' layout;
    columns ordered (n, i, j) over the (H+2, W+2) padded grid."""
    N, C, H, W = x.shape
    xp = jnp.pad(x, ((0, 0), (0, 0), (1, 1), (1, 1)))
    xf = xp.transpose(1, 0, 2, 3).reshape(C, N * (H + 2) * (W + 2))
    return jnp.pad(xf, ((0, 0), (margin, margin + p_work - xf.shape[1])))


def _flat_padded_masks(m, p_work):
    """[N, 1, H, W] -> [1, p_work]; zeros on the padded border and lane tail."""
    N, C, H, W = m.shape
    mp = jnp.pad(m, ((0, 0), (0, 0), (1, 1), (1, 1)))
    mf = mp.reshape(1, N * (H + 2) * (W + 2))
    return jnp.pad(mf, ((0, 0), (0, p_work - mf.shape[1])))


# ----------------------------------------------------------------------------
# MetaLearner forward (MAML inner loop + query loss + IoU)
# ----------------------------------------------------------------------------
@partial(jax.jit, static_argnames=("update_lr", "update_step"))
def meta_learner_forward(W_mat, b_vec, img_spt, mask_spt, img_qry, mask_qry,
                         qn_img, qn_mask, update_lr=0.01, update_step=3):
    # TODO(synk): the qn ("metric") branch only feeds the Adam meta-optimizer's
    # metric**2-weighted backward/step (optimizer-state side effects) and never
    # reaches the returned (m_iou, loss); it is not translated -> qn_* unused.
    del qn_img, qn_mask

    f32 = jnp.float32
    T, n_spt, C, H, W = img_spt.shape
    n_qry = img_qry.shape[1]
    assert W_mat.shape == (C * 9, 1) and mask_spt.shape[2] == 1

    Wp = W + 2
    Kw = C * 9
    Ka_pad = _round_up(Kw + 1, 8)                     # 28 -> 32 full sublane tiles
    margin = _MARGIN
    ps_work = _round_up(n_spt * (H + 2) * Wp, 128)    # lane-dense working widths
    pq_work = _round_up(n_qry * (H + 2) * Wp, 128)

    # TODO(synk): store these as bfloat16 on v6e/v7x (halves HBM/VMEM bytes).
    xs = jax.vmap(lambda a: _flat_padded_images(a, margin, ps_work))(img_spt.astype(f32))
    ts = jax.vmap(lambda a: _flat_padded_masks(a, ps_work))(mask_spt.astype(f32))
    xq = jax.vmap(lambda a: _flat_padded_images(a, margin, pq_work))(img_qry.astype(f32))
    tq = jax.vmap(lambda a: _flat_padded_masks(a, pq_work))(mask_qry.astype(f32))
    ms = _flat_padded_masks(jnp.ones((n_spt, 1, H, W), f32), ps_work)   # valid centers
    mq = _flat_padded_masks(jnp.ones((n_qry, 1, H, W), f32), pq_work)

    # Conv weight reordered tap-major (kh, kw, c) to match the in-kernel im2col
    # row order; bias appended as the ones-row weight; zero rows pad Ka to 32.
    w_perm = W_mat.astype(f32).reshape(C, 3, 3, 1).transpose(1, 2, 0, 3).reshape(Kw, 1)
    w0 = jnp.concatenate(
        [w_perm, b_vec.reshape(1, 1).astype(f32),
         jnp.zeros((Ka_pad - Kw - 1, 1), f32)], axis=0)

    inv_ns = 1.0 / float(n_spt * H * W)               # mean-BCE normalizers
    inv_nq = 1.0 / float(n_qry * H * W)

    loss_q, iou_t = _fused_maml_call(
        xs, ts, ms, xq, tq, mq, w0, C=C, Wp=Wp, margin=margin,
        update_lr=update_lr, update_step=update_step,
        inv_ns=inv_ns, inv_nq=inv_nq)

    m_iou = jnp.mean(iou_t)                           # == sum(iou) / task_num
    loss = jnp.mean(loss_q)                           # == sum(loss_qry) / task_num
    return m_iou, loss


# ----------------------------------------------------------------------------
# Pure-JAX reference (explicit im2col) used only for the self-check in main.
# ----------------------------------------------------------------------------
def _reference_forward(W_mat, b_vec, img_spt, mask_spt, img_qry, mask_qry,
                       update_lr, update_step):
    def im2col(x):                                    # [N,C,H,W] -> [C*9, N*H*W]
        N, C, H, W = x.shape
        xp = jnp.pad(x, ((0, 0), (0, 0), (1, 1), (1, 1)))
        t = jnp.stack([xp[:, :, kh:kh + H, kw:kw + W]
                       for kh in range(3) for kw in range(3)], axis=2)
        return t.transpose(1, 2, 0, 3, 4).reshape(C * 9, N * H * W)

    losses, ious = [], []
    for i in range(img_spt.shape[0]):
        ps, ts = im2col(img_spt[i]), mask_spt[i].reshape(1, -1)
        pq, tq = im2col(img_qry[i]), mask_qry[i].reshape(1, -1)
        w, b = W_mat, b_vec[0]
        for _ in range(update_step):
            z = jnp.sum(ps * w, axis=0, keepdims=True) + b
            d = (jax.nn.sigmoid(z) - ts) / ts.size
            w = w - update_lr * jnp.sum(ps * d, axis=1, keepdims=True)
            b = b - update_lr * jnp.sum(d)
        zq = jnp.sum(pq * w, axis=0, keepdims=True) + b
        bce = jnp.maximum(zq, 0.) - zq * tq + jnp.log1p(jnp.exp(-jnp.abs(zq)))
        losses.append(jnp.mean(bce))
        pred = (zq > 0.).astype(jnp.float32)
        inter = jnp.sum(pred * tq)
        ious.append(inter / (jnp.sum(pred) + jnp.sum(tq) - inter + 1e-6))
    return jnp.mean(jnp.stack(ious)), jnp.mean(jnp.stack(losses))


# ----------------------------------------------------------------------------
# Main
# ----------------------------------------------------------------------------
if __name__ == "__main__":
    key = jax.random.PRNGKey(0)
    k_w, k_is, k_ms, k_iq, k_mq, k_qi, k_qm = jax.random.split(key, 7)

    task_num, n_spt, n_qry, n_qn = 2, 2, 2, 2       # even task_num: both v7x TCs busy
    C_in, C_out, H, W = 3, 1, 16, 16

    fan_in = C_in * 3 * 3
    W_mat = (jax.random.normal(k_w, (fan_in, C_out)) / math.sqrt(fan_in)).astype(jnp.float32)
    b_vec = jnp.zeros((C_out,), jnp.float32)

    img_spt = jax.random.normal(k_is, (task_num, n_spt, C_in, H, W), jnp.float32)
    mask_spt = (jax.random.uniform(k_ms, (task_num, n_spt, C_out, H, W)) > 0.5).astype(jnp.float32)
    img_qry = jax.random.normal(k_iq, (task_num, n_qry, C_in, H, W), jnp.float32)
    mask_qry = (jax.random.uniform(k_mq, (task_num, n_qry, C_out, H, W)) > 0.5).astype(jnp.float32)
    qn_img = jax.random.normal(k_qi, (n_qn, C_in, H, W), jnp.float32)
    qn_mask = (jax.random.uniform(k_qm, (n_qn, C_out, H, W)) > 0.5).astype(jnp.float32)

    m_iou, loss = meta_learner_forward(
        W_mat, b_vec, img_spt, mask_spt, img_qry, mask_qry, qn_img, qn_mask,
        update_lr=0.01, update_step=3)
    jax.block_until_ready((m_iou, loss))

    ref_iou, ref_loss = _reference_forward(
        W_mat, b_vec, img_spt, mask_spt, img_qry, mask_qry, 0.01, 3)

    assert jnp.isfinite(m_iou) and jnp.isfinite(loss)
    assert abs(float(loss) - float(ref_loss)) <= 5e-3 * abs(float(ref_loss)) + 1e-4, \
        (float(loss), float(ref_loss))
    assert abs(float(m_iou) - float(ref_iou)) <= 2e-2, (float(m_iou), float(ref_iou))
    print("KERNEL_OK")
</pallas_src>

<mosaic_0001>
module attributes {stable_mosaic.version = 11 : i64} {
  func.func @kernel(%arg0: i32, %arg1: memref<1x3x1024xf32, #tpu.memory_space<vmem>>, %arg2: memref<1x1x768xf32, #tpu.memory_space<vmem>>, %arg3: memref<1x768xf32, #tpu.memory_space<vmem>>, %arg4: memref<1x3x1024xf32, #tpu.memory_space<vmem>>, %arg5: memref<1x1x768xf32, #tpu.memory_space<vmem>>, %arg6: memref<1x768xf32, #tpu.memory_space<vmem>>, %arg7: memref<32x1xf32, #tpu.memory_space<vmem>>, %arg8: memref<1x8x128xf32, #tpu.memory_space<vmem>>, %arg9: memref<32x768xf32, #tpu.memory_space<vmem>>) attributes {dimension_semantics = [#tpu.dimension_semantics<parallel>], iteration_bounds = array<i64: 2>, scalar_prefetch = 0 : i64, scratch_operands = 1 : i64, tpu.core_type = #tpu.core_type<tc>, window_params = [{transform_indices = @transform_0, window_bounds = array<i64: 1, 3, 1024>}, {transform_indices = @transform_1, window_bounds = array<i64: 1, 1, 768>}, {pipeline_mode = #tpu.pipeline_mode<synchronous>, transform_indices = @transform_2, window_bounds = array<i64: 1, 768>}, {transform_indices = @transform_3, window_bounds = array<i64: 1, 3, 1024>}, {transform_indices = @transform_4, window_bounds = array<i64: 1, 1, 768>}, {pipeline_mode = #tpu.pipeline_mode<synchronous>, transform_indices = @transform_5, window_bounds = array<i64: 1, 768>}, {pipeline_mode = #tpu.pipeline_mode<synchronous>, transform_indices = @transform_6, window_bounds = array<i64: 32, 1>}, {transform_indices = @transform_7, window_bounds = array<i64: 1, 8, 128>}]} {
    %c0 = arith.constant 0 : index
    %c0_0 = arith.constant 0 : index
    %c0_1 = arith.constant 0 : index
    %0 = vector.load %arg1[%c0, %c0_0, %c0_1] : memref<1x3x1024xf32, #tpu.memory_space<vmem>>, vector<1x3x1024xf32>
    %1 = vector.shape_cast %0 : vector<1x3x1024xf32> to vector<3x1024xf32>
    %c0_2 = arith.constant 0 : index
    %c0_3 = arith.constant 0 : index
    %c0_4 = arith.constant 0 : index
    %2 = vector.load %arg2[%c0_2, %c0_3, %c0_4] : memref<1x1x768xf32, #tpu.memory_space<vmem>>, vector<1x1x768xf32>
    %3 = vector.shape_cast %2 : vector<1x1x768xf32> to vector<1x768xf32>
    %c0_5 = arith.constant 0 : index
    %c0_6 = arith.constant 0 : index
    %4 = vector.load %arg3[%c0_5, %c0_6] : memref<1x768xf32, #tpu.memory_space<vmem>>, vector<1x768xf32>
    %c0_7 = arith.constant 0 : index
    %c0_8 = arith.constant 0 : index
    %5 = vector.load %arg7[%c0_7, %c0_8] : memref<32x1xf32, #tpu.memory_space<vmem>>, vector<32x1xf32>
    %6 = vector.extract_strided_slice %1 {offsets = [0, 109], sizes = [3, 768], strides = [1, 1]} : vector<3x1024xf32> to vector<3x768xf32>
    %c0_9 = arith.constant 0 : index
    %c0_10 = arith.constant 0 : index
    %7 = vector.load %arg9[%c0_9, %c0_10] : memref<32x768xf32, #tpu.memory_space<vmem>>, vector<3x768xf32>
    tpu.vector_store %arg9[%c0_9, %c0_10], %6 {strides = array<i32>} : memref<32x768xf32, #tpu.memory_space<vmem>>, vector<3x768xf32>,
    %8 = vector.extract_strided_slice %1 {offsets = [0, 110], sizes = [3, 768], strides = [1, 1]} : vector<3x1024xf32> to vector<3x768xf32>
    %c3 = arith.constant 3 : index
    %c0_11 = arith.constant 0 : index
    %9 = vector.load %arg9[%c3, %c0_11] : memref<32x768xf32, #tpu.memory_space<vmem>>, vector<3x768xf32>
    tpu.vector_store %arg9[%c3, %c0_11], %8 {strides = array<i32>} : memref<32x768xf32, #tpu.memory_space<vmem>>, vector<3x768xf32>,
    %10 = vector.extract_strided_slice %1 {offsets = [0, 111], sizes = [3, 768], strides = [1, 1]} : vector<3x1024xf32> to vector<3x768xf32>
    %c6 = arith.constant 6 : index
    %c0_12 = arith.constant 0 : index
    %11 = vector.load %arg9[%c6, %c0_12] : memref<32x768xf32, #tpu.memory_space<vmem>>, vector<3x768xf32>
    tpu.vector_store %arg9[%c6, %c0_12], %10 {strides = array<i32>} : memref<32x768xf32, #tpu.memory_space<vmem>>, vector<3x768xf32>,
    %12 = vector.extract_strided_slice %1 {offsets = [0, 127], sizes = [3, 768], strides = [1, 1]} : vector<3x1024xf32> to vector<3x768xf32>
    %c9 = arith.constant 9 : index
    %c0_13 = arith.constant 0 : index
    %13 = vector.load %arg9[%c9, %c0_13] : memref<32x768xf32, #tpu.memory_space<vmem>>, vector<3x768xf32>
    tpu.vector_store %arg9[%c9, %c0_13], %12 {strides = array<i32>} : memref<32x768xf32, #tpu.memory_space<vmem>>, vector<3x768xf32>,
    %14 = vector.extract_strided_slice %1 {offsets = [0, 128], sizes = [3, 768], strides = [1, 1]} : vector<3x1024xf32> to vector<3x768xf32>
    %c12 = arith.constant 12 : index
    %c0_14 = arith.constant 0 : index
    %15 = vector.load %arg9[%c12, %c0_14] : memref<32x768xf32, #tpu.memory_space<vmem>>, vector<3x768xf32>
    tpu.vector_store %arg9[%c12, %c0_14], %14 {strides = array<i32>} : memref<32x768xf32, #tpu.memory_space<vmem>>, vector<3x768xf32>,
    %16 = vector.extract_strided_slice %1 {offsets = [0, 129], sizes = [3, 768], strides = [1, 1]} : vector<3x1024xf32> to vector<3x768xf32>
    %c15 = arith.constant 15 : index
    %c0_15 = arith.constant 0 : index
    %17 = vector.load %arg9[%c15, %c0_15] : memref<32x768xf32, #tpu.memory_space<vmem>>, vector<3x768xf32>
    tpu.vector_store %arg9[%c15, %c0_15], %16 {strides = array<i32>} : memref<32x768xf32, #tpu.memory_space<vmem>>, vector<3x768xf32>,
    %18 = vector.extract_strided_slice %1 {offsets = [0, 145], sizes = [3, 768], strides = [1, 1]} : vector<3x1024xf32> to vector<3x768xf32>
    %c18 = arith.constant 18 : index
    %c0_16 = arith.constant 0 : index
    %19 = vector.load %arg9[%c18, %c0_16] : memref<32x768xf32, #tpu.memory_space<vmem>>, vector<3x768xf32>
    tpu.vector_store %arg9[%c18, %c0_16], %18 {strides = array<i32>} : memref<32x768xf32, #tpu.memory_space<vmem>>, vector<3x768xf32>,
    %20 = vector.extract_strided_slice %1 {offsets = [0, 146], sizes = [3, 768], strides = [1, 1]} : vector<3x1024xf32> to vector<3x768xf32>
    %c21 = arith.constant 21 : index
    %c0_17 = arith.constant 0 : index
    %21 = vector.load %arg9[%c21, %c0_17] : memref<32x768xf32, #tpu.memory_space<vmem>>, vector<3x768xf32>
    tpu.vector_store %arg9[%c21, %c0_17], %20 {strides = array<i32>} : memref<32x768xf32, #tpu.memory_space<vmem>>, vector<3x768xf32>,
    %22 = vector.extract_strided_slice %1 {offsets = [0, 147], sizes = [3, 768], strides = [1, 1]} : vector<3x1024xf32> to vector<3x768xf32>
    %c24 = arith.constant 24 : index
    %c0_18 = arith.constant 0 : index
    %23 = vector.load %arg9[%c24, %c0_18] : memref<32x768xf32, #tpu.memory_space<vmem>>, vector<3x768xf32>
    tpu.vector_store %arg9[%c24, %c0_18], %22 {strides = array<i32>} : memref<32x768xf32, #tpu.memory_space<vmem>>, vector<3x768xf32>,
    %cst = arith.constant 1.000000e+00 : f32
    %24 = vector.broadcast %cst : f32 to vector<1x768xf32>
    %c27 = arith.constant 27 : index
    %c0_19 = arith.constant 0 : index
    %25 = vector.load %arg9[%c27, %c0_19] : memref<32x768xf32, #tpu.memory_space<vmem>>, vector<1x768xf32>
    tpu.vector_store %arg9[%c27, %c0_19], %24 {strides = array<i32>} : memref<32x768xf32, #tpu.memory_space<vmem>>, vector<1x768xf32>,
    %cst_20 = arith.constant 0.000000e+00 : f32
    %26 = vector.broadcast %cst_20 : f32 to vector<4x768xf32>
    %c28 = arith.constant 28 : index
    %c0_21 = arith.constant 0 : index
    %27 = vector.load %arg9[%c28, %c0_21] : memref<32x768xf32, #tpu.memory_space<vmem>>, vector<4x768xf32>
    tpu.vector_store %arg9[%c28, %c0_21], %26 {strides = array<i32>} : memref<32x768xf32, #tpu.memory_space<vmem>>, vector<4x768xf32>,
    %c0_22 = arith.constant 0 : index
    %c0_23 = arith.constant 0 : index
    %28 = vector.load %arg9[%c0_22, %c0_23] : memref<32x768xf32, #tpu.memory_space<vmem>>, vector<32x768xf32>
    %29 = vector.broadcast %5 : vector<32x1xf32> to vector<32x768xf32>
    %30 = arith.mulf %28, %29 : vector<32x768xf32>
    %cst_24 = arith.constant dense<0.000000e+00> : vector<768xf32>
    %31 = vector.multi_reduction <add>, %30, %cst_24 [0] : vector<32x768xf32> to vector<768xf32>
    %32 = vector.shape_cast %31 : vector<768xf32> to vector<1x768xf32>
    %cst_25 = arith.constant 0.000000e+00 : f32
    %33 = vector.broadcast %cst_25 : f32 to vector<1x768xf32>
    %34 = arith.subf %33, %32 : vector<1x768xf32>
    %35 = math.exp %34 : vector<1x768xf32>
    %cst_26 = arith.constant 1.000000e+00 : f32
    %36 = vector.broadcast %cst_26 : f32 to vector<1x768xf32>
    %37 = arith.addf %36, %35 : vector<1x768xf32>
    %38 = tpu.reciprocal %37 {approx = true} : vector<1x768xf32> -> vector<1x768xf32>
    %39 = arith.subf %38, %3 : vector<1x768xf32>
    %40 = arith.mulf %4, %39 : vector<1x768xf32>
    %cst_27 = arith.constant 0.001953125 : f32
    %41 = vector.broadcast %cst_27 : f32 to vector<1x768xf32>
    %42 = arith.mulf %40, %41 : vector<1x768xf32>
    %43 = vector.broadcast %42 : vector<1x768xf32> to vector<32x768xf32>
    %44 = arith.mulf %28, %43 : vector<32x768xf32>
    %cst_28 = arith.constant dense<0.000000e+00> : vector<32xf32>
    %45 = vector.multi_reduction <add>, %44, %cst_28 [1] : vector<32x768xf32> to vector<32xf32>
    %46 = vector.shape_cast %45 : vector<32xf32> to vector<32x1xf32>
    %cst_29 = arith.constant 0.00999999977 : f32
    %47 = vector.broadcast %cst_29 : f32 to vector<32x1xf32>
    %48 = arith.mulf %47, %46 : vector<32x1xf32>
    %49 = arith.subf %5, %48 : vector<32x1xf32>
    %50 = vector.broadcast %49 : vector<32x1xf32> to vector<32x768xf32>
    %51 = arith.mulf %28, %50 : vector<32x768xf32>
    %cst_30 = arith.constant dense<0.000000e+00> : vector<768xf32>
    %52 = vector.multi_reduction <add>, %51, %cst_30 [0] : vector<32x768xf32> to vector<768xf32>
    %53 = vector.shape_cast %52 : vector<768xf32> to vector<1x768xf32>
    %cst_31 = arith.constant 0.000000e+00 : f32
    %54 = vector.broadcast %cst_31 : f32 to vector<1x768xf32>
    %55 = arith.subf %54, %53 : vector<1x768xf32>
    %56 = math.exp %55 : vector<1x768xf32>
    %cst_32 = arith.constant 1.000000e+00 : f32
    %57 = vector.broadcast %cst_32 : f32 to vector<1x768xf32>
    %58 = arith.addf %57, %56 : vector<1x768xf32>
    %59 = tpu.reciprocal %58 {approx = true} : vector<1x768xf32> -> vector<1x768xf32>
    %60 = arith.subf %59, %3 : vector<1x768xf32>
    %61 = arith.mulf %4, %60 : vector<1x768xf32>
    %cst_33 = arith.constant 0.001953125 : f32
    %62 = vector.broadcast %cst_33 : f32 to vector<1x768xf32>
    %63 = arith.mulf %61, %62 : vector<1x768xf32>
    %64 = vector.broadcast %63 : vector<1x768xf32> to vector<32x768xf32>
    %65 = arith.mulf %28, %64 : vector<32x768xf32>
    %cst_34 = arith.constant dense<0.000000e+00> : vector<32xf32>
    %66 = vector.multi_reduction <add>, %65, %cst_34 [1] : vector<32x768xf32> to vector<32xf32>
    %67 = vector.shape_cast %66 : vector<32xf32> to vector<32x1xf32>
    %cst_35 = arith.constant 0.00999999977 : f32
    %68 = vector.broadcast %cst_35 : f32 to vector<32x1xf32>
    %69 = arith.mulf %68, %67 : vector<32x1xf32>
    %70 = arith.subf %49, %69 : vector<32x1xf32>
    %71 = vector.broadcast %70 : vector<32x1xf32> to vector<32x768xf32>
    %72 = arith.mulf %28, %71 : vector<32x768xf32>
    %cst_36 = arith.constant dense<0.000000e+00> : vector<768xf32>
    %73 = vector.multi_reduction <add>, %72, %cst_36 [0] : vector<32x768xf32> to vector<768xf32>
    %74 = vector.shape_cast %73 : vector<768xf32> to vector<1x768xf32>
    %cst_37 = arith.constant 0.000000e+00 : f32
    %75 = vector.broadcast %cst_37 : f32 to vector<1x768xf32>
    %76 = arith.subf %75, %74 : vector<1x768xf32>
    %77 = math.exp %76 : vector<1x768xf32>
    %cst_38 = arith.constant 1.000000e+00 : f32
    %78 = vector.broadcast %cst_38 : f32 to vector<1x768xf32>
    %79 = arith.addf %78, %77 : vector<1x768xf32>
    %80 = tpu.reciprocal %79 {approx = true} : vector<1x768xf32> -> vector<1x768xf32>
    %81 = arith.subf %80, %3 : vector<1x768xf32>
    %82 = arith.mulf %4, %81 : vector<1x768xf32>
    %cst_39 = arith.constant 0.001953125 : f32
    %83 = vector.broadcast %cst_39 : f32 to vector<1x768xf32>
    %84 = arith.mulf %82, %83 : vector<1x768xf32>
    %85 = vector.broadcast %84 : vector<1x768xf32> to vector<32x768xf32>
    %86 = arith.mulf %28, %85 : vector<32x768xf32>
    %cst_40 = arith.constant dense<0.000000e+00> : vector<32xf32>
    %87 = vector.multi_reduction <add>, %86, %cst_40 [1] : vector<32x768xf32> to vector<32xf32>
    %88 = vector.shape_cast %87 : vector<32xf32> to vector<32x1xf32>
    %cst_41 = arith.constant 0.00999999977 : f32
    %89 = vector.broadcast %cst_41 : f32 to vector<32x1xf32>
    %90 = arith.mulf %89, %88 : vector<32x1xf32>
    %91 = arith.subf %70, %90 : vector<32x1xf32>
    %c0_42 = arith.constant 0 : index
    %c0_43 = arith.constant 0 : index
    %c0_44 = arith.constant 0 : index
    %92 = vector.load %arg4[%c0_42, %c0_43, %c0_44] : memref<1x3x1024xf32, #tpu.memory_space<vmem>>, vector<1x3x1024xf32>
    %93 = vector.shape_cast %92 : vector<1x3x1024xf32> to vector<3x1024xf32>
    %c0_45 = arith.constant 0 : index
    %c0_46 = arith.constant 0 : index
    %c0_47 = arith.constant 0 : index
    %94 = vector.load %arg5[%c0_45, %c0_46, %c0_47] : memref<1x1x768xf32, #tpu.memory_space<vmem>>, vector<1x1x768xf32>
    %95 = vector.shape_cast %94 : vector<1x1x768xf32> to vector<1x768xf32>
    %c0_48 = arith.constant 0 : index
    %c0_49 = arith.constant 0 : index
    %96 = vector.load %arg6[%c0_48, %c0_49] : memref<1x768xf32, #tpu.memory_space<vmem>>, vector<1x768xf32>
    %cst_50 = arith.constant 0.000000e+00 : f32
    %97 = vector.broadcast %cst_50 : f32 to vector<1x768xf32>
    %98 = vector.extract_strided_slice %91 {offsets = [27, 0], sizes = [1, 1], strides = [1, 1]} : vector<32x1xf32> to vector<1x1xf32>
    %99 = vector.extract %98[0, 0] : f32 from vector<1x1xf32>
    %100 = vector.broadcast %99 : f32 to vector<1x768xf32>
    %101 = arith.addf %97, %100 : vector<1x768xf32>
    %102 = vector.extract_strided_slice %93 {offsets = [0, 109], sizes = [3, 768], strides = [1, 1]} : vector<3x1024xf32> to vector<3x768xf32>
    %103 = vector.extract_strided_slice %91 {offsets = [0, 0], sizes = [3, 1], strides = [1, 1]} : vector<32x1xf32> to vector<3x1xf32>
    %104 = vector.broadcast %103 : vector<3x1xf32> to vector<3x768xf32>
    %105 = arith.mulf %102, %104 : vector<3x768xf32>
    %cst_51 = arith.constant dense<0.000000e+00> : vector<768xf32>
    %106 = vector.multi_reduction <add>, %105, %cst_51 [0] : vector<3x768xf32> to vector<768xf32>
    %107 = vector.shape_cast %106 : vector<768xf32> to vector<1x768xf32>
    %108 = arith.addf %101, %107 : vector<1x768xf32>
    %109 = vector.extract_strided_slice %93 {offsets = [0, 110], sizes = [3, 768], strides = [1, 1]} : vector<3x1024xf32> to vector<3x768xf32>
    %110 = vector.extract_strided_slice %91 {offsets = [3, 0], sizes = [3, 1], strides = [1, 1]} : vector<32x1xf32> to vector<3x1xf32>
    %111 = vector.broadcast %110 : vector<3x1xf32> to vector<3x768xf32>
    %112 = arith.mulf %109, %111 : vector<3x768xf32>
    %cst_52 = arith.constant dense<0.000000e+00> : vector<768xf32>
    %113 = vector.multi_reduction <add>, %112, %cst_52 [0] : vector<3x768xf32> to vector<768xf32>
    %114 = vector.shape_cast %113 : vector<768xf32> to vector<1x768xf32>
    %115 = arith.addf %108, %114 : vector<1x768xf32>
    %116 = vector.extract_strided_slice %93 {offsets = [0, 111], sizes = [3, 768], strides = [1, 1]} : vector<3x1024xf32> to vector<3x768xf32>
    %117 = vector.extract_strided_slice %91 {offsets = [6, 0], sizes = [3, 1], strides = [1, 1]} : vector<32x1xf32> to vector<3x1xf32>
    %118 = vector.broadcast %117 : vector<3x1xf32> to vector<3x768xf32>
    %119 = arith.mulf %116, %118 : vector<3x768xf32>
    %cst_53 = arith.constant dense<0.000000e+00> : vector<768xf32>
    %120 = vector.multi_reduction <add>, %119, %cst_53 [0] : vector<3x768xf32> to vector<768xf32>
    %121 = vector.shape_cast %120 : vector<768xf32> to vector<1x768xf32>
    %122 = arith.addf %115, %121 : vector<1x768xf32>
    %123 = vector.extract_strided_slice %93 {offsets = [0, 127], sizes = [3, 768], strides = [1, 1]} : vector<3x1024xf32> to vector<3x768xf32>
    %124 = vector.extract_strided_slice %91 {offsets = [9, 0], sizes = [3, 1], strides = [1, 1]} : vector<32x1xf32> to vector<3x1xf32>
    %125 = vector.broadcast %124 : vector<3x1xf32> to vector<3x768xf32>
    %126 = arith.mulf %123, %125 : vector<3x768xf32>
    %cst_54 = arith.constant dense<0.000000e+00> : vector<768xf32>
    %127 = vector.multi_reduction <add>, %126, %cst_54 [0] : vector<3x768xf32> to vector<768xf32>
    %128 = vector.shape_cast %127 : vector<768xf32> to vector<1x768xf32>
    %129 = arith.addf %122, %128 : vector<1x768xf32>
    %130 = vector.extract_strided_slice %93 {offsets = [0, 128], sizes = [3, 768], strides = [1, 1]} : vector<3x1024xf32> to vector<3x768xf32>
    %131 = vector.extract_strided_slice %91 {offsets = [12, 0], sizes = [3, 1], strides = [1, 1]} : vector<32x1xf32> to vector<3x1xf32>
    %132 = vector.broadcast %131 : vector<3x1xf32> to vector<3x768xf32>
    %133 = arith.mulf %130, %132 : vector<3x768xf32>
    %cst_55 = arith.constant dense<0.000000e+00> : vector<768xf32>
    %134 = vector.multi_reduction <add>, %133, %cst_55 [0] : vector<3x768xf32> to vector<768xf32>
    %135 = vector.shape_cast %134 : vector<768xf32> to vector<1x768xf32>
    %136 = arith.addf %129, %135 : vector<1x768xf32>
    %137 = vector.extract_strided_slice %93 {offsets = [0, 129], sizes = [3, 768], strides = [1, 1]} : vector<3x1024xf32> to vector<3x768xf32>
    %138 = vector.extract_strided_slice %91 {offsets = [15, 0], sizes = [3, 1], strides = [1, 1]} : vector<32x1xf32> to vector<3x1xf32>
    %139 = vector.broadcast %138 : vector<3x1xf32> to vector<3x768xf32>
    %140 = arith.mulf %137, %139 : vector<3x768xf32>
    %cst_56 = arith.constant dense<0.000000e+00> : vector<768xf32>
    %141 = vector.multi_reduction <add>, %140, %cst_56 [0] : vector<3x768xf32> to vector<768xf32>
    %142 = vector.shape_cast %141 : vector<768xf32> to vector<1x768xf32>
    %143 = arith.addf %136, %142 : vector<1x768xf32>
    %144 = vector.extract_strided_slice %93 {offsets = [0, 145], sizes = [3, 768], strides = [1, 1]} : vector<3x1024xf32> to vector<3x768xf32>
    %145 = vector.extract_strided_slice %91 {offsets = [18, 0], sizes = [3, 1], strides = [1, 1]} : vector<32x1xf32> to vector<3x1xf32>
    %146 = vector.broadcast %145 : vector<3x1xf32> to vector<3x768xf32>
    %147 = arith.mulf %144, %146 : vector<3x768xf32>
    %cst_57 = arith.constant dense<0.000000e+00> : vector<768xf32>
    %148 = vector.multi_reduction <add>, %147, %cst_57 [0] : vector<3x768xf32> to vector<768xf32>
    %149 = vector.shape_cast %148 : vector<768xf32> to vector<1x768xf32>
    %150 = arith.addf %143, %149 : vector<1x768xf32>
    %151 = vector.extract_strided_slice %93 {offsets = [0, 146], sizes = [3, 768], strides = [1, 1]} : vector<3x1024xf32> to vector<3x768xf32>
    %152 = vector.extract_strided_slice %91 {offsets = [21, 0], sizes = [3, 1], strides = [1, 1]} : vector<32x1xf32> to vector<3x1xf32>
    %153 = vector.broadcast %152 : vector<3x1xf32> to vector<3x768xf32>
    %154 = arith.mulf %151, %153 : vector<3x768xf32>
    %cst_58 = arith.constant dense<0.000000e+00> : vector<768xf32>
    %155 = vector.multi_reduction <add>, %154, %cst_58 [0] : vector<3x768xf32> to vector<768xf32>
    %156 = vector.shape_cast %155 : vector<768xf32> to vector<1x768xf32>
    %157 = arith.addf %150, %156 : vector<1x768xf32>
    %158 = vector.extract_strided_slice %93 {offsets = [0, 147], sizes = [3, 768], strides = [1, 1]} : vector<3x1024xf32> to vector<3x768xf32>
    %159 = vector.extract_strided_slice %91 {offsets = [24, 0], sizes = [3, 1], strides = [1, 1]} : vector<32x1xf32> to vector<3x1xf32>
    %160 = vector.broadcast %159 : vector<3x1xf32> to vector<3x768xf32>
    %161 = arith.mulf %158, %160 : vector<3x768xf32>
    %cst_59 = arith.constant dense<0.000000e+00> : vector<768xf32>
    %162 = vector.multi_reduction <add>, %161, %cst_59 [0] : vector<3x768xf32> to vector<768xf32>
    %163 = vector.shape_cast %162 : vector<768xf32> to vector<1x768xf32>
    %164 = arith.addf %157, %163 : vector<1x768xf32>
    %cst_60 = arith.constant 0.000000e+00 : f32
    %165 = vector.broadcast %cst_60 : f32 to vector<1x768xf32>
    %166 = arith.maximumf %164, %165 : vector<1x768xf32>
    %167 = arith.mulf %164, %95 : vector<1x768xf32>
    %168 = arith.subf %166, %167 : vector<1x768xf32>
    %169 = math.absf %164 : vector<1x768xf32>
    %cst_61 = arith.constant 0.000000e+00 : f32
    %170 = vector.broadcast %cst_61 : f32 to vector<1x768xf32>
    %171 = arith.subf %170, %169 : vector<1x768xf32>
    %172 = math.exp %171 : vector<1x768xf32>
    %173 = math.log1p %172 : vector<1x768xf32>
    %174 = arith.addf %168, %173 : vector<1x768xf32>
    %175 = arith.mulf %96, %174 : vector<1x768xf32>
    %176 = vector.shape_cast %175 : vector<1x768xf32> to vector<1x1x768xf32>
    %cst_62 = arith.constant dense<0.000000e+00> : vector<1xf32>
    %177 = vector.multi_reduction <add>, %176, %cst_62 [1, 2] : vector<1x1x768xf32> to vector<1xf32>
    %178 = vector.shape_cast %177 : vector<1xf32> to vector<1x1x1xf32>
    %179 = vector.extract %178[0, 0, 0] : f32 from vector<1x1x1xf32>
    %cst_63 = arith.constant 0.001953125 : f32
    %180 = arith.mulf %179, %cst_63 : f32
    %cst_64 = arith.constant 0.000000e+00 : f32
    %181 = vector.broadcast %cst_64 : f32 to vector<1x768xf32>
    %182 = arith.cmpf ogt, %164, %181 : vector<1x768xf32>
    %cst_65 = arith.constant 1.000000e+00 : f32
    %cst_66 = arith.constant 0.000000e+00 : f32
    %183 = vector.broadcast %cst_65 : f32 to vector<1x768xf32>
    %184 = vector.broadcast %cst_66 : f32 to vector<1x768xf32>
    %185 = arith.select %182, %183, %184 : vector<1x768xi1>, vector<1x768xf32>
    %186 = arith.mulf %96, %185 : vector<1x768xf32>
    %187 = arith.mulf %186, %95 : vector<1x768xf32>
    %188 = vector.shape_cast %187 : vector<1x768xf32> to vector<1x1x768xf32>
    %cst_67 = arith.constant dense<0.000000e+00> : vector<1xf32>
    %189 = vector.multi_reduction <add>, %188, %cst_67 [1, 2] : vector<1x1x768xf32> to vector<1xf32>
    %190 = vector.shape_cast %189 : vector<1xf32> to vector<1x1x1xf32>
    %191 = vector.extract %190[0, 0, 0] : f32 from vector<1x1x1xf32>
    %192 = vector.shape_cast %186 : vector<1x768xf32> to vector<1x1x768xf32>
    %cst_68 = arith.constant dense<0.000000e+00> : vector<1xf32>
    %193 = vector.multi_reduction <add>, %192, %cst_68 [1, 2] : vector<1x1x768xf32> to vector<1xf32>
    %194 = vector.shape_cast %193 : vector<1xf32> to vector<1x1x1xf32>
    %195 = vector.extract %194[0, 0, 0] : f32 from vector<1x1x1xf32>
    %196 = vector.shape_cast %95 : vector<1x768xf32> to vector<1x1x768xf32>
    %cst_69 = arith.constant dense<0.000000e+00> : vector<1xf32>
    %197 = vector.multi_reduction <add>, %196, %cst_69 [1, 2] : vector<1x1x768xf32> to vector<1xf32>
    %198 = vector.shape_cast %197 : vector<1xf32> to vector<1x1x1xf32>
    %199 = vector.extract %198[0, 0, 0] : f32 from vector<1x1x1xf32>
    %200 = arith.addf %195, %199 : f32
    %201 = arith.subf %200, %191 : f32
    %cst_70 = arith.constant 9.99999997E-7 : f32
    %202 = arith.addf %201, %cst_70 : f32
    %203 = arith.divf %191, %202 : f32
    %204 = tpu.iota {dimensions = array<i32: 1>} : vector<1x8x128xi32>
    %c4_i32 = arith.constant 4 : i32
    %205 = vector.broadcast %c4_i32 : i32 to vector<1x8x128xi32>
    %206 = arith.cmpi slt, %204, %205 : vector<1x8x128xi32>
    %207 = vector.broadcast %180 : f32 to vector<1x8x128xf32>
    %208 = vector.broadcast %203 : f32 to vector<1x8x128xf32>
    %209 = arith.select %206, %207, %208 : vector<1x8x128xi1>, vector<1x8x128xf32>
    %c0_71 = arith.constant 0 : index
    %c0_72 = arith.constant 0 : index
    %c0_73 = arith.constant 0 : index
    %210 = vector.load %arg8[%c0_71, %c0_72, %c0_73] : memref<1x8x128xf32, #tpu.memory_space<vmem>>, vector<1x8x128xf32>
    tpu.vector_store %arg8[%c0_71, %c0_72, %c0_73], %209 {strides = array<i32>} : memref<1x8x128xf32, #tpu.memory_space<vmem>>, vector<1x8x128xf32>,
    return
  }
  func.func @transform_0(%arg0: i32) -> (i32, i32, i32) {
    %c0_i32 = arith.constant 0 : i32
    %c0_i32_0 = arith.constant 0 : i32
    %c0_i32_1 = arith.constant 0 : i32
    return %arg0, %c0_i32, %c0_i32_0 : i32, i32, i32
  }
  func.func @transform_1(%arg0: i32) -> (i32, i32, i32) {
    %c0_i32 = arith.constant 0 : i32
    %c0_i32_0 = arith.constant 0 : i32
    %c0_i32_1 = arith.constant 0 : i32
    return %arg0, %c0_i32, %c0_i32_0 : i32, i32, i32
  }
  func.func @transform_2(%arg0: i32) -> (i32, i32) {
    %c0_i32 = arith.constant 0 : i32
    %c0_i32_0 = arith.constant 0 : i32
    %c0_i32_1 = arith.constant 0 : i32
    return %c0_i32, %c0_i32_0 : i32, i32
  }
  func.func @transform_3(%arg0: i32) -> (i32, i32, i32) {
    %c0_i32 = arith.constant 0 : i32
    %c0_i32_0 = arith.constant 0 : i32
    %c0_i32_1 = arith.constant 0 : i32
    return %arg0, %c0_i32, %c0_i32_0 : i32, i32, i32
  }
  func.func @transform_4(%arg0: i32) -> (i32, i32, i32) {
    %c0_i32 = arith.constant 0 : i32
    %c0_i32_0 = arith.constant 0 : i32
    %c0_i32_1 = arith.constant 0 : i32
    return %arg0, %c0_i32, %c0_i32_0 : i32, i32, i32
  }
  func.func @transform_5(%arg0: i32) -> (i32, i32) {
    %c0_i32 = arith.constant 0 : i32
    %c0_i32_0 = arith.constant 0 : i32
    %c0_i32_1 = arith.constant 0 : i32
    return %c0_i32, %c0_i32_0 : i32, i32
  }
  func.func @transform_6(%arg0: i32) -> (i32, i32) {
    %c0_i32 = arith.constant 0 : i32
    %c0_i32_0 = arith.constant 0 : i32
    %c0_i32_1 = arith.constant 0 : i32
    return %c0_i32, %c0_i32_0 : i32, i32
  }
  func.func @transform_7(%arg0: i32) -> (i32, i32, i32) {
    %c0_i32 = arith.constant 0 : i32
    %c0_i32_0 = arith.constant 0 : i32
    %c0_i32_1 = arith.constant 0 : i32
    return %arg0, %c0_i32, %c0_i32_0 : i32, i32, i32
  }
}

</mosaic_0001>

<llo_original>
// kernel: meta_learner_forward.1
$region0: #{meta_learner_forward.1}
  #allocation0 [shape = 'u32[]', space=smem, size = 0x4, offset = 0x4, fixed_abs, tag = 'smem constant byte address 0x4 - core index']
  #allocation1 [shape = 'u32[144,128]{1,0:T(1,128)}', space=vmem, size = 0x12000, scoped, tag = 'internal scratch']
  #allocation2 [shape = 'f32[32,768]{1,0:T(8,128)}', space=vmem, size = 0x18000, scoped, tag = 'scratch operand']
  %s0 = inlined_call_operand.vmem [shape: f32[2,3,1024], index: 0, kind: input, shape index: {}]
  %s1 = inlined_call_operand.vmem [shape: f32[2,1,768], index: 1, kind: input, shape index: {}]
  %s2 = inlined_call_operand.vmem [shape: f32[1,768], index: 2, kind: input, shape index: {}, may-alias: {2,5}]
  %s3 = inlined_call_operand.vmem [shape: f32[2,3,1024], index: 3, kind: input, shape index: {}]
  %s4 = inlined_call_operand.vmem [shape: f32[2,1,768], index: 4, kind: input, shape index: {}]
  %s5 = inlined_call_operand.vmem [shape: f32[1,768], index: 5, kind: input, shape index: {}, may-alias: {2,5}]
  %s6 = inlined_call_operand.vmem [shape: f32[32,1], index: 6, kind: input, shape index: {}]
  %s7 = inlined_call_operand.vmem [shape: f32[2,8,128], index: 7, kind: output, shape index: {}]
  %s8 = sld [smem:[#allocation0]]
  $region61: #{meta_learner_forward.1} parent=0
    _
  %s10 = ssub.s32 1, %s8
  %s11 = scalar_select 0, %s10, %s8
  loop: start=0, step=1, limit=4
  $region2: #{meta_learner_forward.1} parent=0 // loop_pre_header
    _
  $region3: #{meta_learner_forward.1} parent=0 // loop_header
    %s13 = sphi 0, %s17
    %p14 = scmp.ge.s32.totalorder %s13, 4
    %s23 = sphi 0, %s25
    %s26 = sphi 0, %s23
    %s27 = sphi 0, %s26
    %s43 = sphi 0, %s27
    %s49 = sphi 0, %s51
    %s52 = sphi 0, %s49
    %s53 = sphi 0, %s52
    %s69 = sphi 0, %s53
    %s73 = sphi 0, %s73
    %s75 = sphi 0, %s73
    %s76 = sphi 0, %s75
    %s90 = sphi 0, %s76
    %s96 = sphi 0, %s98
    %s99 = sphi 0, %s96
    %s100 = sphi 0, %s99
    %s116 = sphi 0, %s100
    %s122 = sphi 0, %s124
    %s125 = sphi 0, %s122
    %s126 = sphi 0, %s125
    %s142 = sphi 0, %s126
    %s146 = sphi 0, %s146
    %s148 = sphi 0, %s146
    %s149 = sphi 0, %s148
    %s163 = sphi 0, %s149
    %s167 = sphi 0, %s167
    %s169 = sphi 0, %s167
    %s170 = sphi 0, %s169
    %s184 = sphi 0, %s170
    %s190 = sphi 0, %s192
    %s193 = sphi 0, %s190
    %s194 = sphi 0, %s193
    %s210 = sphi 0, %s194
  $region4: #{meta_learner_forward.1} parent=0 // loop_header_branch
    %16 = sbr.rel (%p14) target = $region8
  $region5: #{meta_learner_forward.1} parent=0 // loop_body
    %s18 = ssub.s32 %s13, 1
    %s19 = ssub.s32 %s13, 2
    %s20 = sadd.s32 %s13, 1
    %s21 = ssub.s32 %s13, %s20
    %p22 = scmp.eq.s32.totalorder %s21, 0
    %s24 = sadd.s32 %s23, 1
    %s25 = scalar_select %p22, %s23, %s24
    %p28 = pneg %p22
    %p29 = scmp.eq.s32.totalorder %s13, 1
    %p30 = por %p28, %p29
    %p31 = scmp.ne.s32.totalorder %s23, %s26
    %p32 = scmp.eq.s32.totalorder %s13, 0
    %p33 = por %p31, %p32
    %p34 = scmp.ne.s32.totalorder %s23, %s26
    %p35 = scmp.eq.s32.totalorder %s18, 1
    %p36 = por %p34, %p35
    %p37 = scmp.ne.s32.totalorder %s26, %s27
    %p38 = scmp.eq.s32.totalorder %s18, 0
    %p39 = por %p37, %p38
    %p40 = scmp.ne.s32.totalorder %s26, %s27
    %p41 = scmp.eq.s32.totalorder %s19, 1
    %p42 = por %p40, %p41
    %p44 = scmp.ne.s32.totalorder %s27, %s43
    %p45 = scmp.eq.s32.totalorder %s19, 0
    %p46 = por %p44, %p45
    %s47 = ssub.s32 %s13, %s20
    %p48 = scmp.eq.s32.totalorder %s47, 0
    %s50 = sadd.s32 %s49, 1
    %s51 = scalar_select %p48, %s49, %s50
    %p54 = pneg %p48
    %p55 = scmp.eq.s32.totalorder %s13, 1
    %p56 = por %p54, %p55
    %p57 = scmp.ne.s32.totalorder %s49, %s52
    %p58 = scmp.eq.s32.totalorder %s13, 0
    %p59 = por %p57, %p58
    %p60 = scmp.ne.s32.totalorder %s49, %s52
    %p61 = scmp.eq.s32.totalorder %s18, 1
    %p62 = por %p60, %p61
    %p63 = scmp.ne.s32.totalorder %s52, %s53
    %p64 = scmp.eq.s32.totalorder %s18, 0
    %p65 = por %p63, %p64
    %p66 = scmp.ne.s32.totalorder %s52, %s53
    %p67 = scmp.eq.s32.totalorder %s19, 1
    %p68 = por %p66, %p67
    %p70 = scmp.ne.s32.totalorder %s53, %s69
    %p71 = scmp.eq.s32.totalorder %s19, 0
    %p72 = por %p70, %p71
    %s74 = sadd.s32 %s73, 1
    %p77 = scmp.eq.s32.totalorder %s13, 1
    %p78 = scmp.ne.s32.totalorder %s73, %s75
    %p79 = scmp.eq.s32.totalorder %s13, 0
    %p80 = por %p78, %p79
    %p81 = scmp.ne.s32.totalorder %s73, %s75
    %p82 = scmp.eq.s32.totalorder %s18, 1
    %p83 = por %p81, %p82
    %p84 = scmp.ne.s32.totalorder %s75, %s76
    %p85 = scmp.eq.s32.totalorder %s18, 0
    %p86 = por %p84, %p85
    %p87 = scmp.ne.s32.totalorder %s75, %s76
    %p88 = scmp.eq.s32.totalorder %s19, 1
    %p89 = por %p87, %p88
    %p91 = scmp.ne.s32.totalorder %s76, %s90
    %p92 = scmp.eq.s32.totalorder %s19, 0
    %p93 = por %p91, %p92
    %s94 = ssub.s32 %s13, %s20
    %p95 = scmp.eq.s32.totalorder %s94, 0
    %s97 = sadd.s32 %s96, 1
    %s98 = scalar_select %p95, %s96, %s97
    %p101 = pneg %p95
    %p102 = scmp.eq.s32.totalorder %s13, 1
    %p103 = por %p101, %p102
    %p104 = scmp.ne.s32.totalorder %s96, %s99
    %p105 = scmp.eq.s32.totalorder %s13, 0
    %p106 = por %p104, %p105
    %p107 = scmp.ne.s32.totalorder %s96, %s99
    %p108 = scmp.eq.s32.totalorder %s18, 1
    %p109 = por %p107, %p108
    %p110 = scmp.ne.s32.totalorder %s99, %s100
    %p111 = scmp.eq.s32.totalorder %s18, 0
    %p112 = por %p110, %p111
    %p113 = scmp.ne.s32.totalorder %s99, %s100
    %p114 = scmp.eq.s32.totalorder %s19, 1
    %p115 = por %p113, %p114
    %p117 = scmp.ne.s32.totalorder %s100, %s116
    %p118 = scmp.eq.s32.totalorder %s19, 0
    %p119 = por %p117, %p118
    %s120 = ssub.s32 %s13, %s20
    %p121 = scmp.eq.s32.totalorder %s120, 0
    %s123 = sadd.s32 %s122, 1
    %s124 = scalar_select %p121, %s122, %s123
    %p127 = pneg %p121
    %p128 = scmp.eq.s32.totalorder %s13, 1
    %p129 = por %p127, %p128
    %p130 = scmp.ne.s32.totalorder %s122, %s125
    %p131 = scmp.eq.s32.totalorder %s13, 0
    %p132 = por %p130, %p131
    %p133 = scmp.ne.s32.totalorder %s122, %s125
    %p134 = scmp.eq.s32.totalorder %s18, 1
    %p135 = por %p133, %p134
    %p136 = scmp.ne.s32.totalorder %s125, %s126
    %p137 = scmp.eq.s32.totalorder %s18, 0
    %p138 = por %p136, %p137
    %p139 = scmp.ne.s32.totalorder %s125, %s126
    %p140 = scmp.eq.s32.totalorder %s19, 1
    %p141 = por %p139, %p140
    %p143 = scmp.ne.s32.totalorder %s126, %s142
    %p144 = scmp.eq.s32.totalorder %s19, 0
    %p145 = por %p143, %p144
    %s147 = sadd.s32 %s146, 1
    %p150 = scmp.eq.s32.totalorder %s13, 1
    %p151 = scmp.ne.s32.totalorder %s146, %s148
    %p152 = scmp.eq.s32.totalorder %s13, 0
    %p153 = por %p151, %p152
    %p154 = scmp.ne.s32.totalorder %s146, %s148
    %p155 = scmp.eq.s32.totalorder %s18, 1
    %p156 = por %p154, %p155
    %p157 = scmp.ne.s32.totalorder %s148, %s149
    %p158 = scmp.eq.s32.totalorder %s18, 0
    %p159 = por %p157, %p158
    %p160 = scmp.ne.s32.totalorder %s148, %s149
    %p161 = scmp.eq.s32.totalorder %s19, 1
    %p162 = por %p160, %p161
    %p164 = scmp.ne.s32.totalorder %s149, %s163
    %p165 = scmp.eq.s32.totalorder %s19, 0
    %p166 = por %p164, %p165
    %s168 = sadd.s32 %s167, 1
    %p171 = scmp.eq.s32.totalorder %s13, 1
    %p172 = scmp.ne.s32.totalorder %s167, %s169
    %p173 = scmp.eq.s32.totalorder %s13, 0
    %p174 = por %p172, %p173
    %p175 = scmp.ne.s32.totalorder %s167, %s169
    %p176 = scmp.eq.s32.totalorder %s18, 1
    %p177 = por %p175, %p176
    %p178 = scmp.ne.s32.totalorder %s169, %s170
    %p179 = scmp.eq.s32.totalorder %s18, 0
    %p180 = por %p178, %p179
    %p181 = scmp.ne.s32.totalorder %s169, %s170
    %p182 = scmp.eq.s32.totalorder %s19, 1
    %p183 = por %p181, %p182
    %p185 = scmp.ne.s32.totalorder %s170, %s184
    %p186 = scmp.eq.s32.totalorder %s19, 0
    %p187 = por %p185, %p186
    %s188 = ssub.s32 %s13, %s20
    %p189 = scmp.eq.s32.totalorder %s188, 0
    %s191 = sadd.s32 %s190, 1
    %s192 = scalar_select %p189, %s190, %s191
    %p195 = pneg %p189
    %p196 = scmp.eq.s32.totalorder %s13, 1
    %p197 = por %p195, %p196
    %p198 = scmp.ne.s32.totalorder %s190, %s193
    %p199 = scmp.eq.s32.totalorder %s13, 0
    %p200 = por %p198, %p199
    %p201 = scmp.ne.s32.totalorder %s190, %s193
    %p202 = scmp.eq.s32.totalorder %s18, 1
    %p203 = por %p201, %p202
    %p204 = scmp.ne.s32.totalorder %s193, %s194
    %p205 = scmp.eq.s32.totalorder %s18, 0
    %p206 = por %p204, %p205
    %p207 = scmp.ne.s32.totalorder %s193, %s194
    %p208 = scmp.eq.s32.totalorder %s19, 1
    %p209 = por %p207, %p208
    %p211 = scmp.ne.s32.totalorder %s194, %s210
    %p212 = scmp.eq.s32.totalorder %s19, 0
    %p213 = por %p211, %p212
    %p214 = scmp.le.s32.totalorder 1, %s13
    %p215 = scmp.lt.s32.totalorder %s13, 3
    %p216 = pnand %p214, %p215
    %p217 = pneg %p216
    // Predicated region
    $region9: #{meta_learner_forward.1} parent=5 // pred_check
      _
    $region10: #{meta_learner_forward.1} parent=5 // pred_check_branch
      %219 = sbr.rel (%p216) target = $region12
    $region11: #{meta_learner_forward.1} parent=5 // pred_region
      %s220 = ssub.s32 %s13, 1
      // Predicated region
      $region13: #{meta_learner_forward.1} parent=11 // pred_check
        %p221 = pneg %p86
      $region14: #{meta_learner_forward.1} parent=11 // pred_check_branch
        %223 = sbr.rel (%p221) target = $region16
      $region15: #{meta_learner_forward.1} parent=11 // pred_region
        _
      $region16: #{meta_learner_forward.1} parent=11 // pred_fallthru
        _
      // Predicated region
      $region17: #{meta_learner_forward.1} parent=11 // pred_check
        %p224 = pneg %p159
      $region18: #{meta_learner_forward.1} parent=11 // pred_check_branch
        %226 = sbr.rel (%p224) target = $region20
      $region19: #{meta_learner_forward.1} parent=11 // pred_region
        _
      $region20: #{meta_learner_forward.1} parent=11 // pred_fallthru
        _
      // Predicated region
      $region21: #{meta_learner_forward.1} parent=11 // pred_check
        %p227 = pneg %p180
      $region22: #{meta_learner_forward.1} parent=11 // pred_check_branch
        %229 = sbr.rel (%p227) target = $region24
      $region23: #{meta_learner_forward.1} parent=11 // pred_region
        _
      $region24: #{meta_learner_forward.1} parent=11 // pred_fallthru
        _
    $region12: #{meta_learner_forward.1} parent=5 // pred_fallthru
      _
    %p230 = scmp.lt.s32.totalorder %s13, 2
    // Predicated region
    $region25: #{meta_learner_forward.1} parent=5 // pred_check
      %p231 = pneg %p230
    $region26: #{meta_learner_forward.1} parent=5 // pred_check_branch
      %233 = sbr.rel (%p231) target = $region28
    $region27: #{meta_learner_forward.1} parent=5 // pred_region
      // Predicated region
      $region29: #{meta_learner_forward.1} parent=27 // pred_check
        %p234 = pneg %p33
      $region30: #{meta_learner_forward.1} parent=27 // pred_check_branch
        %236 = sbr.rel (%p234) target = $region32
      $region31: #{meta_learner_forward.1} parent=27 // pred_region
        %p237 = scmp.lt.s32.totalorder %s13, 1
        %s238 = scalar_select %p237, %s13, 1
        %s239 = smul.addr %s238, 8
        %s240 = smul.addr %s239, 4
        %s241 = scalar_lea.vmem %s0, %s240
      $region32: #{meta_learner_forward.1} parent=27 // pred_fallthru
        _
      // Predicated region
      $region33: #{meta_learner_forward.1} parent=27 // pred_check
        %p242 = pneg %p59
      $region34: #{meta_learner_forward.1} parent=27 // pred_check_branch
        %244 = sbr.rel (%p242) target = $region36
      $region35: #{meta_learner_forward.1} parent=27 // pred_region
        %p245 = scmp.lt.s32.totalorder %s13, 1
        %s246 = scalar_select %p245, %s13, 1
        %s247 = smul.addr %s246, 6
        %s248 = scalar_lea.vmem %s1, %s247
      $region36: #{meta_learner_forward.1} parent=27 // pred_fallthru
        _
      // Predicated region
      $region37: #{meta_learner_forward.1} parent=27 // pred_check
        %p249 = pneg %p106
      $region38: #{meta_learner_forward.1} parent=27 // pred_check_branch
        %251 = sbr.rel (%p249) target = $region40
      $region39: #{meta_learner_forward.1} parent=27 // pred_region
        %p252 = scmp.lt.s32.totalorder %s13, 1
        %s253 = scalar_select %p252, %s13, 1
        %s254 = smul.addr %s253, 8
        %s255 = smul.addr %s254, 4
        %s256 = scalar_lea.vmem %s3, %s255
      $region40: #{meta_learner_forward.1} parent=27 // pred_fallthru
        _
      // Predicated region
      $region41: #{meta_learner_forward.1} parent=27 // pred_check
        %p257 = pneg %p132
      $region42: #{meta_learner_forward.1} parent=27 // pred_check_branch
        %259 = sbr.rel (%p257) target = $region44
      $region43: #{meta_learner_forward.1} parent=27 // pred_region
        %p260 = scmp.lt.s32.totalorder %s13, 1
        %s261 = scalar_select %p260, %s13, 1
        %s262 = smul.addr %s261, 6
        %s263 = scalar_lea.vmem %s4, %s262
      $region44: #{meta_learner_forward.1} parent=27 // pred_fallthru
        _
    $region28: #{meta_learner_forward.1} parent=5 // pred_fallthru
      _
    %p264 = scmp.le.s32.totalorder 1, %s13
    %p265 = scmp.lt.s32.totalorder %s13, 3
    %p266 = pnand %p264, %p265
    %p267 = pneg %p266
    // Predicated region
    $region45: #{meta_learner_forward.1} parent=5 // pred_check
      _
    $region46: #{meta_learner_forward.1} parent=5 // pred_check_branch
      %269 = sbr.rel (%p266) target = $region48
    $region47: #{meta_learner_forward.1} parent=5 // pred_region
      %s270 = ssub.s32 %s13, 1
      %p271 = scmp.lt.s32.totalorder %s18, 1
      %s272 = scalar_select %p271, %s18, 1
      %s273 = smul.addr %s272, 8
      %s274 = smul.addr %s273, 4
      %s275 = scalar_lea.vmem %s0, %s274
      %p276 = pneg %p39
      %p277 = pneg %p36
      %p278 = scmp.lt.s32.totalorder %s18, 1
      %s279 = scalar_select %p278, %s18, 1
      %s280 = smul.addr %s279, 6
      %s281 = scalar_lea.vmem %s1, %s280
      %p282 = pneg %p65
      %p283 = pneg %p62
      %p284 = pneg %p86
      %p285 = pneg %p83
      %p286 = scmp.lt.s32.totalorder %s18, 1
      %s287 = scalar_select %p286, %s18, 1
      %s288 = smul.addr %s287, 8
      %s289 = smul.addr %s288, 4
      %s290 = scalar_lea.vmem %s3, %s289
      %p291 = pneg %p112
      %p292 = pneg %p109
      %p293 = scmp.lt.s32.totalorder %s18, 1
      %s294 = scalar_select %p293, %s18, 1
      %s295 = smul.addr %s294, 6
      %s296 = scalar_lea.vmem %s4, %s295
      %p297 = pneg %p138
      %p298 = pneg %p135
      %p299 = pneg %p159
      %p300 = pneg %p156
      %p301 = pneg %p180
      %p302 = pneg %p177
      %p303 = pneg %p206
      %p304 = pneg %p203
      %p305 = scmp.lt.s32.totalorder %s18, 1
      %s306 = scalar_select %p305, %s18, 1
      %s307 = smul.addr %s306, 8
      %s308 = scalar_lea.vmem %s7, %s307
      %p309 = scmp.lt.s32.totalorder %s18, 1
      %s310 = scalar_select %p309, %s18, 1
      %s311 = smul.addr %s310, 8
      %s312 = smul.addr %s311, 4
      %s313 = scalar_lea.vmem %s0, %s312
      %p314 = scmp.lt.s32.totalorder %s18, 1
      %s315 = scalar_select %p314, %s18, 1
      %s316 = smul.addr %s315, 6
      %s317 = scalar_lea.vmem %s1, %s316
      %p318 = scmp.lt.s32.totalorder %s18, 1
      %s319 = scalar_select %p318, %s18, 1
      %s320 = smul.addr %s319, 8
      %s321 = smul.addr %s320, 4
      %s322 = scalar_lea.vmem %s3, %s321
      %p323 = scmp.lt.s32.totalorder %s18, 1
      %s324 = scalar_select %p323, %s18, 1
      %s325 = smul.addr %s324, 6
      %s326 = scalar_lea.vmem %s4, %s325
      %p327 = scmp.lt.s32.totalorder %s18, 1
      %s328 = scalar_select %p327, %s18, 1
      %s329 = smul.addr %s328, 8
      %s330 = scalar_lea.vmem %s7, %s329
      %v331 = vld [vmem:[%s313] sm:$0x77]
      %v332 = vld [vmem:[%s313 + $0x8] sm:$0x77]
      %v333 = vld [vmem:[%s313 + $0x10] sm:$0x77]
      %v334 = vld [vmem:[%s313 + $0x18] sm:$0x77]
      %v335 = vld [vmem:[%s317] sm:$0x3f]
      %v336 = vld [vmem:[%s2] sm:$0x3f]
      %v337 = vld [vmem:[%s6] sm:$0xff]
      %v338 = vld [vmem:[%s6 + $0x8] sm:$0xff]
      %v339 = vld [vmem:[%s6 + $0x10] sm:$0xff]
      %v340 = vld [vmem:[%s6 + $0x18] sm:$0xff]
      %v345 = vcombine.high %v331, %v331
      %v346 = vcombine.high %v332, %v332
      %v347 = vcombine.high %v333, %v333
      %348 = vrot.lane.b32.xlu0 %v331, 19
      %v349 = vpop.permute.xlu0 %348
      %350 = vrot.lane.b32.xlu0 %v345, 19
      %v351 = vpop.permute.xlu0 %350
      %352 = vrot.lane.b32.xlu0 %v332, 19
      %v353 = vpop.permute.xlu0 %352
      %354 = vrot.lane.b32.xlu0 %v346, 19
      %v355 = vpop.permute.xlu0 %354
      %356 = vrot.lane.b32.xlu0 %v333, 19
      %v357 = vpop.permute.xlu0 %356
      %358 = vrot.lane.b32.xlu0 %v347, 19
      %v359 = vpop.permute.xlu0 %358
      %360 = vrot.lane.b32.xlu0 %v334, 19
      %v361 = vpop.permute.xlu0 %360
      %vm362 = vcmask 154624
      %v363 = vsel %vm362, %v349, %v351
      %v364 = vsel %vm362, %v351, %v353
      %v365 = vsel %vm362, %v353, %v355
      %v366 = vsel %vm362, %v355, %v357
      %v367 = vsel %vm362, %v357, %v359
      %v368 = vsel %vm362, %v359, %v361
      %375 = vst [vmem:[#allocation2] sm:$0x7] %v363
      %376 = vst [vmem:[#allocation2 + $0x8] sm:$0x7] %v364
      %377 = vst [vmem:[#allocation2 + $0x10] sm:$0x7] %v365
      %378 = vst [vmem:[#allocation2 + $0x18] sm:$0x7] %v366
      %379 = vst [vmem:[#allocation2 + $0x20] sm:$0x7] %v367
      %380 = vst [vmem:[#allocation2 + $0x28] sm:$0x7] %v368
      %v381 = vrot.slane %v331, 5
      %v382 = vrot.slane %v345, 5
      %v383 = vrot.slane %v332, 5
      %v384 = vrot.slane %v346, 5
      %v385 = vrot.slane %v333, 5
      %v386 = vrot.slane %v347, 5
      %v387 = vrot.slane %v334, 5
      %388 = vrot.lane.b32.xlu0 %v381, 18
      %v389 = vpop.permute.xlu0 %388
      %390 = vrot.lane.b32.xlu0 %v382, 18
      %v391 = vpop.permute.xlu0 %390
      %392 = vrot.lane.b32.xlu0 %v383, 18
      %v393 = vpop.permute.xlu0 %392
      %394 = vrot.lane.b32.xlu0 %v384, 18
      %v395 = vpop.permute.xlu0 %394
      %396 = vrot.lane.b32.xlu0 %v385, 18
      %v397 = vpop.permute.xlu0 %396
      %398 = vrot.lane.b32.xlu0 %v386, 18
      %v399 = vpop.permute.xlu0 %398
      %400 = vrot.lane.b32.xlu0 %v387, 18
      %v401 = vpop.permute.xlu0 %400
      %vm402 = vcmask 146432
      %v403 = vsel %vm402, %v389, %v391
      %v404 = vsel %vm402, %v391, %v393
      %v405 = vsel %vm402, %v393, %v395
      %v406 = vsel %vm402, %v395, %v397
      %v407 = vsel %vm402, %v397, %v399
      %v408 = vsel %vm402, %v399, %v401
      %415 = vst [vmem:[#allocation2] sm:$0x38] %v403
      %416 = vst [vmem:[#allocation2 + $0x8] sm:$0x38] %v404
      %417 = vst [vmem:[#allocation2 + $0x10] sm:$0x38] %v405
      %418 = vst [vmem:[#allocation2 + $0x18] sm:$0x38] %v406
      %419 = vst [vmem:[#allocation2 + $0x20] sm:$0x38] %v407
      %420 = vst [vmem:[#allocation2 + $0x28] sm:$0x38] %v408
      %v421 = vrot.slane %v331, 2
      %v422 = vrot.slane %v345, 2
      %v423 = vrot.slane %v332, 2
      %v424 = vrot.slane %v346, 2
      %v425 = vrot.slane %v333, 2
      %v426 = vrot.slane %v347, 2
      %v427 = vrot.slane %v334, 2
      %428 = vrot.lane.b32.xlu0 %v421, 17
      %v429 = vpop.permute.xlu0 %428
      %430 = vrot.lane.b32.xlu0 %v422, 17
      %v431 = vpop.permute.xlu0 %430
      %432 = vrot.lane.b32.xlu0 %v423, 17
      %v433 = vpop.permute.xlu0 %432
      %434 = vrot.lane.b32.xlu0 %v424, 17
      %v435 = vpop.permute.xlu0 %434
      %436 = vrot.lane.b32.xlu0 %v425, 17
      %v437 = vpop.permute.xlu0 %436
      %438 = vrot.lane.b32.xlu0 %v426, 17
      %v439 = vpop.permute.xlu0 %438
      %440 = vrot.lane.b32.xlu0 %v427, 17
      %v441 = vpop.permute.xlu0 %440
      %vm442 = vcmask 138240
      %v443 = vsel %vm442, %v429, %v431
      %v444 = vsel %vm442, %v431, %v433
      %v445 = vsel %vm442, %v433, %v435
      %v446 = vsel %vm442, %v435, %v437
      %v447 = vsel %vm442, %v437, %v439
      %v448 = vsel %vm442, %v439, %v441
      %455 = vst [vmem:[#allocation2] sm:$0xc0] %v443
      %456 = vst [vmem:[#allocation2 + $0x8] sm:$0xc0] %v444
      %457 = vst [vmem:[#allocation2 + $0x10] sm:$0xc0] %v445
      %458 = vst [vmem:[#allocation2 + $0x18] sm:$0xc0] %v446
      %459 = vst [vmem:[#allocation2 + $0x20] sm:$0xc0] %v447
      %460 = vst [vmem:[#allocation2 + $0x28] sm:$0xc0] %v448
      %461 = vst [vmem:[#allocation2 + $0x30] sm:$0x1] %v443
      %462 = vst [vmem:[#allocation2 + $0x38] sm:$0x1] %v444
      %463 = vst [vmem:[#allocation2 + $0x40] sm:$0x1] %v445
      %464 = vst [vmem:[#allocation2 + $0x48] sm:$0x1] %v446
      %465 = vst [vmem:[#allocation2 + $0x50] sm:$0x1] %v447
      %466 = vst [vmem:[#allocation2 + $0x58] sm:$0x1] %v448
      %v467 = vrot.slane %v331, 7
      %v468 = vrot.slane %v345, 7
      %v469 = vrot.slane %v332, 7
      %v470 = vrot.slane %v346, 7
      %v471 = vrot.slane %v333, 7
      %v472 = vrot.slane %v347, 7
      %v473 = vrot.slane %v334, 7
      %474 = vrot.lane.b32.xlu0 %v467, 1
      %v475 = vpop.permute.xlu0 %474
      %476 = vrot.lane.b32.xlu0 %v468, 1
      %v477 = vpop.permute.xlu0 %476
      %478 = vrot.lane.b32.xlu0 %v469, 1
      %v479 = vpop.permute.xlu0 %478
      %480 = vrot.lane.b32.xlu0 %v470, 1
      %v481 = vpop.permute.xlu0 %480
      %482 = vrot.lane.b32.xlu0 %v471, 1
      %v483 = vpop.permute.xlu0 %482
      %484 = vrot.lane.b32.xlu0 %v472, 1
      %v485 = vpop.permute.xlu0 %484
      %486 = vrot.lane.b32.xlu0 %v473, 1
      %v487 = vpop.permute.xlu0 %486
      %vm488 = vcmask 7168
      %v489 = vsel %vm488, %v475, %v477
      %v490 = vsel %vm488, %v477, %v479
      %v491 = vsel %vm488, %v479, %v481
      %v492 = vsel %vm488, %v481, %v483
      %v493 = vsel %vm488, %v483, %v485
      %v494 = vsel %vm488, %v485, %v487
      %501 = vst [vmem:[#allocation2 + $0x30] sm:$0xe] %v489
      %502 = vst [vmem:[#allocation2 + $0x38] sm:$0xe] %v490
      %503 = vst [vmem:[#allocation2 + $0x40] sm:$0xe] %v491
      %504 = vst [vmem:[#allocation2 + $0x48] sm:$0xe] %v492
      %505 = vst [vmem:[#allocation2 + $0x50] sm:$0xe] %v493
      %506 = vst [vmem:[#allocation2 + $0x58] sm:$0xe] %v494
      %v507 = vcombine.low %v332, %v332
      %v508 = vcombine.low %v333, %v333
      %v509 = vcombine.low %v334, %v334
      %513 = vst [vmem:[#allocation2 + $0x30] sm:$0x70] %v331
      %514 = vst [vmem:[#allocation2 + $0x38] sm:$0x70] %v507
      %515 = vst [vmem:[#allocation2 + $0x40] sm:$0x70] %v332
      %516 = vst [vmem:[#allocation2 + $0x48] sm:$0x70] %v508
      %517 = vst [vmem:[#allocation2 + $0x50] sm:$0x70] %v333
      %518 = vst [vmem:[#allocation2 + $0x58] sm:$0x70] %v509
      %v519 = vcombine.high %v334, %v334
      %v520 = vrot.slane %v345, 1
      %v521 = vrot.slane %v332, 1
      %v522 = vrot.slane %v346, 1
      %v523 = vrot.slane %v333, 1
      %v524 = vrot.slane %v347, 1
      %v525 = vrot.slane %v334, 1
      %v526 = vrot.slane %v519, 1
      %527 = vrot.lane.b32.xlu0 %v520, 127
      %v528 = vpop.permute.xlu0 %527
      %529 = vrot.lane.b32.xlu0 %v521, 127
      %v530 = vpop.permute.xlu0 %529
      %531 = vrot.lane.b32.xlu0 %v522, 127
      %v532 = vpop.permute.xlu0 %531
      %533 = vrot.lane.b32.xlu0 %v523, 127
      %v534 = vpop.permute.xlu0 %533
      %535 = vrot.lane.b32.xlu0 %v524, 127
      %v536 = vpop.permute.xlu0 %535
      %537 = vrot.lane.b32.xlu0 %v525, 127
      %v538 = vpop.permute.xlu0 %537
      %539 = vrot.lane.b32.xlu0 %v526, 127
      %v540 = vpop.permute.xlu0 %539
      %vm541 = vcmask 1039360
      %v542 = vsel %vm541, %v528, %v530
      %v543 = vsel %vm541, %v530, %v532
      %v544 = vsel %vm541, %v532, %v534
      %v545 = vsel %vm541, %v534, %v536
      %v546 = vsel %vm541, %v536, %v538
      %v547 = vsel %vm541, %v538, %v540
      %554 = vst [vmem:[#allocation2 + $0x30] sm:$0x80] %v542
      %555 = vst [vmem:[#allocation2 + $0x38] sm:$0x80] %v543
      %556 = vst [vmem:[#allocation2 + $0x40] sm:$0x80] %v544
      %557 = vst [vmem:[#allocation2 + $0x48] sm:$0x80] %v545
      %558 = vst [vmem:[#allocation2 + $0x50] sm:$0x80] %v546
      %559 = vst [vmem:[#allocation2 + $0x58] sm:$0x80] %v547
      %560 = vst [vmem:[#allocation2 + $0x60] sm:$0x3] %v542
      %561 = vst [vmem:[#allocation2 + $0x68] sm:$0x3] %v543
      %562 = vst [vmem:[#allocation2 + $0x70] sm:$0x3] %v544
      %563 = vst [vmem:[#allocation2 + $0x78] sm:$0x3] %v545
      %564 = vst [vmem:[#allocation2 + $0x80] sm:$0x3] %v546
      %565 = vst [vmem:[#allocation2 + $0x88] sm:$0x3] %v547
      %v566 = vrot.slane %v345, 6
      %v567 = vrot.slane %v332, 6
      %v568 = vrot.slane %v346, 6
      %v569 = vrot.slane %v333, 6
      %v570 = vrot.slane %v347, 6
      %v571 = vrot.slane %v334, 6
      %v572 = vrot.slane %v519, 6
      %573 = vrot.lane.b32.xlu0 %v566, 111
      %v574 = vpop.permute.xlu0 %573
      %575 = vrot.lane.b32.xlu0 %v567, 111
      %v576 = vpop.permute.xlu0 %575
      %577 = vrot.lane.b32.xlu0 %v568, 111
      %v578 = vpop.permute.xlu0 %577
      %579 = vrot.lane.b32.xlu0 %v569, 111
      %v580 = vpop.permute.xlu0 %579
      %581 = vrot.lane.b32.xlu0 %v570, 111
      %v582 = vpop.permute.xlu0 %581
      %583 = vrot.lane.b32.xlu0 %v571, 111
      %v584 = vpop.permute.xlu0 %583
      %585 = vrot.lane.b32.xlu0 %v572, 111
      %v586 = vpop.permute.xlu0 %585
      %vm587 = vcmask 908288
      %v588 = vsel %vm587, %v574, %v576
      %v589 = vsel %vm587, %v576, %v578
      %v590 = vsel %vm587, %v578, %v580
      %v591 = vsel %vm587, %v580, %v582
      %v592 = vsel %vm587, %v582, %v584
      %v593 = vsel %vm587, %v584, %v586
      %600 = vst [vmem:[#allocation2 + $0x60] sm:$0x1c] %v588
      %601 = vst [vmem:[#allocation2 + $0x68] sm:$0x1c] %v589
      %602 = vst [vmem:[#allocation2 + $0x70] sm:$0x1c] %v590
      %603 = vst [vmem:[#allocation2 + $0x78] sm:$0x1c] %v591
      %604 = vst [vmem:[#allocation2 + $0x80] sm:$0x1c] %v592
      %605 = vst [vmem:[#allocation2 + $0x88] sm:$0x1c] %v593
      %v606 = vrot.slane %v345, 3
      %v607 = vrot.slane %v332, 3
      %v608 = vrot.slane %v346, 3
      %v609 = vrot.slane %v333, 3
      %v610 = vrot.slane %v347, 3
      %v611 = vrot.slane %v334, 3
      %v612 = vrot.slane %v519, 3
      %613 = vrot.lane.b32.xlu0 %v606, 110
      %v614 = vpop.permute.xlu0 %613
      %615 = vrot.lane.b32.xlu0 %v607, 110
      %v616 = vpop.permute.xlu0 %615
      %617 = vrot.lane.b32.xlu0 %v608, 110
      %v618 = vpop.permute.xlu0 %617
      %619 = vrot.lane.b32.xlu0 %v609, 110
      %v620 = vpop.permute.xlu0 %619
      %621 = vrot.lane.b32.xlu0 %v610, 110
      %v622 = vpop.permute.xlu0 %621
      %623 = vrot.lane.b32.xlu0 %v611, 110
      %v624 = vpop.permute.xlu0 %623
      %625 = vrot.lane.b32.xlu0 %v612, 110
      %v626 = vpop.permute.xlu0 %625
      %vm627 = vcmask 900096
      %v628 = vsel %vm627, %v614, %v616
      %v629 = vsel %vm627, %v616, %v618
      %v630 = vsel %vm627, %v618, %v620
      %v631 = vsel %vm627, %v620, %v622
      %v632 = vsel %vm627, %v622, %v624
      %v633 = vsel %vm627, %v624, %v626
      %640 = vst [vmem:[#allocation2 + $0x60] sm:$0xe0] %v628
      %641 = vst [vmem:[#allocation2 + $0x68] sm:$0xe0] %v629
      %642 = vst [vmem:[#allocation2 + $0x70] sm:$0xe0] %v630
      %643 = vst [vmem:[#allocation2 + $0x78] sm:$0xe0] %v631
      %644 = vst [vmem:[#allocation2 + $0x80] sm:$0xe0] %v632
      %645 = vst [vmem:[#allocation2 + $0x88] sm:$0xe0] %v633
      %646 = vrot.lane.b32.xlu0 %v345, 109
      %v647 = vpop.permute.xlu0 %646
      %648 = vrot.lane.b32.xlu0 %v332, 109
      %v649 = vpop.permute.xlu0 %648
      %650 = vrot.lane.b32.xlu0 %v346, 109
      %v651 = vpop.permute.xlu0 %650
      %652 = vrot.lane.b32.xlu0 %v333, 109
      %v653 = vpop.permute.xlu0 %652
      %654 = vrot.lane.b32.xlu0 %v347, 109
      %v655 = vpop.permute.xlu0 %654
      %656 = vrot.lane.b32.xlu0 %v334, 109
      %v657 = vpop.permute.xlu0 %656
      %658 = vrot.lane.b32.xlu0 %v519, 109
      %v659 = vpop.permute.xlu0 %658
      %vm660 = vcmask 891904
      %v661 = vsel %vm660, %v647, %v649
      %v662 = vsel %vm660, %v649, %v651
      %v663 = vsel %vm660, %v651, %v653
      %v664 = vsel %vm660, %v653, %v655
      %v665 = vsel %vm660, %v655, %v657
      %v666 = vsel %vm660, %v657, %v659
      %673 = vst [vmem:[#allocation2 + $0x90] sm:$0x7] %v661
      %674 = vst [vmem:[#allocation2 + $0x98] sm:$0x7] %v662
      %675 = vst [vmem:[#allocation2 + $0xa0] sm:$0x7] %v663
      %676 = vst [vmem:[#allocation2 + $0xa8] sm:$0x7] %v664
      %677 = vst [vmem:[#allocation2 + $0xb0] sm:$0x7] %v665
      %678 = vst [vmem:[#allocation2 + $0xb8] sm:$0x7] %v666
      %v679 = vlaneseq
      %vm680 = vcmp.ge.s32.totalorder %v679, 0
      %vm681 = vcmp.lt.s32.totalorder %v679, 768
      %vm682 = vmand %vm680, %vm681
      %s683 = scalar_lea.vmem [#allocation2], 147
      %684 = vst.msk [vmem:[%s683] ss:$8 sm:$0xf] %vm682, 1.0
      %685 = vst.msk [vmem:[%s683] ss:$8 sm:$0x30] %vm682, 1.0
      %686 = vst [vmem:[#allocation2 + $0x90] sm:$0xf0] 0.0
      %687 = vst [vmem:[#allocation2 + $0x98] sm:$0xf0] 0.0
      %688 = vst [vmem:[#allocation2 + $0xa0] sm:$0xf0] 0.0
      %689 = vst [vmem:[#allocation2 + $0xa8] sm:$0xf0] 0.0
      %690 = vst [vmem:[#allocation2 + $0xb0] sm:$0xf0] 0.0
      %691 = vst [vmem:[#allocation2 + $0xb8] sm:$0xf0] 0.0
      %v692 = vld [vmem:[#allocation2] sm:$0xff]
      %v693 = vld [vmem:[#allocation2 + $0x8] sm:$0xff]
      %v694 = vld [vmem:[#allocation2 + $0x10] sm:$0xff]
      %v695 = vld [vmem:[#allocation2 + $0x18] sm:$0xff]
      %v696 = vld [vmem:[#allocation2 + $0x20] sm:$0xff]
      %v697 = vld [vmem:[#allocation2 + $0x28] sm:$0xff]
      %v698 = vld [vmem:[#allocation2 + $0x30] sm:$0xff]
      %v699 = vld [vmem:[#allocation2 + $0x38] sm:$0xff]
      %v700 = vld [vmem:[#allocation2 + $0x40] sm:$0xff]
      %v701 = vld [vmem:[#allocation2 + $0x48] sm:$0xff]
      %v702 = vld [vmem:[#allocation2 + $0x50] sm:$0xff]
      %v703 = vld [vmem:[#allocation2 + $0x58] sm:$0xff]
      %v704 = vld [vmem:[#allocation2 + $0x60] sm:$0xff]
      %v705 = vld [vmem:[#allocation2 + $0x68] sm:$0xff]
      %v706 = vld [vmem:[#allocation2 + $0x70] sm:$0xff]
      %v707 = vld [vmem:[#allocation2 + $0x78] sm:$0xff]
      %v708 = vld [vmem:[#allocation2 + $0x80] sm:$0xff]
      %v709 = vld [vmem:[#allocation2 + $0x88] sm:$0xff]
      %v710 = vld [vmem:[#allocation2 + $0x90] sm:$0xff]
      %v711 = vld [vmem:[#allocation2 + $0x98] sm:$0xff]
      %v712 = vld [vmem:[#allocation2 + $0xa0] sm:$0xff]
      %v713 = vld [vmem:[#allocation2 + $0xa8] sm:$0xff]
      %v714 = vld [vmem:[#allocation2 + $0xb0] sm:$0xff]
      %v715 = vld [vmem:[#allocation2 + $0xb8] sm:$0xff]
      %717 = vset.pattern.permute.xlu0 0
      %718 = vperm.xlu0 %717, %v337
      %v719 = vpop.permute.xlu0 %718
      %722 = vset.pattern.permute.xlu0 0
      %723 = vperm.xlu0 %722, %v338
      %v724 = vpop.permute.xlu0 %723
      %727 = vset.pattern.permute.xlu0 0
      %728 = vperm.xlu0 %727, %v339
      %v729 = vpop.permute.xlu0 %728
      %732 = vset.pattern.permute.xlu0 0
      %733 = vperm.xlu0 %732, %v340
      %v734 = vpop.permute.xlu0 %733
      %v736 = vmul.f32 %v692, %v719
      %v737 = vmul.f32 %v693, %v719
      %v738 = vmul.f32 %v694, %v719
      %v739 = vmul.f32 %v695, %v719
      %v740 = vmul.f32 %v696, %v719
      %v741 = vmul.f32 %v697, %v719
      %v742 = vmul.f32 %v698, %v724
      %v743 = vmul.f32 %v699, %v724
      %v744 = vmul.f32 %v700, %v724
      %v745 = vmul.f32 %v701, %v724
      %v746 = vmul.f32 %v702, %v724
      %v747 = vmul.f32 %v703, %v724
      %v748 = vmul.f32 %v704, %v729
      %v749 = vmul.f32 %v705, %v729
      %v750 = vmul.f32 %v706, %v729
      %v751 = vmul.f32 %v707, %v729
      %v752 = vmul.f32 %v708, %v729
      %v753 = vmul.f32 %v709, %v729
      %v754 = vmul.f32 %v710, %v734
      %v755 = vmul.f32 %v711, %v734
      %v756 = vmul.f32 %v712, %v734
      %v757 = vmul.f32 %v713, %v734
      %v758 = vmul.f32 %v714, %v734
      %v759 = vmul.f32 %v715, %v734
      %v760 = vadd.f32 %v736, %v742
      %v761 = vadd.f32 %v760, %v748
      %v762 = vadd.f32 %v761, %v754
      %v763 = vrot.slane %v762, 4
      %v764 = vadd.f32 %v762, %v763
      %v765 = vrot.slane %v764, 2
      %v766 = vadd.f32 %v764, %v765
      %v767 = vrot.slane %v766, 1
      %v768 = vadd.f32 %v766, %v767
      %v769 = vadd.f32 %v737, %v743
      %v770 = vadd.f32 %v769, %v749
      %v771 = vadd.f32 %v770, %v755
      %v772 = vrot.slane %v771, 4
      %v773 = vadd.f32 %v771, %v772
      %v774 = vrot.slane %v773, 2
      %v775 = vadd.f32 %v773, %v774
      %v776 = vrot.slane %v775, 1
      %v777 = vadd.f32 %v775, %v776
      %v778 = vadd.f32 %v738, %v744
      %v779 = vadd.f32 %v778, %v750
      %v780 = vadd.f32 %v779, %v756
      %v781 = vrot.slane %v780, 4
      %v782 = vadd.f32 %v780, %v781
      %v783 = vrot.slane %v782, 2
      %v784 = vadd.f32 %v782, %v783
      %v785 = vrot.slane %v784, 1
      %v786 = vadd.f32 %v784, %v785
      %v787 = vadd.f32 %v739, %v745
      %v788 = vadd.f32 %v787, %v751
      %v789 = vadd.f32 %v788, %v757
      %v790 = vrot.slane %v789, 4
      %v791 = vadd.f32 %v789, %v790
      %v792 = vrot.slane %v791, 2
      %v793 = vadd.f32 %v791, %v792
      %v794 = vrot.slane %v793, 1
      %v795 = vadd.f32 %v793, %v794
      %v796 = vadd.f32 %v740, %v746
      %v797 = vadd.f32 %v796, %v752
      %v798 = vadd.f32 %v797, %v758
      %v799 = vrot.slane %v798, 4
      %v800 = vadd.f32 %v798, %v799
      %v801 = vrot.slane %v800, 2
      %v802 = vadd.f32 %v800, %v801
      %v803 = vrot.slane %v802, 1
      %v804 = vadd.f32 %v802, %v803
      %v805 = vadd.f32 %v741, %v747
      %v806 = vadd.f32 %v805, %v753
      %v807 = vadd.f32 %v806, %v759
      %v808 = vrot.slane %v807, 4
      %v809 = vadd.f32 %v807, %v808
      %v810 = vrot.slane %v809, 2
      %v811 = vadd.f32 %v809, %v810
      %v812 = vrot.slane %v811, 1
      %v813 = vadd.f32 %v811, %v812
      %v814 = vsub.f32 0.0, %v768
      %v815 = vsub.f32 0.0, %v777
      %v816 = vsub.f32 0.0, %v786
      %v817 = vsub.f32 0.0, %v795
      %v818 = vsub.f32 0.0, %v804
      %v819 = vsub.f32 0.0, %v813
      %v820 = vmul.f32 %v814, 1.442695
      %v821 = vpow.pop %v820
      %v822 = vmul.f32 %v815, 1.442695
      %v823 = vpow.pop %v822
      %v824 = vmul.f32 %v816, 1.442695
      %v825 = vpow.pop %v824
      %v826 = vmul.f32 %v817, 1.442695
      %v827 = vpow.pop %v826
      %v828 = vmul.f32 %v818, 1.442695
      %v829 = vpow.pop %v828
      %v830 = vmul.f32 %v819, 1.442695
      %v831 = vpow.pop %v830
      %v832 = vadd.f32 %v821, 1.0
      %v833 = vadd.f32 %v823, 1.0
      %v834 = vadd.f32 %v825, 1.0
      %v835 = vadd.f32 %v827, 1.0
      %v836 = vadd.f32 %v829, 1.0
      %v837 = vadd.f32 %v831, 1.0
      %v838 = vrcp.pop %v832
      %v839 = vrcp.pop %v833
      %v840 = vrcp.pop %v834
      %v841 = vrcp.pop %v835
      %v842 = vrcp.pop %v836
      %v843 = vrcp.pop %v837
      %v845 = vlaneseq
      %v846 = vshrl.u32 %v845, 7
      %v847 = vsub.s32 0, %v846
      %v848 = vrot.slane %v335, %v847
      %v849 = vlaneseq
      %v850 = vshrl.u32 %v849, 7
      %v851 = vsub.s32 1, %v850
      %v852 = vrot.slane %v335, %v851
      %v853 = vlaneseq
      %v854 = vshrl.u32 %v853, 7
      %v855 = vsub.s32 2, %v854
      %v856 = vrot.slane %v335, %v855
      %v857 = vlaneseq
      %v858 = vshrl.u32 %v857, 7
      %v859 = vsub.s32 3, %v858
      %v860 = vrot.slane %v335, %v859
      %v861 = vlaneseq
      %v862 = vshrl.u32 %v861, 7
      %v863 = vsub.s32 4, %v862
      %v864 = vrot.slane %v335, %v863
      %v865 = vlaneseq
      %v866 = vshrl.u32 %v865, 7
      %v867 = vsub.s32 5, %v866
      %v868 = vrot.slane %v335, %v867
      %v875 = vsub.f32 %v838, %v848
      %v876 = vsub.f32 %v839, %v852
      %v877 = vsub.f32 %v840, %v856
      %v878 = vsub.f32 %v841, %v860
      %v879 = vsub.f32 %v842, %v864
      %v880 = vsub.f32 %v843, %v868
      %v887 = vcombine.low %v875, %v876
      %v888 = vcombine.low %v877, %v878
      %v889 = vcombine.low %v879, %v880
      %v891 = vunpack.c.l.s4 1966171168
      %v892 = vunpack.c.0.s8 %v891
      %v893 = vlaneseq
      %v894 = vshrl.u32 %v893, 7
      %v895 = vsub.s32 %v892, %v894
      %v896 = vrot.slane %v887, %v895
      %v898 = vunpack.c.l.s4 1966171168
      %v899 = vunpack.c.0.s8 %v898
      %v900 = vlaneseq
      %v901 = vshrl.u32 %v900, 7
      %v902 = vsub.s32 %v899, %v901
      %v903 = vrot.slane %v888, %v902
      %v905 = vunpack.c.l.s4 1966171168
      %v906 = vunpack.c.0.s8 %v905
      %v907 = vlaneseq
      %v908 = vshrl.u32 %v907, 7
      %v909 = vsub.s32 %v906, %v908
      %v910 = vrot.slane %v889, %v909
      %v911 = vcombine.low %v896, %v903
      %v913 = vunpack.c.l.s4 1966171168
      %v914 = vunpack.c.0.s8 %v913
      %v915 = vlaneseq
      %v916 = vshrl.u32 %v915, 7
      %v917 = vsub.s32 %v914, %v916
      %v918 = vrot.slane %v911, %v917
      %v920 = vunpack.c.l.s4 1966171168
      %v921 = vunpack.c.0.s8 %v920
      %v922 = vlaneseq
      %v923 = vshrl.u32 %v922, 7
      %v924 = vsub.s32 %v921, %v923
      %v925 = vrot.slane %v910, %v924
      %v926 = vcombine.low %v918, %v925
      %v928 = vmul.f32 %v336, %v926
      %v929 = vmul.f32 %v928, 0.001953125
      %v931 = vlaneseq
      %v932 = vshrl.u32 %v931, 7
      %v933 = vsub.s32 0, %v932
      %v934 = vrot.slane %v929, %v933
      %v935 = vlaneseq
      %v936 = vshrl.u32 %v935, 7
      %v937 = vsub.s32 1, %v936
      %v938 = vrot.slane %v929, %v937
      %v939 = vlaneseq
      %v940 = vshrl.u32 %v939, 7
      %v941 = vsub.s32 2, %v940
      %v942 = vrot.slane %v929, %v941
      %v943 = vlaneseq
      %v944 = vshrl.u32 %v943, 7
      %v945 = vsub.s32 3, %v944
      %v946 = vrot.slane %v929, %v945
      %v947 = vlaneseq
      %v948 = vshrl.u32 %v947, 7
      %v949 = vsub.s32 4, %v948
      %v950 = vrot.slane %v929, %v949
      %v951 = vlaneseq
      %v952 = vshrl.u32 %v951, 7
      %v953 = vsub.s32 5, %v952
      %v954 = vrot.slane %v929, %v953
      %v961 = vmul.f32 %v692, %v934
      %v962 = vmul.f32 %v693, %v938
      %v963 = vmul.f32 %v694, %v942
      %v964 = vmul.f32 %v695, %v946
      %v965 = vmul.f32 %v696, %v950
      %v966 = vmul.f32 %v697, %v954
      %v967 = vmul.f32 %v698, %v934
      %v968 = vmul.f32 %v699, %v938
      %v969 = vmul.f32 %v700, %v942
      %v970 = vmul.f32 %v701, %v946
      %v971 = vmul.f32 %v702, %v950
      %v972 = vmul.f32 %v703, %v954
      %v973 = vmul.f32 %v704, %v934
      %v974 = vmul.f32 %v705, %v938
      %v975 = vmul.f32 %v706, %v942
      %v976 = vmul.f32 %v707, %v946
      %v977 = vmul.f32 %v708, %v950
      %v978 = vmul.f32 %v709, %v954
      %v979 = vmul.f32 %v710, %v934
      %v980 = vmul.f32 %v711, %v938
      %v981 = vmul.f32 %v712, %v942
      %v982 = vmul.f32 %v713, %v946
      %v983 = vmul.f32 %v714, %v950
      %v984 = vmul.f32 %v715, %v954
      %v985 = vadd.f32 %v961, %v962
      %v986 = vadd.f32 %v985, %v963
      %v987 = vadd.f32 %v986, %v964
      %v988 = vadd.f32 %v987, %v965
      %v989 = vadd.f32 %v988, %v966
      %990 = vadd.xlane.f32.xlu0 %v989
      %v991 = vpop.xlane.xlu0 %990
      %v992 = vadd.f32 %v967, %v968
      %v993 = vadd.f32 %v992, %v969
      %v994 = vadd.f32 %v993, %v970
      %v995 = vadd.f32 %v994, %v971
      %v996 = vadd.f32 %v995, %v972
      %997 = vadd.xlane.f32.xlu0 %v996
      %v998 = vpop.xlane.xlu0 %997
      %v999 = vadd.f32 %v973, %v974
      %v1000 = vadd.f32 %v999, %v975
      %v1001 = vadd.f32 %v1000, %v976
      %v1002 = vadd.f32 %v1001, %v977
      %v1003 = vadd.f32 %v1002, %v978
      %1004 = vadd.xlane.f32.xlu0 %v1003
      %v1005 = vpop.xlane.xlu0 %1004
      %v1006 = vadd.f32 %v979, %v980
      %v1007 = vadd.f32 %v1006, %v981
      %v1008 = vadd.f32 %v1007, %v982
      %v1009 = vadd.f32 %v1008, %v983
      %v1010 = vadd.f32 %v1009, %v984
      %1011 = vadd.xlane.f32.xlu0 %v1010
      %v1012 = vpop.xlane.xlu0 %1011
      %v1013 = vmul.f32 %v991, 0.01
      %v1014 = vmul.f32 %v998, 0.01
      %v1015 = vmul.f32 %v1005, 0.01
      %v1016 = vmul.f32 %v1012, 0.01
      %v1017 = vsub.f32 %v337, %v1013
      %v1018 = vsub.f32 %v338, %v1014
      %v1019 = vsub.f32 %v339, %v1015
      %v1020 = vsub.f32 %v340, %v1016
      %1022 = vset.pattern.permute.xlu0 0
      %1023 = vperm.xlu0 %1022, %v1017
      %v1024 = vpop.permute.xlu0 %1023
      %1027 = vset.pattern.permute.xlu0 0
      %1028 = vperm.xlu0 %1027, %v1018
      %v1029 = vpop.permute.xlu0 %1028
      %1032 = vset.pattern.permute.xlu0 0
      %1033 = vperm.xlu0 %1032, %v1019
      %v1034 = vpop.permute.xlu0 %1033
      %1037 = vset.pattern.permute.xlu0 0
      %1038 = vperm.xlu0 %1037, %v1020
      %v1039 = vpop.permute.xlu0 %1038
      %v1041 = vmul.f32 %v692, %v1024
      %v1042 = vmul.f32 %v693, %v1024
      %v1043 = vmul.f32 %v694, %v1024
      %v1044 = vmul.f32 %v695, %v1024
      %v1045 = vmul.f32 %v696, %v1024
      %v1046 = vmul.f32 %v697, %v1024
      %v1047 = vmul.f32 %v698, %v1029
      %v1048 = vmul.f32 %v699, %v1029
      %v1049 = vmul.f32 %v700, %v1029
      %v1050 = vmul.f32 %v701, %v1029
      %v1051 = vmul.f32 %v702, %v1029
      %v1052 = vmul.f32 %v703, %v1029
      %v1053 = vmul.f32 %v704, %v1034
      %v1054 = vmul.f32 %v705, %v1034
      %v1055 = vmul.f32 %v706, %v1034
      %v1056 = vmul.f32 %v707, %v1034
      %v1057 = vmul.f32 %v708, %v1034
      %v1058 = vmul.f32 %v709, %v1034
      %v1059 = vmul.f32 %v710, %v1039
      %v1060 = vmul.f32 %v711, %v1039
      %v1061 = vmul.f32 %v712, %v1039
      %v1062 = vmul.f32 %v713, %v1039
      %v1063 = vmul.f32 %v714, %v1039
      %v1064 = vmul.f32 %v715, %v1039
      %v1065 = vadd.f32 %v1041, %v1047
      %v1066 = vadd.f32 %v1065, %v1053
      %v1067 = vadd.f32 %v1066, %v1059
      %v1068 = vrot.slane %v1067, 4
      %v1069 = vadd.f32 %v1067, %v1068
      %v1070 = vrot.slane %v1069, 2
      %v1071 = vadd.f32 %v1069, %v1070
      %v1072 = vrot.slane %v1071, 1
      %v1073 = vadd.f32 %v1071, %v1072
      %v1074 = vadd.f32 %v1042, %v1048
      %v1075 = vadd.f32 %v1074, %v1054
      %v1076 = vadd.f32 %v1075, %v1060
      %v1077 = vrot.slane %v1076, 4
      %v1078 = vadd.f32 %v1076, %v1077
      %v1079 = vrot.slane %v1078, 2
      %v1080 = vadd.f32 %v1078, %v1079
      %v1081 = vrot.slane %v1080, 1
      %v1082 = vadd.f32 %v1080, %v1081
      %v1083 = vadd.f32 %v1043, %v1049
      %v1084 = vadd.f32 %v1083, %v1055
      %v1085 = vadd.f32 %v1084, %v1061
      %v1086 = vrot.slane %v1085, 4
      %v1087 = vadd.f32 %v1085, %v1086
      %v1088 = vrot.slane %v1087, 2
      %v1089 = vadd.f32 %v1087, %v1088
      %v1090 = vrot.slane %v1089, 1
      %v1091 = vadd.f32 %v1089, %v1090
      %v1092 = vadd.f32 %v1044, %v1050
      %v1093 = vadd.f32 %v1092, %v1056
      %v1094 = vadd.f32 %v1093, %v1062
      %v1095 = vrot.slane %v1094, 4
      %v1096 = vadd.f32 %v1094, %v1095
      %v1097 = vrot.slane %v1096, 2
      %v1098 = vadd.f32 %v1096, %v1097
      %v1099 = vrot.slane %v1098, 1
      %v1100 = vadd.f32 %v1098, %v1099
      %v1101 = vadd.f32 %v1045, %v1051
      %v1102 = vadd.f32 %v1101, %v1057
      %v1103 = vadd.f32 %v1102, %v1063
      %v1104 = vrot.slane %v1103, 4
      %v1105 = vadd.f32 %v1103, %v1104
      %v1106 = vrot.slane %v1105, 2
      %v1107 = vadd.f32 %v1105, %v1106
      %v1108 = vrot.slane %v1107, 1
      %v1109 = vadd.f32 %v1107, %v1108
      %v1110 = vadd.f32 %v1046, %v1052
      %v1111 = vadd.f32 %v1110, %v1058
      %v1112 = vadd.f32 %v1111, %v1064
      %v1113 = vrot.slane %v1112, 4
      %v1114 = vadd.f32 %v1112, %v1113
      %v1115 = vrot.slane %v1114, 2
      %v1116 = vadd.f32 %v1114, %v1115
      %v1117 = vrot.slane %v1116, 1
      %v1118 = vadd.f32 %v1116, %v1117
      %v1119 = vsub.f32 0.0, %v1073
      %v1120 = vsub.f32 0.0, %v1082
      %v1121 = vsub.f32 0.0, %v1091
      %v1122 = vsub.f32 0.0, %v1100
      %v1123 = vsub.f32 0.0, %v1109
      %v1124 = vsub.f32 0.0, %v1118
      %v1125 = vmul.f32 %v1119, 1.442695
      %v1126 = vpow.pop %v1125
      %v1127 = vmul.f32 %v1120, 1.442695
      %v1128 = vpow.pop %v1127
      %v1129 = vmul.f32 %v1121, 1.442695
      %v1130 = vpow.pop %v1129
      %v1131 = vmul.f32 %v1122, 1.442695
      %v1132 = vpow.pop %v1131
      %v1133 = vmul.f32 %v1123, 1.442695
      %v1134 = vpow.pop %v1133
      %v1135 = vmul.f32 %v1124, 1.442695
      %v1136 = vpow.pop %v1135
      %v1137 = vadd.f32 %v1126, 1.0
      %v1138 = vadd.f32 %v1128, 1.0
      %v1139 = vadd.f32 %v1130, 1.0
      %v1140 = vadd.f32 %v1132, 1.0
      %v1141 = vadd.f32 %v1134, 1.0
      %v1142 = vadd.f32 %v1136, 1.0
      %v1143 = vrcp.pop %v1137
      %v1144 = vrcp.pop %v1138
      %v1145 = vrcp.pop %v1139
      %v1146 = vrcp.pop %v1140
      %v1147 = vrcp.pop %v1141
      %v1148 = vrcp.pop %v1142
      %v1149 = vsub.f32 %v1143, %v848
      %v1150 = vsub.f32 %v1144, %v852
      %v1151 = vsub.f32 %v1145, %v856
      %v1152 = vsub.f32 %v1146, %v860
      %v1153 = vsub.f32 %v1147, %v864
      %v1154 = vsub.f32 %v1148, %v868
      %v1161 = vcombine.low %v1149, %v1150
      %v1162 = vcombine.low %v1151, %v1152
      %v1163 = vcombine.low %v1153, %v1154
      %v1165 = vunpack.c.l.s4 1966171168
      %v1166 = vunpack.c.0.s8 %v1165
      %v1167 = vlaneseq
      %v1168 = vshrl.u32 %v1167, 7
      %v1169 = vsub.s32 %v1166, %v1168
      %v1170 = vrot.slane %v1161, %v1169
      %v1172 = vunpack.c.l.s4 1966171168
      %v1173 = vunpack.c.0.s8 %v1172
      %v1174 = vlaneseq
      %v1175 = vshrl.u32 %v1174, 7
      %v1176 = vsub.s32 %v1173, %v1175
      %v1177 = vrot.slane %v1162, %v1176
      %v1179 = vunpack.c.l.s4 1966171168
      %v1180 = vunpack.c.0.s8 %v1179
      %v1181 = vlaneseq
      %v1182 = vshrl.u32 %v1181, 7
      %v1183 = vsub.s32 %v1180, %v1182
      %v1184 = vrot.slane %v1163, %v1183
      %v1185 = vcombine.low %v1170, %v1177
      %v1187 = vunpack.c.l.s4 1966171168
      %v1188 = vunpack.c.0.s8 %v1187
      %v1189 = vlaneseq
      %v1190 = vshrl.u32 %v1189, 7
      %v1191 = vsub.s32 %v1188, %v1190
      %v1192 = vrot.slane %v1185, %v1191
      %v1194 = vunpack.c.l.s4 1966171168
      %v1195 = vunpack.c.0.s8 %v1194
      %v1196 = vlaneseq
      %v1197 = vshrl.u32 %v1196, 7
      %v1198 = vsub.s32 %v1195, %v1197
      %v1199 = vrot.slane %v1184, %v1198
      %v1200 = vcombine.low %v1192, %v1199
      %v1202 = vmul.f32 %v336, %v1200
      %v1203 = vmul.f32 %v1202, 0.001953125
      %v1205 = vlaneseq
      %v1206 = vshrl.u32 %v1205, 7
      %v1207 = vsub.s32 0, %v1206
      %v1208 = vrot.slane %v1203, %v1207
      %v1209 = vlaneseq
      %v1210 = vshrl.u32 %v1209, 7
      %v1211 = vsub.s32 1, %v1210
      %v1212 = vrot.slane %v1203, %v1211
      %v1213 = vlaneseq
      %v1214 = vshrl.u32 %v1213, 7
      %v1215 = vsub.s32 2, %v1214
      %v1216 = vrot.slane %v1203, %v1215
      %v1217 = vlaneseq
      %v1218 = vshrl.u32 %v1217, 7
      %v1219 = vsub.s32 3, %v1218
      %v1220 = vrot.slane %v1203, %v1219
      %v1221 = vlaneseq
      %v1222 = vshrl.u32 %v1221, 7
      %v1223 = vsub.s32 4, %v1222
      %v1224 = vrot.slane %v1203, %v1223
      %v1225 = vlaneseq
      %v1226 = vshrl.u32 %v1225, 7
      %v1227 = vsub.s32 5, %v1226
      %v1228 = vrot.slane %v1203, %v1227
      %v1235 = vmul.f32 %v692, %v1208
      %v1236 = vmul.f32 %v693, %v1212
      %v1237 = vmul.f32 %v694, %v1216
      %v1238 = vmul.f32 %v695, %v1220
      %v1239 = vmul.f32 %v696, %v1224
      %v1240 = vmul.f32 %v697, %v1228
      %v1241 = vmul.f32 %v698, %v1208
      %v1242 = vmul.f32 %v699, %v1212
      %v1243 = vmul.f32 %v700, %v1216
      %v1244 = vmul.f32 %v701, %v1220
      %v1245 = vmul.f32 %v702, %v1224
      %v1246 = vmul.f32 %v703, %v1228
      %v1247 = vmul.f32 %v704, %v1208
      %v1248 = vmul.f32 %v705, %v1212
      %v1249 = vmul.f32 %v706, %v1216
      %v1250 = vmul.f32 %v707, %v1220
      %v1251 = vmul.f32 %v708, %v1224
      %v1252 = vmul.f32 %v709, %v1228
      %v1253 = vmul.f32 %v710, %v1208
      %v1254 = vmul.f32 %v711, %v1212
      %v1255 = vmul.f32 %v712, %v1216
      %v1256 = vmul.f32 %v713, %v1220
      %v1257 = vmul.f32 %v714, %v1224
      %v1258 = vmul.f32 %v715, %v1228
      %v1259 = vadd.f32 %v1235, %v1236
      %v1260 = vadd.f32 %v1259, %v1237
      %v1261 = vadd.f32 %v1260, %v1238
      %v1262 = vadd.f32 %v1261, %v1239
      %v1263 = vadd.f32 %v1262, %v1240
      %1264 = vadd.xlane.f32.xlu0 %v1263
      %v1265 = vpop.xlane.xlu0 %1264
      %v1266 = vadd.f32 %v1241, %v1242
      %v1267 = vadd.f32 %v1266, %v1243
      %v1268 = vadd.f32 %v1267, %v1244
      %v1269 = vadd.f32 %v1268, %v1245
      %v1270 = vadd.f32 %v1269, %v1246
      %1271 = vadd.xlane.f32.xlu0 %v1270
      %v1272 = vpop.xlane.xlu0 %1271
      %v1273 = vadd.f32 %v1247, %v1248
      %v1274 = vadd.f32 %v1273, %v1249
      %v1275 = vadd.f32 %v1274, %v1250
      %v1276 = vadd.f32 %v1275, %v1251
      %v1277 = vadd.f32 %v1276, %v1252
      %1278 = vadd.xlane.f32.xlu0 %v1277
      %v1279 = vpop.xlane.xlu0 %1278
      %v1280 = vadd.f32 %v1253, %v1254
      %v1281 = vadd.f32 %v1280, %v1255
      %v1282 = vadd.f32 %v1281, %v1256
      %v1283 = vadd.f32 %v1282, %v1257
      %v1284 = vadd.f32 %v1283, %v1258
      %1285 = vadd.xlane.f32.xlu0 %v1284
      %v1286 = vpop.xlane.xlu0 %1285
      %v1287 = vmul.f32 %v1265, 0.01
      %v1288 = vmul.f32 %v1272, 0.01
      %v1289 = vmul.f32 %v1279, 0.01
      %v1290 = vmul.f32 %v1286, 0.01
      %v1291 = vsub.f32 %v1017, %v1287
      %v1292 = vsub.f32 %v1018, %v1288
      %v1293 = vsub.f32 %v1019, %v1289
      %v1294 = vsub.f32 %v1020, %v1290
      %1296 = vset.pattern.permute.xlu0 0
      %1297 = vperm.xlu0 %1296, %v1291
      %v1298 = vpop.permute.xlu0 %1297
      %1301 = vset.pattern.permute.xlu0 0
      %1302 = vperm.xlu0 %1301, %v1292
      %v1303 = vpop.permute.xlu0 %1302
      %1306 = vset.pattern.permute.xlu0 0
      %1307 = vperm.xlu0 %1306, %v1293
      %v1308 = vpop.permute.xlu0 %1307
      %1311 = vset.pattern.permute.xlu0 0
      %1312 = vperm.xlu0 %1311, %v1294
      %v1313 = vpop.permute.xlu0 %1312
      %v1315 = vmul.f32 %v692, %v1298
      %v1316 = vmul.f32 %v693, %v1298
      %v1317 = vmul.f32 %v694, %v1298
      %v1318 = vmul.f32 %v695, %v1298
      %v1319 = vmul.f32 %v696, %v1298
      %v1320 = vmul.f32 %v697, %v1298
      %v1321 = vmul.f32 %v698, %v1303
      %v1322 = vmul.f32 %v699, %v1303
      %v1323 = vmul.f32 %v700, %v1303
      %v1324 = vmul.f32 %v701, %v1303
      %v1325 = vmul.f32 %v702, %v1303
      %v1326 = vmul.f32 %v703, %v1303
      %v1327 = vmul.f32 %v704, %v1308
      %v1328 = vmul.f32 %v705, %v1308
      %v1329 = vmul.f32 %v706, %v1308
      %v1330 = vmul.f32 %v707, %v1308
      %v1331 = vmul.f32 %v708, %v1308
      %v1332 = vmul.f32 %v709, %v1308
      %v1333 = vmul.f32 %v710, %v1313
      %v1334 = vmul.f32 %v711, %v1313
      %v1335 = vmul.f32 %v712, %v1313
      %v1336 = vmul.f32 %v713, %v1313
      %v1337 = vmul.f32 %v714, %v1313
      %v1338 = vmul.f32 %v715, %v1313
      %v1339 = vadd.f32 %v1315, %v1321
      %v1340 = vadd.f32 %v1339, %v1327
      %v1341 = vadd.f32 %v1340, %v1333
      %v1342 = vrot.slane %v1341, 4
      %v1343 = vadd.f32 %v1341, %v1342
      %v1344 = vrot.slane %v1343, 2
      %v1345 = vadd.f32 %v1343, %v1344
      %v1346 = vrot.slane %v1345, 1
      %v1347 = vadd.f32 %v1345, %v1346
      %v1348 = vadd.f32 %v1316, %v1322
      %v1349 = vadd.f32 %v1348, %v1328
      %v1350 = vadd.f32 %v1349, %v1334
      %v1351 = vrot.slane %v1350, 4
      %v1352 = vadd.f32 %v1350, %v1351
      %v1353 = vrot.slane %v1352, 2
      %v1354 = vadd.f32 %v1352, %v1353
      %v1355 = vrot.slane %v1354, 1
      %v1356 = vadd.f32 %v1354, %v1355
      %v1357 = vadd.f32 %v1317, %v1323
      %v1358 = vadd.f32 %v1357, %v1329
      %v1359 = vadd.f32 %v1358, %v1335
      %v1360 = vrot.slane %v1359, 4
      %v1361 = vadd.f32 %v1359, %v1360
      %v1362 = vrot.slane %v1361, 2
      %v1363 = vadd.f32 %v1361, %v1362
      %v1364 = vrot.slane %v1363, 1
      %v1365 = vadd.f32 %v1363, %v1364
      %v1366 = vadd.f32 %v1318, %v1324
      %v1367 = vadd.f32 %v1366, %v1330
      %v1368 = vadd.f32 %v1367, %v1336
      %v1369 = vrot.slane %v1368, 4
      %v1370 = vadd.f32 %v1368, %v1369
      %v1371 = vrot.slane %v1370, 2
      %v1372 = vadd.f32 %v1370, %v1371
      %v1373 = vrot.slane %v1372, 1
      %v1374 = vadd.f32 %v1372, %v1373
      %v1375 = vadd.f32 %v1319, %v1325
      %v1376 = vadd.f32 %v1375, %v1331
      %v1377 = vadd.f32 %v1376, %v1337
      %v1378 = vrot.slane %v1377, 4
      %v1379 = vadd.f32 %v1377, %v1378
      %v1380 = vrot.slane %v1379, 2
      %v1381 = vadd.f32 %v1379, %v1380
      %v1382 = vrot.slane %v1381, 1
      %v1383 = vadd.f32 %v1381, %v1382
      %v1384 = vadd.f32 %v1320, %v1326
      %v1385 = vadd.f32 %v1384, %v1332
      %v1386 = vadd.f32 %v1385, %v1338
      %v1387 = vrot.slane %v1386, 4
      %v1388 = vadd.f32 %v1386, %v1387
      %v1389 = vrot.slane %v1388, 2
      %v1390 = vadd.f32 %v1388, %v1389
      %v1391 = vrot.slane %v1390, 1
      %v1392 = vadd.f32 %v1390, %v1391
      %v1393 = vsub.f32 0.0, %v1347
      %v1394 = vsub.f32 0.0, %v1356
      %v1395 = vsub.f32 0.0, %v1365
      %v1396 = vsub.f32 0.0, %v1374
      %v1397 = vsub.f32 0.0, %v1383
      %v1398 = vsub.f32 0.0, %v1392
      %v1399 = vmul.f32 %v1393, 1.442695
      %v1400 = vpow.pop %v1399
      %v1401 = vmul.f32 %v1394, 1.442695
      %v1402 = vpow.pop %v1401
      %v1403 = vmul.f32 %v1395, 1.442695
      %v1404 = vpow.pop %v1403
      %v1405 = vmul.f32 %v1396, 1.442695
      %v1406 = vpow.pop %v1405
      %v1407 = vmul.f32 %v1397, 1.442695
      %v1408 = vpow.pop %v1407
      %v1409 = vmul.f32 %v1398, 1.442695
      %v1410 = vpow.pop %v1409
      %v1411 = vadd.f32 %v1400, 1.0
      %v1412 = vadd.f32 %v1402, 1.0
      %v1413 = vadd.f32 %v1404, 1.0
      %v1414 = vadd.f32 %v1406, 1.0
      %v1415 = vadd.f32 %v1408, 1.0
      %v1416 = vadd.f32 %v1410, 1.0
      %v1417 = vrcp.pop %v1411
      %v1418 = vrcp.pop %v1412
      %v1419 = vrcp.pop %v1413
      %v1420 = vrcp.pop %v1414
      %v1421 = vrcp.pop %v1415
      %v1422 = vrcp.pop %v1416
      %v1423 = vsub.f32 %v1417, %v848
      %v1424 = vsub.f32 %v1418, %v852
      %v1425 = vsub.f32 %v1419, %v856
      %v1426 = vsub.f32 %v1420, %v860
      %v1427 = vsub.f32 %v1421, %v864
      %v1428 = vsub.f32 %v1422, %v868
      %v1435 = vcombine.low %v1423, %v1424
      %v1436 = vcombine.low %v1425, %v1426
      %v1437 = vcombine.low %v1427, %v1428
      %v1439 = vunpack.c.l.s4 1966171168
      %v1440 = vunpack.c.0.s8 %v1439
      %v1441 = vlaneseq
      %v1442 = vshrl.u32 %v1441, 7
      %v1443 = vsub.s32 %v1440, %v1442
      %v1444 = vrot.slane %v1435, %v1443
      %v1446 = vunpack.c.l.s4 1966171168
      %v1447 = vunpack.c.0.s8 %v1446
      %v1448 = vlaneseq
      %v1449 = vshrl.u32 %v1448, 7
      %v1450 = vsub.s32 %v1447, %v1449
      %v1451 = vrot.slane %v1436, %v1450
      %v1453 = vunpack.c.l.s4 1966171168
      %v1454 = vunpack.c.0.s8 %v1453
      %v1455 = vlaneseq
      %v1456 = vshrl.u32 %v1455, 7
      %v1457 = vsub.s32 %v1454, %v1456
      %v1458 = vrot.slane %v1437, %v1457
      %v1459 = vcombine.low %v1444, %v1451
      %v1461 = vunpack.c.l.s4 1966171168
      %v1462 = vunpack.c.0.s8 %v1461
      %v1463 = vlaneseq
      %v1464 = vshrl.u32 %v1463, 7
      %v1465 = vsub.s32 %v1462, %v1464
      %v1466 = vrot.slane %v1459, %v1465
      %v1468 = vunpack.c.l.s4 1966171168
      %v1469 = vunpack.c.0.s8 %v1468
      %v1470 = vlaneseq
      %v1471 = vshrl.u32 %v1470, 7
      %v1472 = vsub.s32 %v1469, %v1471
      %v1473 = vrot.slane %v1458, %v1472
      %v1474 = vcombine.low %v1466, %v1473
      %v1476 = vmul.f32 %v336, %v1474
      %v1477 = vmul.f32 %v1476, 0.001953125
      %v1479 = vlaneseq
      %v1480 = vshrl.u32 %v1479, 7
      %v1481 = vsub.s32 0, %v1480
      %v1482 = vrot.slane %v1477, %v1481
      %v1483 = vlaneseq
      %v1484 = vshrl.u32 %v1483, 7
      %v1485 = vsub.s32 1, %v1484
      %v1486 = vrot.slane %v1477, %v1485
      %v1487 = vlaneseq
      %v1488 = vshrl.u32 %v1487, 7
      %v1489 = vsub.s32 2, %v1488
      %v1490 = vrot.slane %v1477, %v1489
      %v1491 = vlaneseq
      %v1492 = vshrl.u32 %v1491, 7
      %v1493 = vsub.s32 3, %v1492
      %v1494 = vrot.slane %v1477, %v1493
      %v1495 = vlaneseq
      %v1496 = vshrl.u32 %v1495, 7
      %v1497 = vsub.s32 4, %v1496
      %v1498 = vrot.slane %v1477, %v1497
      %v1499 = vlaneseq
      %v1500 = vshrl.u32 %v1499, 7
      %v1501 = vsub.s32 5, %v1500
      %v1502 = vrot.slane %v1477, %v1501
      %v1509 = vmul.f32 %v692, %v1482
      %v1510 = vmul.f32 %v693, %v1486
      %v1511 = vmul.f32 %v694, %v1490
      %v1512 = vmul.f32 %v695, %v1494
      %v1513 = vmul.f32 %v696, %v1498
      %v1514 = vmul.f32 %v697, %v1502
      %v1515 = vmul.f32 %v698, %v1482
      %v1516 = vmul.f32 %v699, %v1486
      %v1517 = vmul.f32 %v700, %v1490
      %v1518 = vmul.f32 %v701, %v1494
      %v1519 = vmul.f32 %v702, %v1498
      %v1520 = vmul.f32 %v703, %v1502
      %v1521 = vmul.f32 %v704, %v1482
      %v1522 = vmul.f32 %v705, %v1486
      %v1523 = vmul.f32 %v706, %v1490
      %v1524 = vmul.f32 %v707, %v1494
      %v1525 = vmul.f32 %v708, %v1498
      %v1526 = vmul.f32 %v709, %v1502
      %v1527 = vmul.f32 %v710, %v1482
      %v1528 = vmul.f32 %v711, %v1486
      %v1529 = vmul.f32 %v712, %v1490
      %v1530 = vmul.f32 %v713, %v1494
      %v1531 = vmul.f32 %v714, %v1498
      %v1532 = vmul.f32 %v715, %v1502
      %v1533 = vadd.f32 %v1509, %v1510
      %v1534 = vadd.f32 %v1533, %v1511
      %v1535 = vadd.f32 %v1534, %v1512
      %v1536 = vadd.f32 %v1535, %v1513
      %v1537 = vadd.f32 %v1536, %v1514
      %1538 = vadd.xlane.f32.xlu0 %v1537
      %v1539 = vpop.xlane.xlu0 %1538
      %v1540 = vadd.f32 %v1515, %v1516
      %v1541 = vadd.f32 %v1540, %v1517
      %v1542 = vadd.f32 %v1541, %v1518
      %v1543 = vadd.f32 %v1542, %v1519
      %v1544 = vadd.f32 %v1543, %v1520
      %1545 = vadd.xlane.f32.xlu0 %v1544
      %v1546 = vpop.xlane.xlu0 %1545
      %v1547 = vadd.f32 %v1521, %v1522
      %v1548 = vadd.f32 %v1547, %v1523
      %v1549 = vadd.f32 %v1548, %v1524
      %v1550 = vadd.f32 %v1549, %v1525
      %v1551 = vadd.f32 %v1550, %v1526
      %1552 = vadd.xlane.f32.xlu0 %v1551
      %v1553 = vpop.xlane.xlu0 %1552
      %v1554 = vadd.f32 %v1527, %v1528
      %v1555 = vadd.f32 %v1554, %v1529
      %v1556 = vadd.f32 %v1555, %v1530
      %v1557 = vadd.f32 %v1556, %v1531
      %v1558 = vadd.f32 %v1557, %v1532
      %1559 = vadd.xlane.f32.xlu0 %v1558
      %v1560 = vpop.xlane.xlu0 %1559
      %v1561 = vmul.f32 %v1539, 0.01
      %v1562 = vmul.f32 %v1546, 0.01
      %v1563 = vmul.f32 %v1553, 0.01
      %v1564 = vmul.f32 %v1560, 0.01
      %v1565 = vsub.f32 %v1291, %v1561
      %v1566 = vsub.f32 %v1292, %v1562
      %v1567 = vsub.f32 %v1293, %v1563
      %v1568 = vsub.f32 %v1294, %v1564
      %v1569 = vld [vmem:[%s322] sm:$0x77]
      %v1570 = vld [vmem:[%s322 + $0x8] sm:$0x77]
      %v1571 = vld [vmem:[%s322 + $0x10] sm:$0x77]
      %v1572 = vld [vmem:[%s322 + $0x18] sm:$0x77]
      %v1573 = vld [vmem:[%s326] sm:$0x3f]
      %v1574 = vld [vmem:[%s5] sm:$0x3f]
      %v1575 = vrot.slane %v1568, 3
      %s1576 = vtos %v1575
      %v1577 = vstv %s1576
      %v1578 = vadd.f32 %v1577, 0.0
      %1580 = vset.pattern.permute.xlu0 0
      %1581 = vperm.xlu0 %1580, %v1565
      %v1582 = vpop.permute.xlu0 %1581
      %v1584 = vunpack.c.l.s4 839922192
      %v1585 = vunpack.c.0.s8 %v1584
      %v1586 = vlaneseq
      %v1587 = vshrl.u32 %v1586, 7
      %v1588 = vsub.s32 %v1585, %v1587
      %v1589 = vrot.slane %v1582, %v1588
      %v1591 = vmul.f32 %v1569, %v1589
      %v1592 = vmul.f32 %v1570, %v1589
      %v1593 = vmul.f32 %v1571, %v1589
      %v1594 = vmul.f32 %v1572, %v1589
      %v1598 = vcombine.high %v1591, %v1591
      %v1599 = vcombine.high %v1592, %v1592
      %v1600 = vcombine.high %v1593, %v1593
      %vm1604 = vcmask 1043304
      %v1605 = vsel %vm1604, %v1591, 0.0
      %v1606 = vrot.slane %v1605, 4
      %v1607 = vadd.f32 %v1605, %v1606
      %v1608 = vrot.slane %v1607, 2
      %v1609 = vadd.f32 %v1607, %v1608
      %v1610 = vrot.slane %v1609, 1
      %v1611 = vadd.f32 %v1609, %v1610
      %vm1612 = vcmask 1042432
      %v1613 = vsel %vm1612, %v1598, 0.0
      %v1614 = vrot.slane %v1613, 4
      %v1615 = vadd.f32 %v1613, %v1614
      %v1616 = vrot.slane %v1615, 2
      %v1617 = vadd.f32 %v1615, %v1616
      %v1618 = vrot.slane %v1617, 1
      %v1619 = vadd.f32 %v1617, %v1618
      %v1620 = vsel %vm1612, %v1592, 0.0
      %v1621 = vrot.slane %v1620, 4
      %v1622 = vadd.f32 %v1620, %v1621
      %v1623 = vrot.slane %v1622, 2
      %v1624 = vadd.f32 %v1622, %v1623
      %v1625 = vrot.slane %v1624, 1
      %v1626 = vadd.f32 %v1624, %v1625
      %v1627 = vsel %vm1612, %v1599, 0.0
      %v1628 = vrot.slane %v1627, 4
      %v1629 = vadd.f32 %v1627, %v1628
      %v1630 = vrot.slane %v1629, 2
      %v1631 = vadd.f32 %v1629, %v1630
      %v1632 = vrot.slane %v1631, 1
      %v1633 = vadd.f32 %v1631, %v1632
      %v1634 = vsel %vm1612, %v1593, 0.0
      %v1635 = vrot.slane %v1634, 4
      %v1636 = vadd.f32 %v1634, %v1635
      %v1637 = vrot.slane %v1636, 2
      %v1638 = vadd.f32 %v1636, %v1637
      %v1639 = vrot.slane %v1638, 1
      %v1640 = vadd.f32 %v1638, %v1639
      %v1641 = vsel %vm1612, %v1600, 0.0
      %v1642 = vrot.slane %v1641, 4
      %v1643 = vadd.f32 %v1641, %v1642
      %v1644 = vrot.slane %v1643, 2
      %v1645 = vadd.f32 %v1643, %v1644
      %v1646 = vrot.slane %v1645, 1
      %v1647 = vadd.f32 %v1645, %v1646
      %vm1648 = vcmask 886784
      %v1649 = vsel %vm1648, %v1594, 0.0
      %v1650 = vrot.slane %v1649, 4
      %v1651 = vadd.f32 %v1649, %v1650
      %v1652 = vrot.slane %v1651, 2
      %v1653 = vadd.f32 %v1651, %v1652
      %v1654 = vrot.slane %v1653, 1
      %v1655 = vadd.f32 %v1653, %v1654
      %v1656 = vadd.f32 %v1578, %v1611
      %v1657 = vadd.f32 %v1578, %v1619
      %v1658 = vadd.f32 %v1578, %v1626
      %v1659 = vadd.f32 %v1578, %v1633
      %v1660 = vadd.f32 %v1578, %v1640
      %v1661 = vadd.f32 %v1578, %v1647
      %v1662 = vadd.f32 %v1578, %v1655
      %v1664 = vunpack.c.l.s4 1985246804
      %v1665 = vunpack.c.0.s8 %v1664
      %v1666 = vlaneseq
      %v1667 = vshrl.u32 %v1666, 7
      %v1668 = vsub.s32 %v1665, %v1667
      %v1669 = vrot.slane %v1582, %v1668
      %vm1670 = vcmask 1040384
      %vm1671 = vcmask 1044484
      %vm1672 = vmor %vm1670, %vm1671
      %v1673 = vrot.slane %v1589, 7
      %v1674 = vrot.slane %v1673, 4
      %v1675 = vrot.slane %v1669, 7
      %v1676 = vsel %vm1672, %v1674, %v1675
      %v1678 = vmul.f32 %v1569, %v1676
      %v1679 = vmul.f32 %v1570, %v1676
      %v1680 = vmul.f32 %v1571, %v1676
      %v1681 = vmul.f32 %v1572, %v1676
      %v1685 = vcombine.high %v1678, %v1678
      %v1686 = vcombine.high %v1679, %v1679
      %v1687 = vcombine.high %v1680, %v1680
      %vm1691 = vcmask 1043312
      %v1692 = vsel %vm1691, %v1678, 0.0
      %v1693 = vrot.slane %v1692, 4
      %v1694 = vadd.f32 %v1692, %v1693
      %v1695 = vrot.slane %v1694, 2
      %v1696 = vadd.f32 %v1694, %v1695
      %v1697 = vrot.slane %v1696, 1
      %v1698 = vadd.f32 %v1696, %v1697
      %v1699 = vsel %vm1612, %v1685, 0.0
      %v1700 = vrot.slane %v1699, 4
      %v1701 = vadd.f32 %v1699, %v1700
      %v1702 = vrot.slane %v1701, 2
      %v1703 = vadd.f32 %v1701, %v1702
      %v1704 = vrot.slane %v1703, 1
      %v1705 = vadd.f32 %v1703, %v1704
      %v1706 = vsel %vm1612, %v1679, 0.0
      %v1707 = vrot.slane %v1706, 4
      %v1708 = vadd.f32 %v1706, %v1707
      %v1709 = vrot.slane %v1708, 2
      %v1710 = vadd.f32 %v1708, %v1709
      %v1711 = vrot.slane %v1710, 1
      %v1712 = vadd.f32 %v1710, %v1711
      %v1713 = vsel %vm1612, %v1686, 0.0
      %v1714 = vrot.slane %v1713, 4
      %v1715 = vadd.f32 %v1713, %v1714
      %v1716 = vrot.slane %v1715, 2
      %v1717 = vadd.f32 %v1715, %v1716
      %v1718 = vrot.slane %v1717, 1
      %v1719 = vadd.f32 %v1717, %v1718
      %v1720 = vsel %vm1612, %v1680, 0.0
      %v1721 = vrot.slane %v1720, 4
      %v1722 = vadd.f32 %v1720, %v1721
      %v1723 = vrot.slane %v1722, 2
      %v1724 = vadd.f32 %v1722, %v1723
      %v1725 = vrot.slane %v1724, 1
      %v1726 = vadd.f32 %v1724, %v1725
      %v1727 = vsel %vm1612, %v1687, 0.0
      %v1728 = vrot.slane %v1727, 4
      %v1729 = vadd.f32 %v1727, %v1728
      %v1730 = vrot.slane %v1729, 2
      %v1731 = vadd.f32 %v1729, %v1730
      %v1732 = vrot.slane %v1731, 1
      %v1733 = vadd.f32 %v1731, %v1732
      %vm1734 = vcmask 894976
      %v1735 = vsel %vm1734, %v1681, 0.0
      %v1736 = vrot.slane %v1735, 4
      %v1737 = vadd.f32 %v1735, %v1736
      %v1738 = vrot.slane %v1737, 2
      %v1739 = vadd.f32 %v1737, %v1738
      %v1740 = vrot.slane %v1739, 1
      %v1741 = vadd.f32 %v1739, %v1740
      %1749 = vrot.lane.b32.xlu0 %v1698, 127
      %v1750 = vpop.permute.xlu0 %1749
      %1751 = vrot.lane.b32.xlu0 %v1705, 127
      %v1752 = vpop.permute.xlu0 %1751
      %1753 = vrot.lane.b32.xlu0 %v1712, 127
      %v1754 = vpop.permute.xlu0 %1753
      %1755 = vrot.lane.b32.xlu0 %v1719, 127
      %v1756 = vpop.permute.xlu0 %1755
      %1757 = vrot.lane.b32.xlu0 %v1726, 127
      %v1758 = vpop.permute.xlu0 %1757
      %1759 = vrot.lane.b32.xlu0 %v1733, 127
      %v1760 = vpop.permute.xlu0 %1759
      %1761 = vrot.lane.b32.xlu0 %v1741, 127
      %v1762 = vpop.permute.xlu0 %1761
      %v1763 = vsel %vm541, %v1750, %v1752
      %v1764 = vsel %vm541, %v1752, %v1754
      %v1765 = vsel %vm541, %v1754, %v1756
      %v1766 = vsel %vm541, %v1756, %v1758
      %v1767 = vsel %vm541, %v1758, %v1760
      %v1768 = vsel %vm541, %v1760, %v1762
      %v1776 = vadd.f32 %v1656, %v1763
      %v1777 = vadd.f32 %v1657, %v1764
      %v1778 = vadd.f32 %v1658, %v1765
      %v1779 = vadd.f32 %v1659, %v1766
      %v1780 = vadd.f32 %v1660, %v1767
      %v1781 = vadd.f32 %v1661, %v1768
      %v1782 = vadd.f32 %v1662, %v1762
      %1784 = vset.pattern.permute.xlu0 0
      %1785 = vperm.xlu0 %1784, %v1566
      %v1786 = vpop.permute.xlu0 %1785
      %v1788 = vunpack.c.l.s4 839922192
      %v1789 = vunpack.c.0.s8 %v1788
      %v1790 = vlaneseq
      %v1791 = vshrl.u32 %v1790, 7
      %v1792 = vsub.s32 %v1789, %v1791
      %v1793 = vrot.slane %v1786, %v1792
      %vm1794 = vcmask 1041408
      %vm1795 = vcmask 1045508
      %vm1796 = vmor %vm1794, %vm1795
      %v1797 = vrot.slane %v1669, 6
      %v1798 = vrot.slane %v1797, 4
      %v1799 = vrot.slane %v1793, 6
      %v1800 = vsel %vm1796, %v1798, %v1799
      %v1802 = vmul.f32 %v1569, %v1800
      %v1803 = vmul.f32 %v1570, %v1800
      %v1804 = vmul.f32 %v1571, %v1800
      %v1805 = vmul.f32 %v1572, %v1800
      %v1809 = vcombine.high %v1802, %v1802
      %v1810 = vcombine.high %v1803, %v1803
      %v1811 = vcombine.high %v1804, %v1804
      %vm1815 = vcmask 1043320
      %v1816 = vsel %vm1815, %v1802, 0.0
      %v1817 = vrot.slane %v1816, 4
      %v1818 = vadd.f32 %v1816, %v1817
      %v1819 = vrot.slane %v1818, 2
      %v1820 = vadd.f32 %v1818, %v1819
      %v1821 = vrot.slane %v1820, 1
      %v1822 = vadd.f32 %v1820, %v1821
      %v1823 = vsel %vm1612, %v1809, 0.0
      %v1824 = vrot.slane %v1823, 4
      %v1825 = vadd.f32 %v1823, %v1824
      %v1826 = vrot.slane %v1825, 2
      %v1827 = vadd.f32 %v1825, %v1826
      %v1828 = vrot.slane %v1827, 1
      %v1829 = vadd.f32 %v1827, %v1828
      %v1830 = vsel %vm1612, %v1803, 0.0
      %v1831 = vrot.slane %v1830, 4
      %v1832 = vadd.f32 %v1830, %v1831
      %v1833 = vrot.slane %v1832, 2
      %v1834 = vadd.f32 %v1832, %v1833
      %v1835 = vrot.slane %v1834, 1
      %v1836 = vadd.f32 %v1834, %v1835
      %v1837 = vsel %vm1612, %v1810, 0.0
      %v1838 = vrot.slane %v1837, 4
      %v1839 = vadd.f32 %v1837, %v1838
      %v1840 = vrot.slane %v1839, 2
      %v1841 = vadd.f32 %v1839, %v1840
      %v1842 = vrot.slane %v1841, 1
      %v1843 = vadd.f32 %v1841, %v1842
      %v1844 = vsel %vm1612, %v1804, 0.0
      %v1845 = vrot.slane %v1844, 4
      %v1846 = vadd.f32 %v1844, %v1845
      %v1847 = vrot.slane %v1846, 2
      %v1848 = vadd.f32 %v1846, %v1847
      %v1849 = vrot.slane %v1848, 1
      %v1850 = vadd.f32 %v1848, %v1849
      %v1851 = vsel %vm1612, %v1811, 0.0
      %v1852 = vrot.slane %v1851, 4
      %v1853 = vadd.f32 %v1851, %v1852
      %v1854 = vrot.slane %v1853, 2
      %v1855 = vadd.f32 %v1853, %v1854
      %v1856 = vrot.slane %v1855, 1
      %v1857 = vadd.f32 %v1855, %v1856
      %vm1858 = vcmask 903168
      %v1859 = vsel %vm1858, %v1805, 0.0
      %v1860 = vrot.slane %v1859, 4
      %v1861 = vadd.f32 %v1859, %v1860
      %v1862 = vrot.slane %v1861, 2
      %v1863 = vadd.f32 %v1861, %v1862
      %v1864 = vrot.slane %v1863, 1
      %v1865 = vadd.f32 %v1863, %v1864
      %1873 = vrot.lane.b32.xlu0 %v1822, 126
      %v1874 = vpop.permute.xlu0 %1873
      %1875 = vrot.lane.b32.xlu0 %v1829, 126
      %v1876 = vpop.permute.xlu0 %1875
      %1877 = vrot.lane.b32.xlu0 %v1836, 126
      %v1878 = vpop.permute.xlu0 %1877
      %1879 = vrot.lane.b32.xlu0 %v1843, 126
      %v1880 = vpop.permute.xlu0 %1879
      %1881 = vrot.lane.b32.xlu0 %v1850, 126
      %v1882 = vpop.permute.xlu0 %1881
      %1883 = vrot.lane.b32.xlu0 %v1857, 126
      %v1884 = vpop.permute.xlu0 %1883
      %1885 = vrot.lane.b32.xlu0 %v1865, 126
      %v1886 = vpop.permute.xlu0 %1885
      %vm1887 = vcmask 1031168
      %v1888 = vsel %vm1887, %v1874, %v1876
      %v1889 = vsel %vm1887, %v1876, %v1878
      %v1890 = vsel %vm1887, %v1878, %v1880
      %v1891 = vsel %vm1887, %v1880, %v1882
      %v1892 = vsel %vm1887, %v1882, %v1884
      %v1893 = vsel %vm1887, %v1884, %v1886
      %v1901 = vadd.f32 %v1776, %v1888
      %v1902 = vadd.f32 %v1777, %v1889
      %v1903 = vadd.f32 %v1778, %v1890
      %v1904 = vadd.f32 %v1779, %v1891
      %v1905 = vadd.f32 %v1780, %v1892
      %v1906 = vadd.f32 %v1781, %v1893
      %v1907 = vadd.f32 %v1782, %v1886
      %v1908 = vrot.slane %v1793, 5
      %v1909 = vrot.slane %v1908, 4
      %v1911 = vmul.f32 %v1569, %v1909
      %v1912 = vmul.f32 %v1570, %v1909
      %v1913 = vmul.f32 %v1571, %v1909
      %v1914 = vmul.f32 %v1572, %v1909
      %v1918 = vcombine.high %v1911, %v1911
      %v1919 = vcombine.high %v1912, %v1912
      %v1920 = vcombine.high %v1913, %v1913
      %vm1924 = vcmask 1043448
      %v1925 = vsel %vm1924, %v1911, 0.0
      %v1926 = vrot.slane %v1925, 4
      %v1927 = vadd.f32 %v1925, %v1926
      %v1928 = vrot.slane %v1927, 2
      %v1929 = vadd.f32 %v1927, %v1928
      %v1930 = vrot.slane %v1929, 1
      %v1931 = vadd.f32 %v1929, %v1930
      %v1932 = vsel %vm1612, %v1918, 0.0
      %v1933 = vrot.slane %v1932, 4
      %v1934 = vadd.f32 %v1932, %v1933
      %v1935 = vrot.slane %v1934, 2
      %v1936 = vadd.f32 %v1934, %v1935
      %v1937 = vrot.slane %v1936, 1
      %v1938 = vadd.f32 %v1936, %v1937
      %v1939 = vsel %vm1612, %v1912, 0.0
      %v1940 = vrot.slane %v1939, 4
      %v1941 = vadd.f32 %v1939, %v1940
      %v1942 = vrot.slane %v1941, 2
      %v1943 = vadd.f32 %v1941, %v1942
      %v1944 = vrot.slane %v1943, 1
      %v1945 = vadd.f32 %v1943, %v1944
      %v1946 = vsel %vm1612, %v1919, 0.0
      %v1947 = vrot.slane %v1946, 4
      %v1948 = vadd.f32 %v1946, %v1947
      %v1949 = vrot.slane %v1948, 2
      %v1950 = vadd.f32 %v1948, %v1949
      %v1951 = vrot.slane %v1950, 1
      %v1952 = vadd.f32 %v1950, %v1951
      %v1953 = vsel %vm1612, %v1913, 0.0
      %v1954 = vrot.slane %v1953, 4
      %v1955 = vadd.f32 %v1953, %v1954
      %v1956 = vrot.slane %v1955, 2
      %v1957 = vadd.f32 %v1955, %v1956
      %v1958 = vrot.slane %v1957, 1
      %v1959 = vadd.f32 %v1957, %v1958
      %v1960 = vsel %vm1612, %v1920, 0.0
      %v1961 = vrot.slane %v1960, 4
      %v1962 = vadd.f32 %v1960, %v1961
      %v1963 = vrot.slane %v1962, 2
      %v1964 = vadd.f32 %v1962, %v1963
      %v1965 = vrot.slane %v1964, 1
      %v1966 = vadd.f32 %v1964, %v1965
      %vm1967 = vcmask 1034240
      %v1968 = vsel %vm1967, %v1914, 0.0
      %v1969 = vrot.slane %v1968, 4
      %v1970 = vadd.f32 %v1968, %v1969
      %v1971 = vrot.slane %v1970, 2
      %v1972 = vadd.f32 %v1970, %v1971
      %v1973 = vrot.slane %v1972, 1
      %v1974 = vadd.f32 %v1972, %v1973
      %1982 = vrot.lane.b32.xlu0 %v1931, 110
      %v1983 = vpop.permute.xlu0 %1982
      %1984 = vrot.lane.b32.xlu0 %v1938, 110
      %v1985 = vpop.permute.xlu0 %1984
      %1986 = vrot.lane.b32.xlu0 %v1945, 110
      %v1987 = vpop.permute.xlu0 %1986
      %1988 = vrot.lane.b32.xlu0 %v1952, 110
      %v1989 = vpop.permute.xlu0 %1988
      %1990 = vrot.lane.b32.xlu0 %v1959, 110
      %v1991 = vpop.permute.xlu0 %1990
      %1992 = vrot.lane.b32.xlu0 %v1966, 110
      %v1993 = vpop.permute.xlu0 %1992
      %1994 = vrot.lane.b32.xlu0 %v1974, 110
      %v1995 = vpop.permute.xlu0 %1994
      %v1996 = vsel %vm627, %v1983, %v1985
      %v1997 = vsel %vm627, %v1985, %v1987
      %v1998 = vsel %vm627, %v1987, %v1989
      %v1999 = vsel %vm627, %v1989, %v1991
      %v2000 = vsel %vm627, %v1991, %v1993
      %v2001 = vsel %vm627, %v1993, %v1995
      %v2009 = vadd.f32 %v1901, %v1996
      %v2010 = vadd.f32 %v1902, %v1997
      %v2011 = vadd.f32 %v1903, %v1998
      %v2012 = vadd.f32 %v1904, %v1999
      %v2013 = vadd.f32 %v1905, %v2000
      %v2014 = vadd.f32 %v1906, %v2001
      %v2015 = vadd.f32 %v1907, %v1995
      %v2020 = vrot.slane %v1569, 4
      %v2021 = vrot.slane %v1570, 4
      %v2022 = vrot.slane %v1571, 4
      %v2023 = vrot.slane %v1572, 4
      %vm2024 = vcmask 1043456
      %v2025 = vsel %vm2024, %v2020, %v2021
      %v2026 = vsel %vm2024, %v2021, %v2022
      %v2027 = vsel %vm2024, %v2022, %v2023
      %v2032 = vunpack.c.l.s4 1985246804
      %v2033 = vunpack.c.0.s8 %v2032
      %v2034 = vlaneseq
      %v2035 = vshrl.u32 %v2034, 7
      %v2036 = vsub.s32 %v2033, %v2035
      %v2037 = vrot.slane %v1786, %v2036
      %v2039 = vmul.f32 %v2025, %v2037
      %v2040 = vmul.f32 %v2026, %v2037
      %v2041 = vmul.f32 %v2027, %v2037
      %v2045 = vcombine.high %v2039, %v2039
      %v2046 = vcombine.high %v2040, %v2040
      %v2047 = vcombine.high %v2041, %v2041
      %v2051 = vsel %vm1612, %v2039, 0.0
      %v2052 = vrot.slane %v2051, 4
      %v2053 = vadd.f32 %v2051, %v2052
      %v2054 = vrot.slane %v2053, 2
      %v2055 = vadd.f32 %v2053, %v2054
      %v2056 = vrot.slane %v2055, 1
      %v2057 = vadd.f32 %v2055, %v2056
      %v2058 = vsel %vm1612, %v2045, 0.0
      %v2059 = vrot.slane %v2058, 4
      %v2060 = vadd.f32 %v2058, %v2059
      %v2061 = vrot.slane %v2060, 2
      %v2062 = vadd.f32 %v2060, %v2061
      %v2063 = vrot.slane %v2062, 1
      %v2064 = vadd.f32 %v2062, %v2063
      %v2065 = vsel %vm1612, %v2040, 0.0
      %v2066 = vrot.slane %v2065, 4
      %v2067 = vadd.f32 %v2065, %v2066
      %v2068 = vrot.slane %v2067, 2
      %v2069 = vadd.f32 %v2067, %v2068
      %v2070 = vrot.slane %v2069, 1
      %v2071 = vadd.f32 %v2069, %v2070
      %v2072 = vsel %vm1612, %v2046, 0.0
      %v2073 = vrot.slane %v2072, 4
      %v2074 = vadd.f32 %v2072, %v2073
      %v2075 = vrot.slane %v2074, 2
      %v2076 = vadd.f32 %v2074, %v2075
      %v2077 = vrot.slane %v2076, 1
      %v2078 = vadd.f32 %v2076, %v2077
      %v2079 = vsel %vm1612, %v2041, 0.0
      %v2080 = vrot.slane %v2079, 4
      %v2081 = vadd.f32 %v2079, %v2080
      %v2082 = vrot.slane %v2081, 2
      %v2083 = vadd.f32 %v2081, %v2082
      %v2084 = vrot.slane %v2083, 1
      %v2085 = vadd.f32 %v2083, %v2084
      %v2086 = vsel %vm1612, %v2047, 0.0
      %v2087 = vrot.slane %v2086, 4
      %v2088 = vadd.f32 %v2086, %v2087
      %v2089 = vrot.slane %v2088, 2
      %v2090 = vadd.f32 %v2088, %v2089
      %v2091 = vrot.slane %v2090, 1
      %v2092 = vadd.f32 %v2090, %v2091
      %2099 = vrot.lane.b32.xlu0 %v2057, 109
      %v2100 = vpop.permute.xlu0 %2099
      %2101 = vrot.lane.b32.xlu0 %v2064, 109
      %v2102 = vpop.permute.xlu0 %2101
      %2103 = vrot.lane.b32.xlu0 %v2071, 109
      %v2104 = vpop.permute.xlu0 %2103
      %2105 = vrot.lane.b32.xlu0 %v2078, 109
      %v2106 = vpop.permute.xlu0 %2105
      %2107 = vrot.lane.b32.xlu0 %v2085, 109
      %v2108 = vpop.permute.xlu0 %2107
      %2109 = vrot.lane.b32.xlu0 %v2092, 109
      %v2110 = vpop.permute.xlu0 %2109
      %v2111 = vsel %vm660, %v2100, %v2102
      %v2112 = vsel %vm660, %v2102, %v2104
      %v2113 = vsel %vm660, %v2104, %v2106
      %v2114 = vsel %vm660, %v2106, %v2108
      %v2115 = vsel %vm660, %v2108, %v2110
      %v2123 = vadd.f32 %v2009, %v2100
      %v2124 = vadd.f32 %v2010, %v2111
      %v2125 = vadd.f32 %v2011, %v2112
      %v2126 = vadd.f32 %v2012, %v2113
      %v2127 = vadd.f32 %v2013, %v2114
      %v2128 = vadd.f32 %v2014, %v2115
      %v2129 = vadd.f32 %v2015, %v2110
      %2131 = vset.pattern.permute.xlu0 0
      %2132 = vperm.xlu0 %2131, %v1567
      %v2133 = vpop.permute.xlu0 %2132
      %2134 = vrot.lane.b32.xlu0 %v1569, 127
      %v2135 = vpop.permute.xlu0 %2134
      %2136 = vrot.lane.b32.xlu0 %v1570, 127
      %v2137 = vpop.permute.xlu0 %2136
      %2138 = vrot.lane.b32.xlu0 %v1571, 127
      %v2139 = vpop.permute.xlu0 %2138
      %2140 = vrot.lane.b32.xlu0 %v1572, 127
      %v2141 = vpop.permute.xlu0 %2140
      %v2142 = vrot.slane %v2135, 4
      %v2143 = vrot.slane %v2137, 4
      %v2144 = vrot.slane %v2139, 4
      %v2145 = vrot.slane %v2141, 4
      %v2146 = vsel %vm2024, %v2142, %v2143
      %v2147 = vsel %vm541, %v2146, %v2137
      %v2148 = vsel %vm2024, %v2143, %v2144
      %v2149 = vsel %vm541, %v2148, %v2139
      %v2150 = vsel %vm2024, %v2144, %v2145
      %v2151 = vsel %vm541, %v2150, %v2141
      %v2156 = vunpack.c.l.s4 839922192
      %v2157 = vunpack.c.0.s8 %v2156
      %v2158 = vlaneseq
      %v2159 = vshrl.u32 %v2158, 7
      %v2160 = vsub.s32 %v2157, %v2159
      %v2161 = vrot.slane %v2133, %v2160
      %v2162 = vrot.slane %v2037, 7
      %v2163 = vrot.slane %v2162, 4
      %v2164 = vrot.slane %v2161, 7
      %v2165 = vsel %vm1672, %v2163, %v2164
      %v2167 = vmul.f32 %v2147, %v2165
      %v2168 = vmul.f32 %v2149, %v2165
      %v2169 = vmul.f32 %v2151, %v2165
      %v2173 = vcombine.high %v2167, %v2167
      %v2174 = vcombine.high %v2168, %v2168
      %v2175 = vcombine.high %v2169, %v2169
      %v2179 = vsel %vm1612, %v2167, 0.0
      %v2180 = vrot.slane %v2179, 4
      %v2181 = vadd.f32 %v2179, %v2180
      %v2182 = vrot.slane %v2181, 2
      %v2183 = vadd.f32 %v2181, %v2182
      %v2184 = vrot.slane %v2183, 1
      %v2185 = vadd.f32 %v2183, %v2184
      %v2186 = vsel %vm1612, %v2173, 0.0
      %v2187 = vrot.slane %v2186, 4
      %v2188 = vadd.f32 %v2186, %v2187
      %v2189 = vrot.slane %v2188, 2
      %v2190 = vadd.f32 %v2188, %v2189
      %v2191 = vrot.slane %v2190, 1
      %v2192 = vadd.f32 %v2190, %v2191
      %v2193 = vsel %vm1612, %v2168, 0.0
      %v2194 = vrot.slane %v2193, 4
      %v2195 = vadd.f32 %v2193, %v2194
      %v2196 = vrot.slane %v2195, 2
      %v2197 = vadd.f32 %v2195, %v2196
      %v2198 = vrot.slane %v2197, 1
      %v2199 = vadd.f32 %v2197, %v2198
      %v2200 = vsel %vm1612, %v2174, 0.0
      %v2201 = vrot.slane %v2200, 4
      %v2202 = vadd.f32 %v2200, %v2201
      %v2203 = vrot.slane %v2202, 2
      %v2204 = vadd.f32 %v2202, %v2203
      %v2205 = vrot.slane %v2204, 1
      %v2206 = vadd.f32 %v2204, %v2205
      %v2207 = vsel %vm1612, %v2169, 0.0
      %v2208 = vrot.slane %v2207, 4
      %v2209 = vadd.f32 %v2207, %v2208
      %v2210 = vrot.slane %v2209, 2
      %v2211 = vadd.f32 %v2209, %v2210
      %v2212 = vrot.slane %v2211, 1
      %v2213 = vadd.f32 %v2211, %v2212
      %v2214 = vsel %vm1612, %v2175, 0.0
      %v2215 = vrot.slane %v2214, 4
      %v2216 = vadd.f32 %v2214, %v2215
      %v2217 = vrot.slane %v2216, 2
      %v2218 = vadd.f32 %v2216, %v2217
      %v2219 = vrot.slane %v2218, 1
      %v2220 = vadd.f32 %v2218, %v2219
      %2227 = vrot.lane.b32.xlu0 %v2185, 109
      %v2228 = vpop.permute.xlu0 %2227
      %2229 = vrot.lane.b32.xlu0 %v2192, 109
      %v2230 = vpop.permute.xlu0 %2229
      %2231 = vrot.lane.b32.xlu0 %v2199, 109
      %v2232 = vpop.permute.xlu0 %2231
      %2233 = vrot.lane.b32.xlu0 %v2206, 109
      %v2234 = vpop.permute.xlu0 %2233
      %2235 = vrot.lane.b32.xlu0 %v2213, 109
      %v2236 = vpop.permute.xlu0 %2235
      %2237 = vrot.lane.b32.xlu0 %v2220, 109
      %v2238 = vpop.permute.xlu0 %2237
      %v2239 = vsel %vm660, %v2228, %v2230
      %v2240 = vsel %vm660, %v2230, %v2232
      %v2241 = vsel %vm660, %v2232, %v2234
      %v2242 = vsel %vm660, %v2234, %v2236
      %v2243 = vsel %vm660, %v2236, %v2238
      %v2251 = vadd.f32 %v2123, %v2228
      %v2252 = vadd.f32 %v2124, %v2239
      %v2253 = vadd.f32 %v2125, %v2240
      %v2254 = vadd.f32 %v2126, %v2241
      %v2255 = vadd.f32 %v2127, %v2242
      %v2256 = vadd.f32 %v2128, %v2243
      %v2257 = vadd.f32 %v2129, %v2238
      %2258 = vrot.lane.b32.xlu0 %v1569, 111
      %v2259 = vpop.permute.xlu0 %2258
      %2260 = vrot.lane.b32.xlu0 %v1570, 111
      %v2261 = vpop.permute.xlu0 %2260
      %2262 = vrot.lane.b32.xlu0 %v1571, 111
      %v2263 = vpop.permute.xlu0 %2262
      %2264 = vrot.lane.b32.xlu0 %v1572, 111
      %v2265 = vpop.permute.xlu0 %2264
      %v2266 = vrot.slane %v2259, 4
      %v2267 = vrot.slane %v2261, 4
      %v2268 = vrot.slane %v2263, 4
      %v2269 = vrot.slane %v2265, 4
      %v2270 = vsel %vm2024, %v2266, %v2267
      %v2271 = vsel %vm587, %v2270, %v2261
      %v2272 = vsel %vm2024, %v2267, %v2268
      %v2273 = vsel %vm587, %v2272, %v2263
      %v2274 = vsel %vm2024, %v2268, %v2269
      %v2275 = vsel %vm587, %v2274, %v2265
      %v2280 = vunpack.c.l.s4 1985246804
      %v2281 = vunpack.c.0.s8 %v2280
      %v2282 = vlaneseq
      %v2283 = vshrl.u32 %v2282, 7
      %v2284 = vsub.s32 %v2281, %v2283
      %v2285 = vrot.slane %v2133, %v2284
      %v2286 = vrot.slane %v2161, 6
      %v2287 = vrot.slane %v2286, 4
      %v2288 = vrot.slane %v2285, 6
      %v2289 = vsel %vm1796, %v2287, %v2288
      %v2291 = vmul.f32 %v2271, %v2289
      %v2292 = vmul.f32 %v2273, %v2289
      %v2293 = vmul.f32 %v2275, %v2289
      %v2297 = vcombine.high %v2291, %v2291
      %v2298 = vcombine.high %v2292, %v2292
      %v2299 = vcombine.high %v2293, %v2293
      %v2303 = vsel %vm1612, %v2291, 0.0
      %v2304 = vrot.slane %v2303, 4
      %v2305 = vadd.f32 %v2303, %v2304
      %v2306 = vrot.slane %v2305, 2
      %v2307 = vadd.f32 %v2305, %v2306
      %v2308 = vrot.slane %v2307, 1
      %v2309 = vadd.f32 %v2307, %v2308
      %v2310 = vsel %vm1612, %v2297, 0.0
      %v2311 = vrot.slane %v2310, 4
      %v2312 = vadd.f32 %v2310, %v2311
      %v2313 = vrot.slane %v2312, 2
      %v2314 = vadd.f32 %v2312, %v2313
      %v2315 = vrot.slane %v2314, 1
      %v2316 = vadd.f32 %v2314, %v2315
      %v2317 = vsel %vm1612, %v2292, 0.0
      %v2318 = vrot.slane %v2317, 4
      %v2319 = vadd.f32 %v2317, %v2318
      %v2320 = vrot.slane %v2319, 2
      %v2321 = vadd.f32 %v2319, %v2320
      %v2322 = vrot.slane %v2321, 1
      %v2323 = vadd.f32 %v2321, %v2322
      %v2324 = vsel %vm1612, %v2298, 0.0
      %v2325 = vrot.slane %v2324, 4
      %v2326 = vadd.f32 %v2324, %v2325
      %v2327 = vrot.slane %v2326, 2
      %v2328 = vadd.f32 %v2326, %v2327
      %v2329 = vrot.slane %v2328, 1
      %v2330 = vadd.f32 %v2328, %v2329
      %v2331 = vsel %vm1612, %v2293, 0.0
      %v2332 = vrot.slane %v2331, 4
      %v2333 = vadd.f32 %v2331, %v2332
      %v2334 = vrot.slane %v2333, 2
      %v2335 = vadd.f32 %v2333, %v2334
      %v2336 = vrot.slane %v2335, 1
      %v2337 = vadd.f32 %v2335, %v2336
      %v2338 = vsel %vm1612, %v2299, 0.0
      %v2339 = vrot.slane %v2338, 4
      %v2340 = vadd.f32 %v2338, %v2339
      %v2341 = vrot.slane %v2340, 2
      %v2342 = vadd.f32 %v2340, %v2341
      %v2343 = vrot.slane %v2342, 1
      %v2344 = vadd.f32 %v2342, %v2343
      %2351 = vrot.lane.b32.xlu0 %v2309, 109
      %v2352 = vpop.permute.xlu0 %2351
      %2353 = vrot.lane.b32.xlu0 %v2316, 109
      %v2354 = vpop.permute.xlu0 %2353
      %2355 = vrot.lane.b32.xlu0 %v2323, 109
      %v2356 = vpop.permute.xlu0 %2355
      %2357 = vrot.lane.b32.xlu0 %v2330, 109
      %v2358 = vpop.permute.xlu0 %2357
      %2359 = vrot.lane.b32.xlu0 %v2337, 109
      %v2360 = vpop.permute.xlu0 %2359
      %2361 = vrot.lane.b32.xlu0 %v2344, 109
      %v2362 = vpop.permute.xlu0 %2361
      %v2363 = vsel %vm660, %v2352, %v2354
      %v2364 = vsel %vm660, %v2354, %v2356
      %v2365 = vsel %vm660, %v2356, %v2358
      %v2366 = vsel %vm660, %v2358, %v2360
      %v2367 = vsel %vm660, %v2360, %v2362
      %v2375 = vadd.f32 %v2251, %v2352
      %v2376 = vadd.f32 %v2252, %v2363
      %v2377 = vadd.f32 %v2253, %v2364
      %v2378 = vadd.f32 %v2254, %v2365
      %v2379 = vadd.f32 %v2255, %v2366
      %v2380 = vadd.f32 %v2256, %v2367
      %v2381 = vadd.f32 %v2257, %v2362
      %2382 = vrot.lane.b32.xlu0 %v1569, 110
      %v2383 = vpop.permute.xlu0 %2382
      %2384 = vrot.lane.b32.xlu0 %v1570, 110
      %v2385 = vpop.permute.xlu0 %2384
      %2386 = vrot.lane.b32.xlu0 %v1571, 110
      %v2387 = vpop.permute.xlu0 %2386
      %2388 = vrot.lane.b32.xlu0 %v1572, 110
      %v2389 = vpop.permute.xlu0 %2388
      %v2390 = vrot.slane %v2383, 4
      %v2391 = vrot.slane %v2385, 4
      %v2392 = vrot.slane %v2387, 4
      %v2393 = vrot.slane %v2389, 4
      %v2394 = vsel %vm2024, %v2390, %v2391
      %v2395 = vsel %vm627, %v2394, %v2385
      %v2396 = vsel %vm2024, %v2391, %v2392
      %v2397 = vsel %vm627, %v2396, %v2387
      %v2398 = vsel %vm2024, %v2392, %v2393
      %v2399 = vsel %vm627, %v2398, %v2389
      %v2403 = vrot.slane %v2285, 5
      %v2404 = vrot.slane %v2403, 4
      %v2406 = vmul.f32 %v2395, %v2404
      %v2407 = vmul.f32 %v2397, %v2404
      %v2408 = vmul.f32 %v2399, %v2404
      %v2412 = vcombine.high %v2406, %v2406
      %v2413 = vcombine.high %v2407, %v2407
      %v2414 = vcombine.high %v2408, %v2408
      %v2418 = vsel %vm1612, %v2406, 0.0
      %v2419 = vrot.slane %v2418, 4
      %v2420 = vadd.f32 %v2418, %v2419
      %v2421 = vrot.slane %v2420, 2
      %v2422 = vadd.f32 %v2420, %v2421
      %v2423 = vrot.slane %v2422, 1
      %v2424 = vadd.f32 %v2422, %v2423
      %v2425 = vsel %vm1612, %v2412, 0.0
      %v2426 = vrot.slane %v2425, 4
      %v2427 = vadd.f32 %v2425, %v2426
      %v2428 = vrot.slane %v2427, 2
      %v2429 = vadd.f32 %v2427, %v2428
      %v2430 = vrot.slane %v2429, 1
      %v2431 = vadd.f32 %v2429, %v2430
      %v2432 = vsel %vm1612, %v2407, 0.0
      %v2433 = vrot.slane %v2432, 4
      %v2434 = vadd.f32 %v2432, %v2433
      %v2435 = vrot.slane %v2434, 2
      %v2436 = vadd.f32 %v2434, %v2435
      %v2437 = vrot.slane %v2436, 1
      %v2438 = vadd.f32 %v2436, %v2437
      %v2439 = vsel %vm1612, %v2413, 0.0
      %v2440 = vrot.slane %v2439, 4
      %v2441 = vadd.f32 %v2439, %v2440
      %v2442 = vrot.slane %v2441, 2
      %v2443 = vadd.f32 %v2441, %v2442
      %v2444 = vrot.slane %v2443, 1
      %v2445 = vadd.f32 %v2443, %v2444
      %v2446 = vsel %vm1612, %v2408, 0.0
      %v2447 = vrot.slane %v2446, 4
      %v2448 = vadd.f32 %v2446, %v2447
      %v2449 = vrot.slane %v2448, 2
      %v2450 = vadd.f32 %v2448, %v2449
      %v2451 = vrot.slane %v2450, 1
      %v2452 = vadd.f32 %v2450, %v2451
      %v2453 = vsel %vm1612, %v2414, 0.0
      %v2454 = vrot.slane %v2453, 4
      %v2455 = vadd.f32 %v2453, %v2454
      %v2456 = vrot.slane %v2455, 2
      %v2457 = vadd.f32 %v2455, %v2456
      %v2458 = vrot.slane %v2457, 1
      %v2459 = vadd.f32 %v2457, %v2458
      %2466 = vrot.lane.b32.xlu0 %v2424, 109
      %v2467 = vpop.permute.xlu0 %2466
      %2468 = vrot.lane.b32.xlu0 %v2431, 109
      %v2469 = vpop.permute.xlu0 %2468
      %2470 = vrot.lane.b32.xlu0 %v2438, 109
      %v2471 = vpop.permute.xlu0 %2470
      %2472 = vrot.lane.b32.xlu0 %v2445, 109
      %v2473 = vpop.permute.xlu0 %2472
      %2474 = vrot.lane.b32.xlu0 %v2452, 109
      %v2475 = vpop.permute.xlu0 %2474
      %2476 = vrot.lane.b32.xlu0 %v2459, 109
      %v2477 = vpop.permute.xlu0 %2476
      %v2478 = vsel %vm660, %v2467, %v2469
      %v2479 = vsel %vm660, %v2469, %v2471
      %v2480 = vsel %vm660, %v2471, %v2473
      %v2481 = vsel %vm660, %v2473, %v2475
      %v2482 = vsel %vm660, %v2475, %v2477
      %v2490 = vadd.f32 %v2375, %v2467
      %v2491 = vadd.f32 %v2376, %v2478
      %v2492 = vadd.f32 %v2377, %v2479
      %v2493 = vadd.f32 %v2378, %v2480
      %v2494 = vadd.f32 %v2379, %v2481
      %v2495 = vadd.f32 %v2380, %v2482
      %v2496 = vadd.f32 %v2381, %v2477
      %2498 = vset.pattern.permute.xlu0 0
      %2499 = vperm.xlu0 %2498, %v1568
      %v2500 = vpop.permute.xlu0 %2499
      %2501 = vrot.lane.b32.xlu0 %v1569, 109
      %v2502 = vpop.permute.xlu0 %2501
      %2503 = vrot.lane.b32.xlu0 %v1570, 109
      %v2504 = vpop.permute.xlu0 %2503
      %2505 = vrot.lane.b32.xlu0 %v1571, 109
      %v2506 = vpop.permute.xlu0 %2505
      %2507 = vrot.lane.b32.xlu0 %v1572, 109
      %v2508 = vpop.permute.xlu0 %2507
      %v2509 = vrot.slane %v2502, 4
      %v2510 = vrot.slane %v2504, 4
      %v2511 = vrot.slane %v2506, 4
      %v2512 = vrot.slane %v2508, 4
      %v2513 = vsel %vm2024, %v2509, %v2510
      %v2514 = vsel %vm660, %v2513, %v2504
      %v2515 = vsel %vm2024, %v2510, %v2511
      %v2516 = vsel %vm660, %v2515, %v2506
      %v2517 = vsel %vm2024, %v2511, %v2512
      %v2518 = vsel %vm660, %v2517, %v2508
      %v2523 = vunpack.c.l.s4 839922192
      %v2524 = vunpack.c.0.s8 %v2523
      %v2525 = vlaneseq
      %v2526 = vshrl.u32 %v2525, 7
      %v2527 = vsub.s32 %v2524, %v2526
      %v2528 = vrot.slane %v2500, %v2527
      %v2530 = vmul.f32 %v2514, %v2528
      %v2531 = vmul.f32 %v2516, %v2528
      %v2532 = vmul.f32 %v2518, %v2528
      %v2536 = vcombine.high %v2530, %v2530
      %v2537 = vcombine.high %v2531, %v2531
      %v2538 = vcombine.high %v2532, %v2532
      %v2542 = vsel %vm1612, %v2530, 0.0
      %v2543 = vrot.slane %v2542, 4
      %v2544 = vadd.f32 %v2542, %v2543
      %v2545 = vrot.slane %v2544, 2
      %v2546 = vadd.f32 %v2544, %v2545
      %v2547 = vrot.slane %v2546, 1
      %v2548 = vadd.f32 %v2546, %v2547
      %v2549 = vsel %vm1612, %v2536, 0.0
      %v2550 = vrot.slane %v2549, 4
      %v2551 = vadd.f32 %v2549, %v2550
      %v2552 = vrot.slane %v2551, 2
      %v2553 = vadd.f32 %v2551, %v2552
      %v2554 = vrot.slane %v2553, 1
      %v2555 = vadd.f32 %v2553, %v2554
      %v2556 = vsel %vm1612, %v2531, 0.0
      %v2557 = vrot.slane %v2556, 4
      %v2558 = vadd.f32 %v2556, %v2557
      %v2559 = vrot.slane %v2558, 2
      %v2560 = vadd.f32 %v2558, %v2559
      %v2561 = vrot.slane %v2560, 1
      %v2562 = vadd.f32 %v2560, %v2561
      %v2563 = vsel %vm1612, %v2537, 0.0
      %v2564 = vrot.slane %v2563, 4
      %v2565 = vadd.f32 %v2563, %v2564
      %v2566 = vrot.slane %v2565, 2
      %v2567 = vadd.f32 %v2565, %v2566
      %v2568 = vrot.slane %v2567, 1
      %v2569 = vadd.f32 %v2567, %v2568
      %v2570 = vsel %vm1612, %v2532, 0.0
      %v2571 = vrot.slane %v2570, 4
      %v2572 = vadd.f32 %v2570, %v2571
      %v2573 = vrot.slane %v2572, 2
      %v2574 = vadd.f32 %v2572, %v2573
      %v2575 = vrot.slane %v2574, 1
      %v2576 = vadd.f32 %v2574, %v2575
      %v2577 = vsel %vm1612, %v2538, 0.0
      %v2578 = vrot.slane %v2577, 4
      %v2579 = vadd.f32 %v2577, %v2578
      %v2580 = vrot.slane %v2579, 2
      %v2581 = vadd.f32 %v2579, %v2580
      %v2582 = vrot.slane %v2581, 1
      %v2583 = vadd.f32 %v2581, %v2582
      %2590 = vrot.lane.b32.xlu0 %v2548, 109
      %v2591 = vpop.permute.xlu0 %2590
      %2592 = vrot.lane.b32.xlu0 %v2555, 109
      %v2593 = vpop.permute.xlu0 %2592
      %2594 = vrot.lane.b32.xlu0 %v2562, 109
      %v2595 = vpop.permute.xlu0 %2594
      %2596 = vrot.lane.b32.xlu0 %v2569, 109
      %v2597 = vpop.permute.xlu0 %2596
      %2598 = vrot.lane.b32.xlu0 %v2576, 109
      %v2599 = vpop.permute.xlu0 %2598
      %2600 = vrot.lane.b32.xlu0 %v2583, 109
      %v2601 = vpop.permute.xlu0 %2600
      %v2602 = vsel %vm660, %v2591, %v2593
      %v2603 = vsel %vm660, %v2593, %v2595
      %v2604 = vsel %vm660, %v2595, %v2597
      %v2605 = vsel %vm660, %v2597, %v2599
      %v2606 = vsel %vm660, %v2599, %v2601
      %v2614 = vadd.f32 %v2490, %v2591
      %v2615 = vadd.f32 %v2491, %v2602
      %v2616 = vadd.f32 %v2492, %v2603
      %v2617 = vadd.f32 %v2493, %v2604
      %v2618 = vadd.f32 %v2494, %v2605
      %v2619 = vadd.f32 %v2495, %v2606
      %v2620 = vadd.f32 %v2496, %v2601
      %v2621 = vmax.f32 %v2614, 0.0
      %v2622 = vmax.f32 %v2615, 0.0
      %v2623 = vmax.f32 %v2616, 0.0
      %v2624 = vmax.f32 %v2617, 0.0
      %v2625 = vmax.f32 %v2618, 0.0
      %v2626 = vmax.f32 %v2619, 0.0
      %v2627 = vmax.f32 %v2620, 0.0
      %v2629 = vlaneseq
      %v2630 = vshrl.u32 %v2629, 7
      %v2631 = vsub.s32 0, %v2630
      %v2632 = vrot.slane %v1573, %v2631
      %v2633 = vlaneseq
      %v2634 = vshrl.u32 %v2633, 7
      %v2635 = vsub.s32 1, %v2634
      %v2636 = vrot.slane %v1573, %v2635
      %v2637 = vlaneseq
      %v2638 = vshrl.u32 %v2637, 7
      %v2639 = vsub.s32 2, %v2638
      %v2640 = vrot.slane %v1573, %v2639
      %v2641 = vlaneseq
      %v2642 = vshrl.u32 %v2641, 7
      %v2643 = vsub.s32 3, %v2642
      %v2644 = vrot.slane %v1573, %v2643
      %v2645 = vlaneseq
      %v2646 = vshrl.u32 %v2645, 7
      %v2647 = vsub.s32 4, %v2646
      %v2648 = vrot.slane %v1573, %v2647
      %v2649 = vlaneseq
      %v2650 = vshrl.u32 %v2649, 7
      %v2651 = vsub.s32 5, %v2650
      %v2652 = vrot.slane %v1573, %v2651
      %2653 = vrot.lane.b32.xlu0 %v2632, 109
      %v2654 = vpop.permute.xlu0 %2653
      %2655 = vrot.lane.b32.xlu0 %v2636, 109
      %v2656 = vpop.permute.xlu0 %2655
      %2657 = vrot.lane.b32.xlu0 %v2640, 109
      %v2658 = vpop.permute.xlu0 %2657
      %2659 = vrot.lane.b32.xlu0 %v2644, 109
      %v2660 = vpop.permute.xlu0 %2659
      %2661 = vrot.lane.b32.xlu0 %v2648, 109
      %v2662 = vpop.permute.xlu0 %2661
      %2663 = vrot.lane.b32.xlu0 %v2652, 109
      %v2664 = vpop.permute.xlu0 %2663
      %v2665 = vsel %vm660, %v2654, %v2656
      %v2666 = vsel %vm660, %v2656, %v2658
      %v2667 = vsel %vm660, %v2658, %v2660
      %v2668 = vsel %vm660, %v2660, %v2662
      %v2669 = vsel %vm660, %v2662, %v2664
      %v2677 = vmul.f32 %v2614, %v2654
      %v2678 = vmul.f32 %v2615, %v2665
      %v2679 = vmul.f32 %v2616, %v2666
      %v2680 = vmul.f32 %v2617, %v2667
      %v2681 = vmul.f32 %v2618, %v2668
      %v2682 = vmul.f32 %v2619, %v2669
      %v2683 = vmul.f32 %v2620, %v2664
      %v2684 = vsub.f32 %v2621, %v2677
      %v2685 = vsub.f32 %v2622, %v2678
      %v2686 = vsub.f32 %v2623, %v2679
      %v2687 = vsub.f32 %v2624, %v2680
      %v2688 = vsub.f32 %v2625, %v2681
      %v2689 = vsub.f32 %v2626, %v2682
      %v2690 = vsub.f32 %v2627, %v2683
      %v2691 = vand.u32 2147483647, %v2614
      %v2692 = vand.u32 2147483647, %v2615
      %v2693 = vand.u32 2147483647, %v2616
      %v2694 = vand.u32 2147483647, %v2617
      %v2695 = vand.u32 2147483647, %v2618
      %v2696 = vand.u32 2147483647, %v2619
      %v2697 = vand.u32 2147483647, %v2620
      %v2698 = vsub.f32 0.0, %v2691
      %v2699 = vsub.f32 0.0, %v2692
      %v2700 = vsub.f32 0.0, %v2693
      %v2701 = vsub.f32 0.0, %v2694
      %v2702 = vsub.f32 0.0, %v2695
      %v2703 = vsub.f32 0.0, %v2696
      %v2704 = vsub.f32 0.0, %v2697
      %v2705 = vmul.f32 %v2698, 1.442695
      %v2706 = vpow.pop %v2705
      %v2707 = vmul.f32 %v2699, 1.442695
      %v2708 = vpow.pop %v2707
      %v2709 = vmul.f32 %v2700, 1.442695
      %v2710 = vpow.pop %v2709
      %v2711 = vmul.f32 %v2701, 1.442695
      %v2712 = vpow.pop %v2711
      %v2713 = vmul.f32 %v2702, 1.442695
      %v2714 = vpow.pop %v2713
      %v2715 = vmul.f32 %v2703, 1.442695
      %v2716 = vpow.pop %v2715
      %v2717 = vmul.f32 %v2704, 1.442695
      %v2718 = vpow.pop %v2717
      %v2719 = vadd.f32 %v2706, 1.0
      %v2720 = vlog2.pop %v2719
      %v2721 = vmul.f32 %v2720, 0.6931472
      %v2722 = vmul.f32 -0.5, %v2706
      %v2723 = vadd.f32 %v2722, 1.0
      %v2724 = vmul.f32 %v2723, %v2706
      %v2725 = vand.u32 2147483647, %v2706
      %vm2726 = vcmp.lt.f32.partialorder %v2725, 0.0004427343
      %v2727 = vsel %vm2726, %v2724, %v2721
      %v2728 = vadd.f32 %v2708, 1.0
      %v2729 = vlog2.pop %v2728
      %v2730 = vmul.f32 %v2729, 0.6931472
      %v2731 = vmul.f32 -0.5, %v2708
      %v2732 = vadd.f32 %v2731, 1.0
      %v2733 = vmul.f32 %v2732, %v2708
      %v2734 = vand.u32 2147483647, %v2708
      %vm2735 = vcmp.lt.f32.partialorder %v2734, 0.0004427343
      %v2736 = vsel %vm2735, %v2733, %v2730
      %v2737 = vadd.f32 %v2710, 1.0
      %v2738 = vlog2.pop %v2737
      %v2739 = vmul.f32 %v2738, 0.6931472
      %v2740 = vmul.f32 -0.5, %v2710
      %v2741 = vadd.f32 %v2740, 1.0
      %v2742 = vmul.f32 %v2741, %v2710
      %v2743 = vand.u32 2147483647, %v2710
      %vm2744 = vcmp.lt.f32.partialorder %v2743, 0.0004427343
      %v2745 = vsel %vm2744, %v2742, %v2739
      %v2746 = vadd.f32 %v2712, 1.0
      %v2747 = vlog2.pop %v2746
      %v2748 = vmul.f32 %v2747, 0.6931472
      %v2749 = vmul.f32 -0.5, %v2712
      %v2750 = vadd.f32 %v2749, 1.0
      %v2751 = vmul.f32 %v2750, %v2712
      %v2752 = vand.u32 2147483647, %v2712
      %vm2753 = vcmp.lt.f32.partialorder %v2752, 0.0004427343
      %v2754 = vsel %vm2753, %v2751, %v2748
      %v2755 = vadd.f32 %v2714, 1.0
      %v2756 = vlog2.pop %v2755
      %v2757 = vmul.f32 %v2756, 0.6931472
      %v2758 = vmul.f32 -0.5, %v2714
      %v2759 = vadd.f32 %v2758, 1.0
      %v2760 = vmul.f32 %v2759, %v2714
      %v2761 = vand.u32 2147483647, %v2714
      %vm2762 = vcmp.lt.f32.partialorder %v2761, 0.0004427343
      %v2763 = vsel %vm2762, %v2760, %v2757
      %v2764 = vadd.f32 %v2716, 1.0
      %v2765 = vlog2.pop %v2764
      %v2766 = vmul.f32 %v2765, 0.6931472
      %v2767 = vmul.f32 -0.5, %v2716
      %v2768 = vadd.f32 %v2767, 1.0
      %v2769 = vmul.f32 %v2768, %v2716
      %v2770 = vand.u32 2147483647, %v2716
      %vm2771 = vcmp.lt.f32.partialorder %v2770, 0.0004427343
      %v2772 = vsel %vm2771, %v2769, %v2766
      %v2773 = vadd.f32 %v2718, 1.0
      %v2774 = vlog2.pop %v2773
      %v2775 = vmul.f32 %v2774, 0.6931472
      %v2776 = vmul.f32 -0.5, %v2718
      %v2777 = vadd.f32 %v2776, 1.0
      %v2778 = vmul.f32 %v2777, %v2718
      %v2779 = vand.u32 2147483647, %v2718
      %vm2780 = vcmp.lt.f32.partialorder %v2779, 0.0004427343
      %v2781 = vsel %vm2780, %v2778, %v2775
      %v2782 = vadd.f32 %v2684, %v2727
      %v2783 = vadd.f32 %v2685, %v2736
      %v2784 = vadd.f32 %v2686, %v2745
      %v2785 = vadd.f32 %v2687, %v2754
      %v2786 = vadd.f32 %v2688, %v2763
      %v2787 = vadd.f32 %v2689, %v2772
      %v2788 = vadd.f32 %v2690, %v2781
      %v2796 = vcombine.low %v2782, %v2783
      %v2797 = vcombine.low %v2784, %v2785
      %v2798 = vcombine.low %v2786, %v2787
      %v2800 = vunpack.c.l.s4 1966171168
      %v2801 = vunpack.c.0.s8 %v2800
      %v2802 = vlaneseq
      %v2803 = vshrl.u32 %v2802, 7
      %v2804 = vsub.s32 %v2801, %v2803
      %v2805 = vrot.slane %v2796, %v2804
      %v2807 = vunpack.c.l.s4 1966171168
      %v2808 = vunpack.c.0.s8 %v2807
      %v2809 = vlaneseq
      %v2810 = vshrl.u32 %v2809, 7
      %v2811 = vsub.s32 %v2808, %v2810
      %v2812 = vrot.slane %v2797, %v2811
      %v2814 = vunpack.c.l.s4 1966171168
      %v2815 = vunpack.c.0.s8 %v2814
      %v2816 = vlaneseq
      %v2817 = vshrl.u32 %v2816, 7
      %v2818 = vsub.s32 %v2815, %v2817
      %v2819 = vrot.slane %v2798, %v2818
      %v2821 = vunpack.c.l.s4 1966171168
      %v2822 = vunpack.c.0.s8 %v2821
      %v2823 = vlaneseq
      %v2824 = vshrl.u32 %v2823, 7
      %v2825 = vsub.s32 %v2822, %v2824
      %v2826 = vrot.slane %v2788, %v2825
      %v2827 = vcombine.low %v2805, %v2812
      %v2828 = vcombine.low %v2819, %v2826
      %v2830 = vunpack.c.l.s4 1966171168
      %v2831 = vunpack.c.0.s8 %v2830
      %v2832 = vlaneseq
      %v2833 = vshrl.u32 %v2832, 7
      %v2834 = vsub.s32 %v2831, %v2833
      %v2835 = vrot.slane %v2827, %v2834
      %v2837 = vunpack.c.l.s4 1966171168
      %v2838 = vunpack.c.0.s8 %v2837
      %v2839 = vlaneseq
      %v2840 = vshrl.u32 %v2839, 7
      %v2841 = vsub.s32 %v2838, %v2840
      %v2842 = vrot.slane %v2828, %v2841
      %v2843 = vcombine.low %v2835, %v2842
      %2844 = vrot.lane.b32.xlu0 %v2843, 19
      %v2845 = vpop.permute.xlu0 %2844
      %v2846 = vrot.slane %v2845, 1
      %v2847 = vsel %vm362, %v2845, %v2846
      %v2849 = vmul.f32 %v1574, %v2847
      %v2851 = vlaneseq
      %v2852 = vshrl.u32 %v2851, 7
      %v2853 = vsub.s32 0, %v2852
      %v2854 = vrot.slane %v2849, %v2853
      %v2855 = vlaneseq
      %v2856 = vshrl.u32 %v2855, 7
      %v2857 = vsub.s32 1, %v2856
      %v2858 = vrot.slane %v2849, %v2857
      %v2859 = vlaneseq
      %v2860 = vshrl.u32 %v2859, 7
      %v2861 = vsub.s32 2, %v2860
      %v2862 = vrot.slane %v2849, %v2861
      %v2863 = vlaneseq
      %v2864 = vshrl.u32 %v2863, 7
      %v2865 = vsub.s32 3, %v2864
      %v2866 = vrot.slane %v2849, %v2865
      %v2867 = vlaneseq
      %v2868 = vshrl.u32 %v2867, 7
      %v2869 = vsub.s32 4, %v2868
      %v2870 = vrot.slane %v2849, %v2869
      %v2871 = vlaneseq
      %v2872 = vshrl.u32 %v2871, 7
      %v2873 = vsub.s32 5, %v2872
      %v2874 = vrot.slane %v2849, %v2873
      %v2881 = vsel %vm1670, %v2854, 0.0
      %v2882 = vsel %vm1670, %v2858, 0.0
      %v2883 = vadd.f32 %v2881, %v2882
      %v2884 = vsel %vm1670, %v2862, 0.0
      %v2885 = vadd.f32 %v2883, %v2884
      %v2886 = vsel %vm1670, %v2866, 0.0
      %v2887 = vadd.f32 %v2885, %v2886
      %v2888 = vsel %vm1670, %v2870, 0.0
      %v2889 = vadd.f32 %v2887, %v2888
      %v2890 = vsel %vm1670, %v2874, 0.0
      %v2891 = vadd.f32 %v2889, %v2890
      %2892 = vadd.xlane.f32.xlu0 %v2891
      %v2893 = vpop.xlane.xlu0 %2892
      %v2894 = vrot.slane %v2893, 4
      %v2895 = vadd.f32 %v2893, %v2894
      %v2896 = vrot.slane %v2895, 2
      %v2897 = vadd.f32 %v2895, %v2896
      %v2898 = vrot.slane %v2897, 1
      %v2899 = vadd.f32 %v2897, %v2898
      %s2900 = vtos %v2899
      %s2901 = smul.f32 %s2900, 0.001953125
      %vm2902 = vcmp.gt.f32.partialorder %v2614, 0.0
      %vm2903 = vcmp.gt.f32.partialorder %v2615, 0.0
      %vm2904 = vcmp.gt.f32.partialorder %v2616, 0.0
      %vm2905 = vcmp.gt.f32.partialorder %v2617, 0.0
      %vm2906 = vcmp.gt.f32.partialorder %v2618, 0.0
      %vm2907 = vcmp.gt.f32.partialorder %v2619, 0.0
      %vm2908 = vcmp.gt.f32.partialorder %v2620, 0.0
      %v2909 = vsel %vm2902, 1.0, 0.0
      %v2910 = vsel %vm2903, 1.0, 0.0
      %v2911 = vsel %vm2904, 1.0, 0.0
      %v2912 = vsel %vm2905, 1.0, 0.0
      %v2913 = vsel %vm2906, 1.0, 0.0
      %v2914 = vsel %vm2907, 1.0, 0.0
      %v2915 = vsel %vm2908, 1.0, 0.0
      %v2923 = vcombine.low %v2909, %v2910
      %v2924 = vcombine.low %v2911, %v2912
      %v2925 = vcombine.low %v2913, %v2914
      %v2927 = vunpack.c.l.s4 1966171168
      %v2928 = vunpack.c.0.s8 %v2927
      %v2929 = vlaneseq
      %v2930 = vshrl.u32 %v2929, 7
      %v2931 = vsub.s32 %v2928, %v2930
      %v2932 = vrot.slane %v2923, %v2931
      %v2934 = vunpack.c.l.s4 1966171168
      %v2935 = vunpack.c.0.s8 %v2934
      %v2936 = vlaneseq
      %v2937 = vshrl.u32 %v2936, 7
      %v2938 = vsub.s32 %v2935, %v2937
      %v2939 = vrot.slane %v2924, %v2938
      %v2941 = vunpack.c.l.s4 1966171168
      %v2942 = vunpack.c.0.s8 %v2941
      %v2943 = vlaneseq
      %v2944 = vshrl.u32 %v2943, 7
      %v2945 = vsub.s32 %v2942, %v2944
      %v2946 = vrot.slane %v2925, %v2945
      %v2948 = vunpack.c.l.s4 1966171168
      %v2949 = vunpack.c.0.s8 %v2948
      %v2950 = vlaneseq
      %v2951 = vshrl.u32 %v2950, 7
      %v2952 = vsub.s32 %v2949, %v2951
      %v2953 = vrot.slane %v2915, %v2952
      %v2954 = vcombine.low %v2932, %v2939
      %v2955 = vcombine.low %v2946, %v2953
      %v2957 = vunpack.c.l.s4 1966171168
      %v2958 = vunpack.c.0.s8 %v2957
      %v2959 = vlaneseq
      %v2960 = vshrl.u32 %v2959, 7
      %v2961 = vsub.s32 %v2958, %v2960
      %v2962 = vrot.slane %v2954, %v2961
      %v2964 = vunpack.c.l.s4 1966171168
      %v2965 = vunpack.c.0.s8 %v2964
      %v2966 = vlaneseq
      %v2967 = vshrl.u32 %v2966, 7
      %v2968 = vsub.s32 %v2965, %v2967
      %v2969 = vrot.slane %v2955, %v2968
      %v2970 = vcombine.low %v2962, %v2969
      %2971 = vrot.lane.b32.xlu0 %v2970, 19
      %v2972 = vpop.permute.xlu0 %2971
      %v2973 = vrot.slane %v2972, 1
      %v2974 = vsel %vm362, %v2972, %v2973
      %v2976 = vmul.f32 %v1574, %v2974
      %v2977 = vmul.f32 %v2976, %v1573
      %v2979 = vlaneseq
      %v2980 = vshrl.u32 %v2979, 7
      %v2981 = vsub.s32 0, %v2980
      %v2982 = vrot.slane %v2977, %v2981
      %v2983 = vlaneseq
      %v2984 = vshrl.u32 %v2983, 7
      %v2985 = vsub.s32 1, %v2984
      %v2986 = vrot.slane %v2977, %v2985
      %v2987 = vlaneseq
      %v2988 = vshrl.u32 %v2987, 7
      %v2989 = vsub.s32 2, %v2988
      %v2990 = vrot.slane %v2977, %v2989
      %v2991 = vlaneseq
      %v2992 = vshrl.u32 %v2991, 7
      %v2993 = vsub.s32 3, %v2992
      %v2994 = vrot.slane %v2977, %v2993
      %v2995 = vlaneseq
      %v2996 = vshrl.u32 %v2995, 7
      %v2997 = vsub.s32 4, %v2996
      %v2998 = vrot.slane %v2977, %v2997
      %v2999 = vlaneseq
      %v3000 = vshrl.u32 %v2999, 7
      %v3001 = vsub.s32 5, %v3000
      %v3002 = vrot.slane %v2977, %v3001
      %v3009 = vsel %vm1670, %v2982, 0.0
      %v3010 = vsel %vm1670, %v2986, 0.0
      %v3011 = vadd.f32 %v3009, %v3010
      %v3012 = vsel %vm1670, %v2990, 0.0
      %v3013 = vadd.f32 %v3011, %v3012
      %v3014 = vsel %vm1670, %v2994, 0.0
      %v3015 = vadd.f32 %v3013, %v3014
      %v3016 = vsel %vm1670, %v2998, 0.0
      %v3017 = vadd.f32 %v3015, %v3016
      %v3018 = vsel %vm1670, %v3002, 0.0
      %v3019 = vadd.f32 %v3017, %v3018
      %3020 = vadd.xlane.f32.xlu0 %v3019
      %v3021 = vpop.xlane.xlu0 %3020
      %v3022 = vrot.slane %v3021, 4
      %v3023 = vadd.f32 %v3021, %v3022
      %v3024 = vrot.slane %v3023, 2
      %v3025 = vadd.f32 %v3023, %v3024
      %v3026 = vrot.slane %v3025, 1
      %v3027 = vadd.f32 %v3025, %v3026
      %s3028 = vtos %v3027
      %v3030 = vlaneseq
      %v3031 = vshrl.u32 %v3030, 7
      %v3032 = vsub.s32 0, %v3031
      %v3033 = vrot.slane %v2976, %v3032
      %v3034 = vlaneseq
      %v3035 = vshrl.u32 %v3034, 7
      %v3036 = vsub.s32 1, %v3035
      %v3037 = vrot.slane %v2976, %v3036
      %v3038 = vlaneseq
      %v3039 = vshrl.u32 %v3038, 7
      %v3040 = vsub.s32 2, %v3039
      %v3041 = vrot.slane %v2976, %v3040
      %v3042 = vlaneseq
      %v3043 = vshrl.u32 %v3042, 7
      %v3044 = vsub.s32 3, %v3043
      %v3045 = vrot.slane %v2976, %v3044
      %v3046 = vlaneseq
      %v3047 = vshrl.u32 %v3046, 7
      %v3048 = vsub.s32 4, %v3047
      %v3049 = vrot.slane %v2976, %v3048
      %v3050 = vlaneseq
      %v3051 = vshrl.u32 %v3050, 7
      %v3052 = vsub.s32 5, %v3051
      %v3053 = vrot.slane %v2976, %v3052
      %v3060 = vsel %vm1670, %v3033, 0.0
      %v3061 = vsel %vm1670, %v3037, 0.0
      %v3062 = vadd.f32 %v3060, %v3061
      %v3063 = vsel %vm1670, %v3041, 0.0
      %v3064 = vadd.f32 %v3062, %v3063
      %v3065 = vsel %vm1670, %v3045, 0.0
      %v3066 = vadd.f32 %v3064, %v3065
      %v3067 = vsel %vm1670, %v3049, 0.0
      %v3068 = vadd.f32 %v3066, %v3067
      %v3069 = vsel %vm1670, %v3053, 0.0
      %v3070 = vadd.f32 %v3068, %v3069
      %3071 = vadd.xlane.f32.xlu0 %v3070
      %v3072 = vpop.xlane.xlu0 %3071
      %v3073 = vrot.slane %v3072, 4
      %v3074 = vadd.f32 %v3072, %v3073
      %v3075 = vrot.slane %v3074, 2
      %v3076 = vadd.f32 %v3074, %v3075
      %v3077 = vrot.slane %v3076, 1
      %v3078 = vadd.f32 %v3076, %v3077
      %s3079 = vtos %v3078
      %v3086 = vsel %vm1670, %v2632, 0.0
      %v3087 = vsel %vm1670, %v2636, 0.0
      %v3088 = vadd.f32 %v3086, %v3087
      %v3089 = vsel %vm1670, %v2640, 0.0
      %v3090 = vadd.f32 %v3088, %v3089
      %v3091 = vsel %vm1670, %v2644, 0.0
      %v3092 = vadd.f32 %v3090, %v3091
      %v3093 = vsel %vm1670, %v2648, 0.0
      %v3094 = vadd.f32 %v3092, %v3093
      %v3095 = vsel %vm1670, %v2652, 0.0
      %v3096 = vadd.f32 %v3094, %v3095
      %3097 = vadd.xlane.f32.xlu0 %v3096
      %v3098 = vpop.xlane.xlu0 %3097
      %v3099 = vrot.slane %v3098, 4
      %v3100 = vadd.f32 %v3098, %v3099
      %v3101 = vrot.slane %v3100, 2
      %v3102 = vadd.f32 %v3100, %v3101
      %v3103 = vrot.slane %v3102, 1
      %v3104 = vadd.f32 %v3102, %v3103
      %s3105 = vtos %v3104
      %s3106 = sadd.f32 %s3079, %s3105
      %s3107 = ssub.f32 %s3106, %s3028
      %s3108 = sadd.f32 %s3107, 1e-06
      %v3109 = vstv %s3108
      %v3110 = vrcp.pop %v3109
      %s3111 = vtos %v3110
      %s3112 = smul.f32 %s3028, %s3111
      %v3113 = vlaneseq
      %v3114 = vshrl.u32 %v3113, 7
      %vm3115 = vcmp.lt.s32.totalorder %v3114, 4
      %v3116 = vstv %s2901
      %v3117 = vstv %s3112
      %v3118 = vsel %vm3115, %v3116, %v3117
      %3119 = vst [vmem:[%s330] sm:$0xff] %v3118
      %p3120 = scmp.lt.s32.totalorder %s18, 1
      %s3121 = scalar_select %p3120, %s18, 1
      %s3122 = smul.addr %s3121, 8
      %s3123 = scalar_lea.vmem %s7, %s3122
      // Predicated region
      $region49: #{meta_learner_forward.1} parent=47 // pred_check
        %p3124 = pneg %p203
      $region50: #{meta_learner_forward.1} parent=47 // pred_check_branch
        %3126 = sbr.rel (%p3124) target = $region52
      $region51: #{meta_learner_forward.1} parent=47 // pred_region
        _
      $region52: #{meta_learner_forward.1} parent=47 // pred_fallthru
        _
    $region48: #{meta_learner_forward.1} parent=5 // pred_fallthru
      _
    %p3127 = scmp.le.s32.totalorder 2, %s13
    // Predicated region
    $region53: #{meta_learner_forward.1} parent=5 // pred_check
      %p3128 = pneg %p3127
    $region54: #{meta_learner_forward.1} parent=5 // pred_check_branch
      %3130 = sbr.rel (%p3128) target = $region56
    $region55: #{meta_learner_forward.1} parent=5 // pred_region
      %s3131 = ssub.s32 %s13, 2
      // Predicated region
      $region57: #{meta_learner_forward.1} parent=55 // pred_check
        %p3132 = pneg %p209
      $region58: #{meta_learner_forward.1} parent=55 // pred_check_branch
        %3134 = sbr.rel (%p3132) target = $region60
      $region59: #{meta_learner_forward.1} parent=55 // pred_region
        %p3135 = scmp.lt.s32.totalorder %s19, 1
        %s3136 = scalar_select %p3135, %s19, 1
        %s3137 = smul.addr %s3136, 8
        %s3138 = scalar_lea.vmem %s7, %s3137
      $region60: #{meta_learner_forward.1} parent=55 // pred_fallthru
        _
    $region56: #{meta_learner_forward.1} parent=5 // pred_fallthru
      _
  $region6: #{meta_learner_forward.1} parent=0 // loop_footer
    %s17 = sadd.s32 1, %s13
  $region7: #{meta_learner_forward.1} parent=0 // loop_footer_branch
    %12 = sbr.rel target = $region3
  $region8: #{meta_learner_forward.1} parent=0 // loop_exit
    _

</llo_original>
